<compile_context>
chip_gen: v7x
topology: tpu7x:2x2x1
jax: 0.10.0
libtpu: 0.0.40
codegen_flags: <defaults>
</compile_context>

<pallas_src>
import jax
import jax.numpy as jnp
from jax.experimental import pallas as pl
from jax.experimental.pallas import tpu as pltpu

# Hyper-parameters (small, consistent with the module's constructor).
INPUT_DIM = 8                     # number of graph nodes ("input_dim")
TIME_STEP = 12                    # AttentionBlock(12, ...) hard-codes time_step == 12
HIDDEN = 32                       # hidden_dim
FEAT = INPUT_DIM * HIDDEN         # GRU feature width = input_dim * hidden_dim
NEG_SLOPE = 0.2                   # GATv2 leaky-relu slope
ROUTING_ITERS = 3                 # CapsuleLinear dynamic routing iterations


# ---------------------------------------------------------------------------
# The single fused kernel.
# ---------------------------------------------------------------------------
def _fused_kernel(x_ref, wih0_ref, wih1_ref, gru_b_ref,
                  att_w_ref, att_b_ref,
                  gat_w_ref, gat_v_ref,
                  caps_w_ref, wf_ref, bf_ref,
                  out_ref):
    n, h, d = INPUT_DIM, HIDDEN, FEAT
    nh = n * h
    f32 = jnp.float32

    # --- torch.nan_to_num(nan=0.0, posinf=1.0) fused into the first load ------
    x = x_ref[...]                                                  # (T, D)
    x = jnp.where(jnp.isnan(x), 0.0, x)
    x = jnp.where(x == jnp.inf, 1.0, x)
    x = jnp.where(x == -jnp.inf, jnp.finfo(f32).min, x)             # torch default neginf

    # --- 2-layer nn.GRU (batch_first=False) ----------------------------------
    # The scanned axis is axis 0 of inputs.view(-1, T, N*H), i.e. the batch axis,
    # which has length 1 here.  Every layer therefore runs exactly one cell step
    # from a zero hidden state: gh = 0 @ W_hh^T + b_hh = b_hh (W_hh never enters).
    gb = gru_b_ref[...]                                             # (4, 3D)

    def gru_layer(inp, wih_t, bih, bhh):
        gi = jnp.dot(inp, wih_t, preferred_element_type=f32) + bih  # (T, 3D)
        r = jax.nn.sigmoid(gi[:, :d] + bhh[:, :d])
        z = jax.nn.sigmoid(gi[:, d:2 * d] + bhh[:, d:2 * d])
        cand = jnp.tanh(gi[:, 2 * d:] + r * bhh[:, 2 * d:])
        return (1.0 - z) * cand                                     # + z*h_prev, h_prev==0

    gru0 = gru_layer(x, wih0_ref[...], gb[0:1, :], gb[1:2, :])      # (T, D)
    gru1 = gru_layer(gru0, wih1_ref[...], gb[2:3, :], gb[3:4, :])   # (T, D)
    emb = jnp.maximum(gru1, 0.0)                                    # torch.relu(GRU out)

    # --- AttentionBlock: Linear(T,T) on E^T, softmax over time, weighted sum --
    # aw^T = W @ E + b (column bias), softmax over the time axis per feature.
    aw = jnp.dot(att_w_ref[...], emb, preferred_element_type=f32) + att_b_ref[...]
    probs_t = jax.nn.softmax(aw, axis=0)                            # over time
    att = jnp.tanh(jnp.sum(probs_t * emb, axis=0, keepdims=True))   # (1, N*H), tanh'd

    # --- segment-indicator constants (built from 2-D iota, no div/reshape) ----
    k_i = jax.lax.broadcasted_iota(jnp.int32, (nh, n), 0)
    o_i = jax.lax.broadcasted_iota(jnp.int32, (nh, n), 1)
    seg = ((k_i >= o_i * h) & (k_i < (o_i + 1) * h)).astype(f32)    # (N*H, N)
    o_t = jax.lax.broadcasted_iota(jnp.int32, (n, nh), 0)
    k_t = jax.lax.broadcasted_iota(jnp.int32, (n, nh), 1)
    seg_t = ((k_t >= o_t * h) & (k_t < (o_t + 1) * h)).astype(f32)  # (N, N*H)
    eye_h = (jax.lax.broadcasted_iota(jnp.int32, (h, h), 0) ==
             jax.lax.broadcasted_iota(jnp.int32, (h, h), 1)).astype(f32)
    fold = jnp.concatenate([eye_h] * n, axis=0)                     # (N*H, H): lane k -> k%H

    # lane -> sublane unflatten of the attention vector into per-node features,
    # done as (mask * broadcast) @ fold so only well-supported ops are used.
    att_nodes = jnp.dot(att * seg_t, fold, preferred_element_type=f32)   # (N, H)

    # --- two fused GATv2Conv layers on the fully connected N-node graph -------
    def gatv2(xn, w_lr, vecs):
        # w_lr: (H, 2H) = [Wl^T | Wr^T]; vecs rows: bl, br, att_a, out_bias
        proj = jnp.dot(xn, w_lr, preferred_element_type=f32)        # (N, 2H)
        xl = proj[:, :h] + vecs[0:1, :]
        xr = proj[:, h:] + vecs[1:2, :]
        s = xr[:, None, :] + xl[None, :, :]                         # (Ntgt, Nsrc, H)
        s = jnp.where(s > 0, s, NEG_SLOPE * s)                      # leaky_relu
        e = jnp.sum(s * vecs[2:3, :], axis=-1)                      # (Ntgt, Nsrc)
        alpha = jax.nn.softmax(e, axis=-1)                          # over sources
        out = jnp.dot(alpha, xl, preferred_element_type=f32) + vecs[3:4, :]
        return jnp.maximum(out, 0.0)                                # torch.relu(...)

    g0 = gatv2(att_nodes, gat_w_ref[0], gat_v_ref[0])               # (N, H)
    g1 = gatv2(g0, gat_w_ref[1], gat_v_ref[1])                      # (N, H)
    g_sum = g0 + g1                                                 # (N, H)

    # --- CapsuleLinear (shared weights, dynamic routing) + fusion Linear ------
    # fusion_vec = cat([att_nodes, g_sum], -1) is folded into the prior matmul by
    # splitting the (2H, N*H) capsule weight into its att / graph halves.
    priors = (jnp.dot(att_nodes, caps_w_ref[0], preferred_element_type=f32) +
              jnp.dot(g_sum, caps_w_ref[1], preferred_element_type=f32))   # (Nin, Nout*H)

    # TODO(synk): routing follows the standard Sabour dynamic routing (softmax over
    # out-capsules); the capsule-layer library variant may differ in minor eps /
    # softmax-axis details.
    logits = jnp.zeros((n, n), f32)                                 # (in_caps, out_caps)
    v_flat = jnp.zeros((1, nh), f32)
    for it in range(ROUTING_ITERS):
        probs = jax.nn.softmax(logits, axis=1)                              # (Nin, Nout)
        probs_exp = jnp.dot(probs, seg_t, preferred_element_type=f32)       # (Nin, N*H)
        s_flat = jnp.sum(probs_exp * priors, axis=0, keepdims=True)         # (1, N*H)
        n2 = jnp.dot(s_flat * s_flat, seg, preferred_element_type=f32)      # (1, N)
        scale = (n2 / (1.0 + n2)) * jax.lax.rsqrt(n2 + 1e-12)               # squash scale
        v_flat = s_flat * jnp.dot(scale, seg_t, preferred_element_type=f32) # (1, N*H)
        if it != ROUTING_ITERS - 1:
            logits = logits + jnp.dot(priors * v_flat, seg,
                                      preferred_element_type=f32)           # (Nin, Nout)

    c_flat = jnp.maximum(v_flat, 0.0)                               # relu(caps_out), (1, N*H)
    # final Linear(H, N) pre-expanded to kron(I_N, Wf^T): lane-dense (1, N*N) store.
    out_ref[...] = jnp.tanh(
        jnp.dot(c_flat, wf_ref[...], preferred_element_type=f32) + bf_ref[...])


def _fused_forward(x, p):
    def fs(shape):
        nd = len(shape)
        return pl.BlockSpec(shape, lambda i, _nd=nd: (0,) * _nd)

    return pl.pallas_call(
        _fused_kernel,
        out_shape=jax.ShapeDtypeStruct((1, INPUT_DIM * INPUT_DIM), jnp.float32),
        grid=(1,),
        in_specs=[
            fs((TIME_STEP, FEAT)),                       # x
            fs((FEAT, 3 * FEAT)),                        # GRU W_ih layer 0 (transposed)
            fs((FEAT, 3 * FEAT)),                        # GRU W_ih layer 1 (transposed)
            fs((4, 3 * FEAT)),                           # GRU biases [bih0, bhh0, bih1, bhh1]
            fs((TIME_STEP, TIME_STEP)),                  # attention Linear(T, T) weight
            fs((TIME_STEP, 1)),                          # attention bias (column)
            fs((2, HIDDEN, 2 * HIDDEN)),                 # GAT [Wl^T | Wr^T] per layer
            fs((2, 4, HIDDEN)),                          # GAT [bl, br, att, out-bias] per layer
            fs((2, HIDDEN, INPUT_DIM * HIDDEN)),         # capsule weight (att half, graph half)
            fs((INPUT_DIM * HIDDEN, INPUT_DIM * INPUT_DIM)),   # kron(I, Wf^T)
            fs((1, INPUT_DIM * INPUT_DIM)),              # tiled fusion bias
        ],
        out_specs=fs((1, INPUT_DIM * INPUT_DIM)),
        compiler_params=pltpu.CompilerParams(dimension_semantics=("arbitrary",)),
    )(x, p["gru_wih0_t"], p["gru_wih1_t"], p["gru_b"],
      p["att_w"], p["att_b"],
      p["gat_w"], p["gat_v"],
      p["caps_w"], p["fusion_w_big"], p["fusion_b_big"])


# ---------------------------------------------------------------------------
# Full forward: just the fused kernel plus metadata-only reshapes.
# ---------------------------------------------------------------------------
def cap_gat_attention_gru(inputs, params):
    x = inputs.astype(jnp.float32).reshape(-1, TIME_STEP, FEAT)     # (B, T, N*H)
    # The module hard-codes self.batch = 1 (its fully-connected edge list only
    # spans node ids [0, INPUT_DIM)), so a single graph is supported.
    assert x.shape[0] == 1, x.shape
    out_flat = _fused_forward(x[0], params)                         # (1, N*N)
    return out_flat.reshape(1, INPUT_DIM, INPUT_DIM)                # (1, N, N)


# ---------------------------------------------------------------------------
# Deterministic parameter initialization (module shapes), packed for the kernel.
# ---------------------------------------------------------------------------
def init_params(key):
    keys = jax.random.split(key, 32)
    it = iter(keys)

    def u(shape, scale):
        return jax.random.uniform(next(it), shape, jnp.float32, -scale, scale)

    d, h, n = FEAT, HIDDEN, INPUT_DIM
    p = {}

    # --- nn.GRU(d, d, num_layers=2), gates stacked (r, z, n) ---
    k_gru = 1.0 / (d ** 0.5)
    wih0 = u((3 * d, d), k_gru)
    _whh0 = u((3 * d, d), k_gru)   # exists in the module but never affects the
    bih0 = u((3 * d,), k_gru)      # output: the scanned sequence length is 1, so
    bhh0 = u((3 * d,), k_gru)      # the hidden state multiplied by W_hh is zero.
    wih1 = u((3 * d, d), k_gru)
    _whh1 = u((3 * d, d), k_gru)   # (same as above)
    bih1 = u((3 * d,), k_gru)
    bhh1 = u((3 * d,), k_gru)
    p["gru_wih0_t"] = wih0.T                                     # (d, 3d)
    p["gru_wih1_t"] = wih1.T
    p["gru_b"] = jnp.stack([bih0, bhh0, bih1, bhh1])             # (4, 3d)

    # --- AttentionBlock Linear(12, 12) ---
    k_att = 1.0 / (TIME_STEP ** 0.5)
    p["att_w"] = u((TIME_STEP, TIME_STEP), k_att)
    p["att_b"] = u((TIME_STEP,), k_att)[:, None]                 # column bias (T, 1)

    # --- two GATv2Conv(h, h): pack [Wl^T | Wr^T] and (bl, br, att, out-bias) ---
    k_gat = 1.0 / (h ** 0.5)
    gw, gv = [], []
    for _ in range(2):
        wl = u((h, h), k_gat)
        bl = u((h,), k_gat)
        wr = u((h, h), k_gat)
        br = u((h,), k_gat)
        a = u((h,), k_gat)
        bias = jnp.zeros((h,), jnp.float32)
        gw.append(jnp.concatenate([wl.T, wr.T], axis=1))         # (h, 2h)
        gv.append(jnp.stack([bl, br, a, bias]))                  # (4, h)
    p["gat_w"] = jnp.stack(gw)                                   # (2, h, 2h)
    p["gat_v"] = jnp.stack(gv)                                   # (2, 4, h)

    # --- CapsuleLinear shared weight (out_caps=n, out_len=h, in_len=2h) ---
    w_caps = u((n, h, 2 * h), 0.1)
    # W_all[in_k, o*h + out_c] = w_caps[o, out_c, in_k]  (lane-dense prior matmul)
    w_all = jnp.transpose(w_caps, (2, 0, 1)).reshape(2 * h, n * h)
    p["caps_w"] = jnp.stack([w_all[:h], w_all[h:]])              # (2, h, n*h)

    # --- fusion Linear(h, n), pre-expanded to the lane-dense capsule layout ---
    k_f = 1.0 / (h ** 0.5)
    wf = u((n, h), k_f)                                          # torch weight (out, in)
    bf = u((n,), k_f)
    p["fusion_w_big"] = jnp.kron(jnp.eye(n, dtype=jnp.float32), wf.T)   # (n*h, n*n)
    p["fusion_b_big"] = jnp.tile(bf, n)[None, :]                        # (1, n*n)
    return p


if __name__ == "__main__":
    key = jax.random.PRNGKey(0)
    pkey, xkey = jax.random.split(key)
    params = init_params(pkey)

    B = 1  # module hard-codes self.batch = 1 (edge list only spans one graph)
    inputs = jax.random.normal(xkey, (B, TIME_STEP, INPUT_DIM * HIDDEN), jnp.float32)
    # inject non-finite values to exercise the fused nan_to_num(nan=0.0, posinf=1.0)
    inputs = inputs.at[0, 0, 0].set(jnp.nan).at[0, 1, 1].set(jnp.inf)

    out = jax.jit(cap_gat_attention_gru)(inputs, params)
    out = jax.block_until_ready(out)

    assert out.shape == (B, INPUT_DIM, INPUT_DIM), out.shape
    assert bool(jnp.all(jnp.isfinite(out)))
    print("KERNEL_OK")
</pallas_src>

<mosaic_0001>
module attributes {stable_mosaic.version = 11 : i64} {
  func.func @_fused_kernel(%arg0: i32, %arg1: memref<12x256xf32, #tpu.memory_space<vmem>>, %arg2: memref<256x768xf32, #tpu.memory_space<vmem>>, %arg3: memref<256x768xf32, #tpu.memory_space<vmem>>, %arg4: memref<4x768xf32, #tpu.memory_space<vmem>>, %arg5: memref<12x12xf32, #tpu.memory_space<vmem>>, %arg6: memref<12x1xf32, #tpu.memory_space<vmem>>, %arg7: memref<2x32x64xf32, #tpu.memory_space<vmem>>, %arg8: memref<2x4x32xf32, #tpu.memory_space<vmem>>, %arg9: memref<2x32x256xf32, #tpu.memory_space<vmem>>, %arg10: memref<256x64xf32, #tpu.memory_space<vmem>>, %arg11: memref<1x64xf32, #tpu.memory_space<vmem>>, %arg12: memref<1x64xf32, #tpu.memory_space<vmem>>) attributes {dimension_semantics = [#tpu.dimension_semantics<arbitrary>], iteration_bounds = array<i64: 1>, scalar_prefetch = 0 : i64, scratch_operands = 0 : i64, tpu.core_type = #tpu.core_type<tc>, window_params = [{pipeline_mode = #tpu.pipeline_mode<synchronous>, transform_indices = @transform_0, window_bounds = array<i64: 12, 256>}, {pipeline_mode = #tpu.pipeline_mode<synchronous>, transform_indices = @transform_1, window_bounds = array<i64: 256, 768>}, {pipeline_mode = #tpu.pipeline_mode<synchronous>, transform_indices = @transform_2, window_bounds = array<i64: 256, 768>}, {pipeline_mode = #tpu.pipeline_mode<synchronous>, transform_indices = @transform_3, window_bounds = array<i64: 4, 768>}, {pipeline_mode = #tpu.pipeline_mode<synchronous>, transform_indices = @transform_4, window_bounds = array<i64: 12, 12>}, {pipeline_mode = #tpu.pipeline_mode<synchronous>, transform_indices = @transform_5, window_bounds = array<i64: 12, 1>}, {pipeline_mode = #tpu.pipeline_mode<synchronous>, transform_indices = @transform_6, window_bounds = array<i64: 2, 32, 64>}, {pipeline_mode = #tpu.pipeline_mode<synchronous>, transform_indices = @transform_7, window_bounds = array<i64: 2, 4, 32>}, {pipeline_mode = #tpu.pipeline_mode<synchronous>, transform_indices = @transform_8, window_bounds = array<i64: 2, 32, 256>}, {pipeline_mode = #tpu.pipeline_mode<synchronous>, transform_indices = @transform_9, window_bounds = array<i64: 256, 64>}, {pipeline_mode = #tpu.pipeline_mode<synchronous>, transform_indices = @transform_10, window_bounds = array<i64: 1, 64>}, {pipeline_mode = #tpu.pipeline_mode<synchronous>, transform_indices = @transform_11, window_bounds = array<i64: 1, 64>}]} {
    %c0 = arith.constant 0 : index
    %c0_0 = arith.constant 0 : index
    %0 = vector.load %arg1[%c0, %c0_0] : memref<12x256xf32, #tpu.memory_space<vmem>>, vector<12x256xf32>
    %1 = arith.cmpf one, %0, %0 : vector<12x256xf32>
    %cst = arith.constant 0.000000e+00 : f32
    %2 = vector.broadcast %cst : f32 to vector<12x256xf32>
    %3 = arith.select %1, %2, %0 : vector<12x256xi1>, vector<12x256xf32>
    %cst_1 = arith.constant 0x7F800000 : f32
    %4 = vector.broadcast %cst_1 : f32 to vector<12x256xf32>
    %5 = arith.cmpf oeq, %3, %4 : vector<12x256xf32>
    %cst_2 = arith.constant 1.000000e+00 : f32
    %6 = vector.broadcast %cst_2 : f32 to vector<12x256xf32>
    %7 = arith.select %5, %6, %3 : vector<12x256xi1>, vector<12x256xf32>
    %cst_3 = arith.constant 0xFF800000 : f32
    %8 = vector.broadcast %cst_3 : f32 to vector<12x256xf32>
    %9 = arith.cmpf oeq, %7, %8 : vector<12x256xf32>
    %cst_4 = arith.constant -3.40282347E+38 : f32
    %10 = vector.broadcast %cst_4 : f32 to vector<12x256xf32>
    %11 = arith.select %9, %10, %7 : vector<12x256xi1>, vector<12x256xf32>
    %c0_5 = arith.constant 0 : index
    %c0_6 = arith.constant 0 : index
    %12 = vector.load %arg4[%c0_5, %c0_6] : memref<4x768xf32, #tpu.memory_space<vmem>>, vector<4x768xf32>
    %c0_7 = arith.constant 0 : index
    %c0_8 = arith.constant 0 : index
    %13 = vector.load %arg2[%c0_7, %c0_8] : memref<256x768xf32, #tpu.memory_space<vmem>>, vector<256x768xf32>
    %14 = vector.extract_strided_slice %12 {offsets = [0, 0], sizes = [1, 768], strides = [1, 1]} : vector<4x768xf32> to vector<1x768xf32>
    %15 = vector.extract_strided_slice %12 {offsets = [1, 0], sizes = [1, 768], strides = [1, 1]} : vector<4x768xf32> to vector<1x768xf32>
    %cst_9 = arith.constant dense<0.000000e+00> : vector<12x768xf32>
    %16 = tpu.matmul %11, %13, %cst_9 {dimension_numbers = #tpu.dot_dimension_numbers<[1], [0], [0], [1], [0, 0, 1, 1], [], []>} : vector<12x256xf32>, vector<256x768xf32>, vector<12x768xf32> -> vector<12x768xf32>
    %17 = vector.broadcast %14 : vector<1x768xf32> to vector<12x768xf32>
    %18 = arith.addf %16, %17 : vector<12x768xf32>
    %19 = vector.extract_strided_slice %18 {offsets = [0, 0], sizes = [12, 256], strides = [1, 1]} : vector<12x768xf32> to vector<12x256xf32>
    %20 = vector.extract_strided_slice %15 {offsets = [0, 0], sizes = [1, 256], strides = [1, 1]} : vector<1x768xf32> to vector<1x256xf32>
    %21 = vector.broadcast %20 : vector<1x256xf32> to vector<12x256xf32>
    %22 = arith.addf %19, %21 : vector<12x256xf32>
    %23 = arith.negf %22 : vector<12x256xf32>
    %24 = math.exp %23 : vector<12x256xf32>
    %cst_10 = arith.constant 1.000000e+00 : f32
    %25 = vector.broadcast %cst_10 : f32 to vector<12x256xf32>
    %26 = arith.addf %25, %24 : vector<12x256xf32>
    %27 = arith.divf %25, %26 : vector<12x256xf32>
    %28 = vector.extract_strided_slice %18 {offsets = [0, 256], sizes = [12, 256], strides = [1, 1]} : vector<12x768xf32> to vector<12x256xf32>
    %29 = vector.extract_strided_slice %15 {offsets = [0, 256], sizes = [1, 256], strides = [1, 1]} : vector<1x768xf32> to vector<1x256xf32>
    %30 = vector.broadcast %29 : vector<1x256xf32> to vector<12x256xf32>
    %31 = arith.addf %28, %30 : vector<12x256xf32>
    %32 = arith.negf %31 : vector<12x256xf32>
    %33 = math.exp %32 : vector<12x256xf32>
    %cst_11 = arith.constant 1.000000e+00 : f32
    %34 = vector.broadcast %cst_11 : f32 to vector<12x256xf32>
    %35 = arith.addf %34, %33 : vector<12x256xf32>
    %36 = arith.divf %34, %35 : vector<12x256xf32>
    %37 = vector.extract_strided_slice %18 {offsets = [0, 512], sizes = [12, 256], strides = [1, 1]} : vector<12x768xf32> to vector<12x256xf32>
    %38 = vector.extract_strided_slice %15 {offsets = [0, 512], sizes = [1, 256], strides = [1, 1]} : vector<1x768xf32> to vector<1x256xf32>
    %39 = vector.broadcast %38 : vector<1x256xf32> to vector<12x256xf32>
    %40 = arith.mulf %27, %39 : vector<12x256xf32>
    %41 = arith.addf %37, %40 : vector<12x256xf32>
    %42 = math.tanh %41 : vector<12x256xf32>
    %cst_12 = arith.constant 1.000000e+00 : f32
    %43 = vector.broadcast %cst_12 : f32 to vector<12x256xf32>
    %44 = arith.subf %43, %36 : vector<12x256xf32>
    %45 = arith.mulf %44, %42 : vector<12x256xf32>
    %c0_13 = arith.constant 0 : index
    %c0_14 = arith.constant 0 : index
    %46 = vector.load %arg3[%c0_13, %c0_14] : memref<256x768xf32, #tpu.memory_space<vmem>>, vector<256x768xf32>
    %47 = vector.extract_strided_slice %12 {offsets = [2, 0], sizes = [1, 768], strides = [1, 1]} : vector<4x768xf32> to vector<1x768xf32>
    %48 = vector.extract_strided_slice %12 {offsets = [3, 0], sizes = [1, 768], strides = [1, 1]} : vector<4x768xf32> to vector<1x768xf32>
    %cst_15 = arith.constant dense<0.000000e+00> : vector<12x768xf32>
    %49 = tpu.matmul %45, %46, %cst_15 {dimension_numbers = #tpu.dot_dimension_numbers<[1], [0], [0], [1], [0, 0, 1, 1], [], []>} : vector<12x256xf32>, vector<256x768xf32>, vector<12x768xf32> -> vector<12x768xf32>
    %50 = vector.broadcast %47 : vector<1x768xf32> to vector<12x768xf32>
    %51 = arith.addf %49, %50 : vector<12x768xf32>
    %52 = vector.extract_strided_slice %51 {offsets = [0, 0], sizes = [12, 256], strides = [1, 1]} : vector<12x768xf32> to vector<12x256xf32>
    %53 = vector.extract_strided_slice %48 {offsets = [0, 0], sizes = [1, 256], strides = [1, 1]} : vector<1x768xf32> to vector<1x256xf32>
    %54 = vector.broadcast %53 : vector<1x256xf32> to vector<12x256xf32>
    %55 = arith.addf %52, %54 : vector<12x256xf32>
    %56 = arith.negf %55 : vector<12x256xf32>
    %57 = math.exp %56 : vector<12x256xf32>
    %cst_16 = arith.constant 1.000000e+00 : f32
    %58 = vector.broadcast %cst_16 : f32 to vector<12x256xf32>
    %59 = arith.addf %58, %57 : vector<12x256xf32>
    %60 = arith.divf %58, %59 : vector<12x256xf32>
    %61 = vector.extract_strided_slice %51 {offsets = [0, 256], sizes = [12, 256], strides = [1, 1]} : vector<12x768xf32> to vector<12x256xf32>
    %62 = vector.extract_strided_slice %48 {offsets = [0, 256], sizes = [1, 256], strides = [1, 1]} : vector<1x768xf32> to vector<1x256xf32>
    %63 = vector.broadcast %62 : vector<1x256xf32> to vector<12x256xf32>
    %64 = arith.addf %61, %63 : vector<12x256xf32>
    %65 = arith.negf %64 : vector<12x256xf32>
    %66 = math.exp %65 : vector<12x256xf32>
    %cst_17 = arith.constant 1.000000e+00 : f32
    %67 = vector.broadcast %cst_17 : f32 to vector<12x256xf32>
    %68 = arith.addf %67, %66 : vector<12x256xf32>
    %69 = arith.divf %67, %68 : vector<12x256xf32>
    %70 = vector.extract_strided_slice %51 {offsets = [0, 512], sizes = [12, 256], strides = [1, 1]} : vector<12x768xf32> to vector<12x256xf32>
    %71 = vector.extract_strided_slice %48 {offsets = [0, 512], sizes = [1, 256], strides = [1, 1]} : vector<1x768xf32> to vector<1x256xf32>
    %72 = vector.broadcast %71 : vector<1x256xf32> to vector<12x256xf32>
    %73 = arith.mulf %60, %72 : vector<12x256xf32>
    %74 = arith.addf %70, %73 : vector<12x256xf32>
    %75 = math.tanh %74 : vector<12x256xf32>
    %cst_18 = arith.constant 1.000000e+00 : f32
    %76 = vector.broadcast %cst_18 : f32 to vector<12x256xf32>
    %77 = arith.subf %76, %69 : vector<12x256xf32>
    %78 = arith.mulf %77, %75 : vector<12x256xf32>
    %cst_19 = arith.constant 0.000000e+00 : f32
    %79 = vector.broadcast %cst_19 : f32 to vector<12x256xf32>
    %80 = arith.maximumf %78, %79 : vector<12x256xf32>
    %c0_20 = arith.constant 0 : index
    %c0_21 = arith.constant 0 : index
    %81 = vector.load %arg5[%c0_20, %c0_21] : memref<12x12xf32, #tpu.memory_space<vmem>>, vector<12x12xf32>
    %cst_22 = arith.constant dense<0.000000e+00> : vector<12x256xf32>
    %82 = tpu.matmul %81, %80, %cst_22 {dimension_numbers = #tpu.dot_dimension_numbers<[1], [0], [0], [1], [0, 0, 1, 1], [], []>} : vector<12x12xf32>, vector<12x256xf32>, vector<12x256xf32> -> vector<12x256xf32>
    %c0_23 = arith.constant 0 : index
    %c0_24 = arith.constant 0 : index
    %83 = vector.load %arg6[%c0_23, %c0_24] : memref<12x1xf32, #tpu.memory_space<vmem>>, vector<12x1xf32>
    %84 = vector.broadcast %83 : vector<12x1xf32> to vector<12x256xf32>
    %85 = arith.addf %82, %84 : vector<12x256xf32>
    %cst_25 = arith.constant dense<0xFF800000> : vector<256xf32>
    %86 = vector.multi_reduction <maximumf>, %85, %cst_25 [0] : vector<12x256xf32> to vector<256xf32>
    %cst_26 = arith.constant 0xFF800000 : f32
    %87 = vector.broadcast %cst_26 : f32 to vector<256xf32>
    %88 = arith.maximumf %87, %86 : vector<256xf32>
    %89 = vector.shape_cast %88 : vector<256xf32> to vector<1x256xf32>
    %90 = vector.broadcast %89 : vector<1x256xf32> to vector<12x256xf32>
    %91 = arith.subf %85, %90 : vector<12x256xf32>
    %92 = math.exp %91 : vector<12x256xf32>
    %cst_27 = arith.constant dense<0.000000e+00> : vector<256xf32>
    %93 = vector.multi_reduction <add>, %92, %cst_27 [0] : vector<12x256xf32> to vector<256xf32>
    %94 = vector.shape_cast %93 : vector<256xf32> to vector<1x256xf32>
    %95 = vector.broadcast %94 : vector<1x256xf32> to vector<12x256xf32>
    %96 = arith.divf %92, %95 : vector<12x256xf32>
    %97 = arith.mulf %96, %80 : vector<12x256xf32>
    %cst_28 = arith.constant dense<0.000000e+00> : vector<256xf32>
    %98 = vector.multi_reduction <add>, %97, %cst_28 [0] : vector<12x256xf32> to vector<256xf32>
    %99 = vector.shape_cast %98 : vector<256xf32> to vector<1x256xf32>
    %100 = math.tanh %99 : vector<1x256xf32>
    %101 = tpu.iota {dimensions = array<i32: 0>} : vector<256x8xi32>
    %102 = tpu.iota {dimensions = array<i32: 1>} : vector<256x8xi32>
    %c32_i32 = arith.constant 32 : i32
    %103 = vector.broadcast %c32_i32 : i32 to vector<256x8xi32>
    %104 = arith.muli %102, %103 : vector<256x8xi32>
    %105 = arith.cmpi sge, %101, %104 : vector<256x8xi32>
    %c1_i32 = arith.constant 1 : i32
    %106 = vector.broadcast %c1_i32 : i32 to vector<256x8xi32>
    %107 = arith.addi %102, %106 : vector<256x8xi32>
    %c32_i32_29 = arith.constant 32 : i32
    %108 = vector.broadcast %c32_i32_29 : i32 to vector<256x8xi32>
    %109 = arith.muli %107, %108 : vector<256x8xi32>
    %110 = arith.cmpi slt, %101, %109 : vector<256x8xi32>
    %111 = arith.andi %105, %110 : vector<256x8xi1>
    %112 = arith.extui %111 : vector<256x8xi1> to vector<256x8xi32>
    %113 = arith.sitofp %112 : vector<256x8xi32> to vector<256x8xf32>
    %114 = tpu.iota {dimensions = array<i32: 0>} : vector<8x256xi32>
    %115 = tpu.iota {dimensions = array<i32: 1>} : vector<8x256xi32>
    %c32_i32_30 = arith.constant 32 : i32
    %116 = vector.broadcast %c32_i32_30 : i32 to vector<8x256xi32>
    %117 = arith.muli %114, %116 : vector<8x256xi32>
    %118 = arith.cmpi sge, %115, %117 : vector<8x256xi32>
    %c1_i32_31 = arith.constant 1 : i32
    %119 = vector.broadcast %c1_i32_31 : i32 to vector<8x256xi32>
    %120 = arith.addi %114, %119 : vector<8x256xi32>
    %c32_i32_32 = arith.constant 32 : i32
    %121 = vector.broadcast %c32_i32_32 : i32 to vector<8x256xi32>
    %122 = arith.muli %120, %121 : vector<8x256xi32>
    %123 = arith.cmpi slt, %115, %122 : vector<8x256xi32>
    %124 = arith.andi %118, %123 : vector<8x256xi1>
    %125 = arith.extui %124 : vector<8x256xi1> to vector<8x256xi32>
    %126 = arith.sitofp %125 : vector<8x256xi32> to vector<8x256xf32>
    %127 = tpu.iota {dimensions = array<i32: 0>} : vector<32x32xi32>
    %128 = tpu.iota {dimensions = array<i32: 1>} : vector<32x32xi32>
    %129 = arith.cmpi eq, %127, %128 : vector<32x32xi32>
    %130 = arith.extui %129 : vector<32x32xi1> to vector<32x32xi32>
    %131 = arith.sitofp %130 : vector<32x32xi32> to vector<32x32xf32>
    %132 = tpu.concatenate %131, %131, %131, %131, %131, %131, %131, %131 in 0 : vector<32x32xf32>, vector<32x32xf32>, vector<32x32xf32>, vector<32x32xf32>, vector<32x32xf32>, vector<32x32xf32>, vector<32x32xf32>, vector<32x32xf32> -> vector<256x32xf32>
    %133 = vector.broadcast %100 : vector<1x256xf32> to vector<8x256xf32>
    %134 = arith.mulf %133, %126 : vector<8x256xf32>
    %cst_33 = arith.constant dense<0.000000e+00> : vector<8x32xf32>
    %135 = tpu.matmul %134, %132, %cst_33 {dimension_numbers = #tpu.dot_dimension_numbers<[1], [0], [0], [1], [0, 0, 1, 1], [], []>} : vector<8x256xf32>, vector<256x32xf32>, vector<8x32xf32> -> vector<8x32xf32>
    %c0_34 = arith.constant 0 : index
    %c0_35 = arith.constant 0 : index
    %c0_36 = arith.constant 0 : index
    %136 = vector.load %arg7[%c0_34, %c0_35, %c0_36] : memref<2x32x64xf32, #tpu.memory_space<vmem>>, vector<1x32x64xf32>
    %137 = vector.shape_cast %136 : vector<1x32x64xf32> to vector<32x64xf32>
    %c0_37 = arith.constant 0 : index
    %c0_38 = arith.constant 0 : index
    %c0_39 = arith.constant 0 : index
    %138 = vector.load %arg8[%c0_37, %c0_38, %c0_39] : memref<2x4x32xf32, #tpu.memory_space<vmem>>, vector<1x4x32xf32>
    %139 = vector.shape_cast %138 : vector<1x4x32xf32> to vector<4x32xf32>
    %cst_40 = arith.constant dense<0.000000e+00> : vector<8x64xf32>
    %140 = tpu.matmul %135, %137, %cst_40 {dimension_numbers = #tpu.dot_dimension_numbers<[1], [0], [0], [1], [0, 0, 1, 1], [], []>} : vector<8x32xf32>, vector<32x64xf32>, vector<8x64xf32> -> vector<8x64xf32>
    %141 = vector.extract_strided_slice %140 {offsets = [0, 0], sizes = [8, 32], strides = [1, 1]} : vector<8x64xf32> to vector<8x32xf32>
    %142 = vector.extract_strided_slice %139 {offsets = [0, 0], sizes = [1, 32], strides = [1, 1]} : vector<4x32xf32> to vector<1x32xf32>
    %143 = vector.broadcast %142 : vector<1x32xf32> to vector<8x32xf32>
    %144 = arith.addf %141, %143 : vector<8x32xf32>
    %145 = vector.extract_strided_slice %140 {offsets = [0, 32], sizes = [8, 32], strides = [1, 1]} : vector<8x64xf32> to vector<8x32xf32>
    %146 = vector.extract_strided_slice %139 {offsets = [1, 0], sizes = [1, 32], strides = [1, 1]} : vector<4x32xf32> to vector<1x32xf32>
    %147 = vector.broadcast %146 : vector<1x32xf32> to vector<8x32xf32>
    %148 = arith.addf %145, %147 : vector<8x32xf32>
    %149 = vector.shape_cast %148 : vector<8x32xf32> to vector<8x1x32xf32>
    %150 = vector.shape_cast %144 : vector<8x32xf32> to vector<1x8x32xf32>
    %151 = vector.broadcast %149 : vector<8x1x32xf32> to vector<8x8x32xf32>
    %152 = vector.broadcast %150 : vector<1x8x32xf32> to vector<8x8x32xf32>
    %153 = arith.addf %151, %152 : vector<8x8x32xf32>
    %cst_41 = arith.constant 0.000000e+00 : f32
    %154 = vector.broadcast %cst_41 : f32 to vector<8x8x32xf32>
    %155 = arith.cmpf ogt, %153, %154 : vector<8x8x32xf32>
    %cst_42 = arith.constant 2.000000e-01 : f32
    %156 = vector.broadcast %cst_42 : f32 to vector<8x8x32xf32>
    %157 = arith.mulf %156, %153 : vector<8x8x32xf32>
    %158 = arith.select %155, %153, %157 : vector<8x8x32xi1>, vector<8x8x32xf32>
    %159 = vector.extract_strided_slice %139 {offsets = [2, 0], sizes = [1, 32], strides = [1, 1]} : vector<4x32xf32> to vector<1x32xf32>
    %160 = vector.shape_cast %159 : vector<1x32xf32> to vector<1x1x32xf32>
    %161 = vector.broadcast %160 : vector<1x1x32xf32> to vector<8x8x32xf32>
    %162 = arith.mulf %158, %161 : vector<8x8x32xf32>
    %cst_43 = arith.constant dense<0.000000e+00> : vector<8x8xf32>
    %163 = vector.multi_reduction <add>, %162, %cst_43 [2] : vector<8x8x32xf32> to vector<8x8xf32>
    %cst_44 = arith.constant dense<0xFF800000> : vector<8xf32>
    %164 = vector.multi_reduction <maximumf>, %163, %cst_44 [1] : vector<8x8xf32> to vector<8xf32>
    %cst_45 = arith.constant 0xFF800000 : f32
    %165 = vector.broadcast %cst_45 : f32 to vector<8xf32>
    %166 = arith.maximumf %165, %164 : vector<8xf32>
    %167 = vector.shape_cast %166 : vector<8xf32> to vector<8x1xf32>
    %168 = vector.broadcast %167 : vector<8x1xf32> to vector<8x8xf32>
    %169 = arith.subf %163, %168 : vector<8x8xf32>
    %170 = math.exp %169 : vector<8x8xf32>
    %cst_46 = arith.constant dense<0.000000e+00> : vector<8xf32>
    %171 = vector.multi_reduction <add>, %170, %cst_46 [1] : vector<8x8xf32> to vector<8xf32>
    %172 = vector.shape_cast %171 : vector<8xf32> to vector<8x1xf32>
    %173 = vector.broadcast %172 : vector<8x1xf32> to vector<8x8xf32>
    %174 = arith.divf %170, %173 : vector<8x8xf32>
    %cst_47 = arith.constant dense<0.000000e+00> : vector<8x32xf32>
    %175 = tpu.matmul %174, %144, %cst_47 {dimension_numbers = #tpu.dot_dimension_numbers<[1], [0], [0], [1], [0, 0, 1, 1], [], []>} : vector<8x8xf32>, vector<8x32xf32>, vector<8x32xf32> -> vector<8x32xf32>
    %176 = vector.extract_strided_slice %139 {offsets = [3, 0], sizes = [1, 32], strides = [1, 1]} : vector<4x32xf32> to vector<1x32xf32>
    %177 = vector.broadcast %176 : vector<1x32xf32> to vector<8x32xf32>
    %178 = arith.addf %175, %177 : vector<8x32xf32>
    %cst_48 = arith.constant 0.000000e+00 : f32
    %179 = vector.broadcast %cst_48 : f32 to vector<8x32xf32>
    %180 = arith.maximumf %178, %179 : vector<8x32xf32>
    %c1 = arith.constant 1 : index
    %c0_49 = arith.constant 0 : index
    %c0_50 = arith.constant 0 : index
    %181 = vector.load %arg7[%c1, %c0_49, %c0_50] : memref<2x32x64xf32, #tpu.memory_space<vmem>>, vector<1x32x64xf32>
    %182 = vector.shape_cast %181 : vector<1x32x64xf32> to vector<32x64xf32>
    %c1_51 = arith.constant 1 : index
    %c0_52 = arith.constant 0 : index
    %c0_53 = arith.constant 0 : index
    %183 = vector.load %arg8[%c1_51, %c0_52, %c0_53] : memref<2x4x32xf32, #tpu.memory_space<vmem>>, vector<1x4x32xf32>
    %184 = vector.shape_cast %183 : vector<1x4x32xf32> to vector<4x32xf32>
    %cst_54 = arith.constant dense<0.000000e+00> : vector<8x64xf32>
    %185 = tpu.matmul %180, %182, %cst_54 {dimension_numbers = #tpu.dot_dimension_numbers<[1], [0], [0], [1], [0, 0, 1, 1], [], []>} : vector<8x32xf32>, vector<32x64xf32>, vector<8x64xf32> -> vector<8x64xf32>
    %186 = vector.extract_strided_slice %185 {offsets = [0, 0], sizes = [8, 32], strides = [1, 1]} : vector<8x64xf32> to vector<8x32xf32>
    %187 = vector.extract_strided_slice %184 {offsets = [0, 0], sizes = [1, 32], strides = [1, 1]} : vector<4x32xf32> to vector<1x32xf32>
    %188 = vector.broadcast %187 : vector<1x32xf32> to vector<8x32xf32>
    %189 = arith.addf %186, %188 : vector<8x32xf32>
    %190 = vector.extract_strided_slice %185 {offsets = [0, 32], sizes = [8, 32], strides = [1, 1]} : vector<8x64xf32> to vector<8x32xf32>
    %191 = vector.extract_strided_slice %184 {offsets = [1, 0], sizes = [1, 32], strides = [1, 1]} : vector<4x32xf32> to vector<1x32xf32>
    %192 = vector.broadcast %191 : vector<1x32xf32> to vector<8x32xf32>
    %193 = arith.addf %190, %192 : vector<8x32xf32>
    %194 = vector.shape_cast %193 : vector<8x32xf32> to vector<8x1x32xf32>
    %195 = vector.shape_cast %189 : vector<8x32xf32> to vector<1x8x32xf32>
    %196 = vector.broadcast %194 : vector<8x1x32xf32> to vector<8x8x32xf32>
    %197 = vector.broadcast %195 : vector<1x8x32xf32> to vector<8x8x32xf32>
    %198 = arith.addf %196, %197 : vector<8x8x32xf32>
    %cst_55 = arith.constant 0.000000e+00 : f32
    %199 = vector.broadcast %cst_55 : f32 to vector<8x8x32xf32>
    %200 = arith.cmpf ogt, %198, %199 : vector<8x8x32xf32>
    %cst_56 = arith.constant 2.000000e-01 : f32
    %201 = vector.broadcast %cst_56 : f32 to vector<8x8x32xf32>
    %202 = arith.mulf %201, %198 : vector<8x8x32xf32>
    %203 = arith.select %200, %198, %202 : vector<8x8x32xi1>, vector<8x8x32xf32>
    %204 = vector.extract_strided_slice %184 {offsets = [2, 0], sizes = [1, 32], strides = [1, 1]} : vector<4x32xf32> to vector<1x32xf32>
    %205 = vector.shape_cast %204 : vector<1x32xf32> to vector<1x1x32xf32>
    %206 = vector.broadcast %205 : vector<1x1x32xf32> to vector<8x8x32xf32>
    %207 = arith.mulf %203, %206 : vector<8x8x32xf32>
    %cst_57 = arith.constant dense<0.000000e+00> : vector<8x8xf32>
    %208 = vector.multi_reduction <add>, %207, %cst_57 [2] : vector<8x8x32xf32> to vector<8x8xf32>
    %cst_58 = arith.constant dense<0xFF800000> : vector<8xf32>
    %209 = vector.multi_reduction <maximumf>, %208, %cst_58 [1] : vector<8x8xf32> to vector<8xf32>
    %cst_59 = arith.constant 0xFF800000 : f32
    %210 = vector.broadcast %cst_59 : f32 to vector<8xf32>
    %211 = arith.maximumf %210, %209 : vector<8xf32>
    %212 = vector.shape_cast %211 : vector<8xf32> to vector<8x1xf32>
    %213 = vector.broadcast %212 : vector<8x1xf32> to vector<8x8xf32>
    %214 = arith.subf %208, %213 : vector<8x8xf32>
    %215 = math.exp %214 : vector<8x8xf32>
    %cst_60 = arith.constant dense<0.000000e+00> : vector<8xf32>
    %216 = vector.multi_reduction <add>, %215, %cst_60 [1] : vector<8x8xf32> to vector<8xf32>
    %217 = vector.shape_cast %216 : vector<8xf32> to vector<8x1xf32>
    %218 = vector.broadcast %217 : vector<8x1xf32> to vector<8x8xf32>
    %219 = arith.divf %215, %218 : vector<8x8xf32>
    %cst_61 = arith.constant dense<0.000000e+00> : vector<8x32xf32>
    %220 = tpu.matmul %219, %189, %cst_61 {dimension_numbers = #tpu.dot_dimension_numbers<[1], [0], [0], [1], [0, 0, 1, 1], [], []>} : vector<8x8xf32>, vector<8x32xf32>, vector<8x32xf32> -> vector<8x32xf32>
    %221 = vector.extract_strided_slice %184 {offsets = [3, 0], sizes = [1, 32], strides = [1, 1]} : vector<4x32xf32> to vector<1x32xf32>
    %222 = vector.broadcast %221 : vector<1x32xf32> to vector<8x32xf32>
    %223 = arith.addf %220, %222 : vector<8x32xf32>
    %cst_62 = arith.constant 0.000000e+00 : f32
    %224 = vector.broadcast %cst_62 : f32 to vector<8x32xf32>
    %225 = arith.maximumf %223, %224 : vector<8x32xf32>
    %226 = arith.addf %180, %225 : vector<8x32xf32>
    %c0_63 = arith.constant 0 : index
    %c0_64 = arith.constant 0 : index
    %c0_65 = arith.constant 0 : index
    %227 = vector.load %arg9[%c0_63, %c0_64, %c0_65] : memref<2x32x256xf32, #tpu.memory_space<vmem>>, vector<1x32x256xf32>
    %228 = vector.shape_cast %227 : vector<1x32x256xf32> to vector<32x256xf32>
    %cst_66 = arith.constant dense<0.000000e+00> : vector<8x256xf32>
    %229 = tpu.matmul %135, %228, %cst_66 {dimension_numbers = #tpu.dot_dimension_numbers<[1], [0], [0], [1], [0, 0, 1, 1], [], []>} : vector<8x32xf32>, vector<32x256xf32>, vector<8x256xf32> -> vector<8x256xf32>
    %c1_67 = arith.constant 1 : index
    %c0_68 = arith.constant 0 : index
    %c0_69 = arith.constant 0 : index
    %230 = vector.load %arg9[%c1_67, %c0_68, %c0_69] : memref<2x32x256xf32, #tpu.memory_space<vmem>>, vector<1x32x256xf32>
    %231 = vector.shape_cast %230 : vector<1x32x256xf32> to vector<32x256xf32>
    %cst_70 = arith.constant dense<0.000000e+00> : vector<8x256xf32>
    %232 = tpu.matmul %226, %231, %cst_70 {dimension_numbers = #tpu.dot_dimension_numbers<[1], [0], [0], [1], [0, 0, 1, 1], [], []>} : vector<8x32xf32>, vector<32x256xf32>, vector<8x256xf32> -> vector<8x256xf32>
    %233 = arith.addf %229, %232 : vector<8x256xf32>
    %cst_71 = arith.constant 0.000000e+00 : f32
    %234 = vector.broadcast %cst_71 : f32 to vector<8x8xf32>
    %cst_72 = arith.constant dense<0xFF800000> : vector<8xf32>
    %235 = vector.multi_reduction <maximumf>, %234, %cst_72 [1] : vector<8x8xf32> to vector<8xf32>
    %cst_73 = arith.constant 0xFF800000 : f32
    %236 = vector.broadcast %cst_73 : f32 to vector<8xf32>
    %237 = arith.maximumf %236, %235 : vector<8xf32>
    %238 = vector.shape_cast %237 : vector<8xf32> to vector<8x1xf32>
    %239 = vector.broadcast %238 : vector<8x1xf32> to vector<8x8xf32>
    %240 = arith.subf %234, %239 : vector<8x8xf32>
    %241 = math.exp %240 : vector<8x8xf32>
    %cst_74 = arith.constant dense<0.000000e+00> : vector<8xf32>
    %242 = vector.multi_reduction <add>, %241, %cst_74 [1] : vector<8x8xf32> to vector<8xf32>
    %243 = vector.shape_cast %242 : vector<8xf32> to vector<8x1xf32>
    %244 = vector.broadcast %243 : vector<8x1xf32> to vector<8x8xf32>
    %245 = arith.divf %241, %244 : vector<8x8xf32>
    %cst_75 = arith.constant dense<0.000000e+00> : vector<8x256xf32>
    %246 = tpu.matmul %245, %126, %cst_75 {dimension_numbers = #tpu.dot_dimension_numbers<[1], [0], [0], [1], [0, 0, 1, 1], [], []>} : vector<8x8xf32>, vector<8x256xf32>, vector<8x256xf32> -> vector<8x256xf32>
    %247 = arith.mulf %246, %233 : vector<8x256xf32>
    %cst_76 = arith.constant dense<0.000000e+00> : vector<256xf32>
    %248 = vector.multi_reduction <add>, %247, %cst_76 [0] : vector<8x256xf32> to vector<256xf32>
    %249 = vector.shape_cast %248 : vector<256xf32> to vector<1x256xf32>
    %250 = arith.mulf %249, %249 : vector<1x256xf32>
    %cst_77 = arith.constant dense<0.000000e+00> : vector<1x8xf32>
    %251 = tpu.matmul %250, %113, %cst_77 {dimension_numbers = #tpu.dot_dimension_numbers<[1], [0], [0], [1], [0, 0, 1, 1], [], []>} : vector<1x256xf32>, vector<256x8xf32>, vector<1x8xf32> -> vector<1x8xf32>
    %cst_78 = arith.constant 1.000000e+00 : f32
    %252 = vector.broadcast %cst_78 : f32 to vector<1x8xf32>
    %253 = arith.addf %252, %251 : vector<1x8xf32>
    %254 = arith.divf %251, %253 : vector<1x8xf32>
    %cst_79 = arith.constant 9.99999996E-13 : f32
    %255 = vector.broadcast %cst_79 : f32 to vector<1x8xf32>
    %256 = arith.addf %251, %255 : vector<1x8xf32>
    %257 = math.rsqrt %256 : vector<1x8xf32>
    %258 = arith.mulf %254, %257 : vector<1x8xf32>
    %cst_80 = arith.constant dense<0.000000e+00> : vector<1x256xf32>
    %259 = tpu.matmul %258, %126, %cst_80 {dimension_numbers = #tpu.dot_dimension_numbers<[1], [0], [0], [1], [0, 0, 1, 1], [], []>} : vector<1x8xf32>, vector<8x256xf32>, vector<1x256xf32> -> vector<1x256xf32>
    %260 = arith.mulf %249, %259 : vector<1x256xf32>
    %261 = vector.broadcast %260 : vector<1x256xf32> to vector<8x256xf32>
    %262 = arith.mulf %233, %261 : vector<8x256xf32>
    %cst_81 = arith.constant dense<0.000000e+00> : vector<8x8xf32>
    %263 = tpu.matmul %262, %113, %cst_81 {dimension_numbers = #tpu.dot_dimension_numbers<[1], [0], [0], [1], [0, 0, 1, 1], [], []>} : vector<8x256xf32>, vector<256x8xf32>, vector<8x8xf32> -> vector<8x8xf32>
    %264 = arith.addf %234, %263 : vector<8x8xf32>
    %cst_82 = arith.constant dense<0xFF800000> : vector<8xf32>
    %265 = vector.multi_reduction <maximumf>, %264, %cst_82 [1] : vector<8x8xf32> to vector<8xf32>
    %cst_83 = arith.constant 0xFF800000 : f32
    %266 = vector.broadcast %cst_83 : f32 to vector<8xf32>
    %267 = arith.maximumf %266, %265 : vector<8xf32>
    %268 = vector.shape_cast %267 : vector<8xf32> to vector<8x1xf32>
    %269 = vector.broadcast %268 : vector<8x1xf32> to vector<8x8xf32>
    %270 = arith.subf %264, %269 : vector<8x8xf32>
    %271 = math.exp %270 : vector<8x8xf32>
    %cst_84 = arith.constant dense<0.000000e+00> : vector<8xf32>
    %272 = vector.multi_reduction <add>, %271, %cst_84 [1] : vector<8x8xf32> to vector<8xf32>
    %273 = vector.shape_cast %272 : vector<8xf32> to vector<8x1xf32>
    %274 = vector.broadcast %273 : vector<8x1xf32> to vector<8x8xf32>
    %275 = arith.divf %271, %274 : vector<8x8xf32>
    %cst_85 = arith.constant dense<0.000000e+00> : vector<8x256xf32>
    %276 = tpu.matmul %275, %126, %cst_85 {dimension_numbers = #tpu.dot_dimension_numbers<[1], [0], [0], [1], [0, 0, 1, 1], [], []>} : vector<8x8xf32>, vector<8x256xf32>, vector<8x256xf32> -> vector<8x256xf32>
    %277 = arith.mulf %276, %233 : vector<8x256xf32>
    %cst_86 = arith.constant dense<0.000000e+00> : vector<256xf32>
    %278 = vector.multi_reduction <add>, %277, %cst_86 [0] : vector<8x256xf32> to vector<256xf32>
    %279 = vector.shape_cast %278 : vector<256xf32> to vector<1x256xf32>
    %280 = arith.mulf %279, %279 : vector<1x256xf32>
    %cst_87 = arith.constant dense<0.000000e+00> : vector<1x8xf32>
    %281 = tpu.matmul %280, %113, %cst_87 {dimension_numbers = #tpu.dot_dimension_numbers<[1], [0], [0], [1], [0, 0, 1, 1], [], []>} : vector<1x256xf32>, vector<256x8xf32>, vector<1x8xf32> -> vector<1x8xf32>
    %cst_88 = arith.constant 1.000000e+00 : f32
    %282 = vector.broadcast %cst_88 : f32 to vector<1x8xf32>
    %283 = arith.addf %282, %281 : vector<1x8xf32>
    %284 = arith.divf %281, %283 : vector<1x8xf32>
    %cst_89 = arith.constant 9.99999996E-13 : f32
    %285 = vector.broadcast %cst_89 : f32 to vector<1x8xf32>
    %286 = arith.addf %281, %285 : vector<1x8xf32>
    %287 = math.rsqrt %286 : vector<1x8xf32>
    %288 = arith.mulf %284, %287 : vector<1x8xf32>
    %cst_90 = arith.constant dense<0.000000e+00> : vector<1x256xf32>
    %289 = tpu.matmul %288, %126, %cst_90 {dimension_numbers = #tpu.dot_dimension_numbers<[1], [0], [0], [1], [0, 0, 1, 1], [], []>} : vector<1x8xf32>, vector<8x256xf32>, vector<1x256xf32> -> vector<1x256xf32>
    %290 = arith.mulf %279, %289 : vector<1x256xf32>
    %291 = vector.broadcast %290 : vector<1x256xf32> to vector<8x256xf32>
    %292 = arith.mulf %233, %291 : vector<8x256xf32>
    %cst_91 = arith.constant dense<0.000000e+00> : vector<8x8xf32>
    %293 = tpu.matmul %292, %113, %cst_91 {dimension_numbers = #tpu.dot_dimension_numbers<[1], [0], [0], [1], [0, 0, 1, 1], [], []>} : vector<8x256xf32>, vector<256x8xf32>, vector<8x8xf32> -> vector<8x8xf32>
    %294 = arith.addf %264, %293 : vector<8x8xf32>
    %cst_92 = arith.constant dense<0xFF800000> : vector<8xf32>
    %295 = vector.multi_reduction <maximumf>, %294, %cst_92 [1] : vector<8x8xf32> to vector<8xf32>
    %cst_93 = arith.constant 0xFF800000 : f32
    %296 = vector.broadcast %cst_93 : f32 to vector<8xf32>
    %297 = arith.maximumf %296, %295 : vector<8xf32>
    %298 = vector.shape_cast %297 : vector<8xf32> to vector<8x1xf32>
    %299 = vector.broadcast %298 : vector<8x1xf32> to vector<8x8xf32>
    %300 = arith.subf %294, %299 : vector<8x8xf32>
    %301 = math.exp %300 : vector<8x8xf32>
    %cst_94 = arith.constant dense<0.000000e+00> : vector<8xf32>
    %302 = vector.multi_reduction <add>, %301, %cst_94 [1] : vector<8x8xf32> to vector<8xf32>
    %303 = vector.shape_cast %302 : vector<8xf32> to vector<8x1xf32>
    %304 = vector.broadcast %303 : vector<8x1xf32> to vector<8x8xf32>
    %305 = arith.divf %301, %304 : vector<8x8xf32>
    %cst_95 = arith.constant dense<0.000000e+00> : vector<8x256xf32>
    %306 = tpu.matmul %305, %126, %cst_95 {dimension_numbers = #tpu.dot_dimension_numbers<[1], [0], [0], [1], [0, 0, 1, 1], [], []>} : vector<8x8xf32>, vector<8x256xf32>, vector<8x256xf32> -> vector<8x256xf32>
    %307 = arith.mulf %306, %233 : vector<8x256xf32>
    %cst_96 = arith.constant dense<0.000000e+00> : vector<256xf32>
    %308 = vector.multi_reduction <add>, %307, %cst_96 [0] : vector<8x256xf32> to vector<256xf32>
    %309 = vector.shape_cast %308 : vector<256xf32> to vector<1x256xf32>
    %310 = arith.mulf %309, %309 : vector<1x256xf32>
    %cst_97 = arith.constant dense<0.000000e+00> : vector<1x8xf32>
    %311 = tpu.matmul %310, %113, %cst_97 {dimension_numbers = #tpu.dot_dimension_numbers<[1], [0], [0], [1], [0, 0, 1, 1], [], []>} : vector<1x256xf32>, vector<256x8xf32>, vector<1x8xf32> -> vector<1x8xf32>
    %cst_98 = arith.constant 1.000000e+00 : f32
    %312 = vector.broadcast %cst_98 : f32 to vector<1x8xf32>
    %313 = arith.addf %312, %311 : vector<1x8xf32>
    %314 = arith.divf %311, %313 : vector<1x8xf32>
    %cst_99 = arith.constant 9.99999996E-13 : f32
    %315 = vector.broadcast %cst_99 : f32 to vector<1x8xf32>
    %316 = arith.addf %311, %315 : vector<1x8xf32>
    %317 = math.rsqrt %316 : vector<1x8xf32>
    %318 = arith.mulf %314, %317 : vector<1x8xf32>
    %cst_100 = arith.constant dense<0.000000e+00> : vector<1x256xf32>
    %319 = tpu.matmul %318, %126, %cst_100 {dimension_numbers = #tpu.dot_dimension_numbers<[1], [0], [0], [1], [0, 0, 1, 1], [], []>} : vector<1x8xf32>, vector<8x256xf32>, vector<1x256xf32> -> vector<1x256xf32>
    %320 = arith.mulf %309, %319 : vector<1x256xf32>
    %cst_101 = arith.constant 0.000000e+00 : f32
    %321 = vector.broadcast %cst_101 : f32 to vector<1x256xf32>
    %322 = arith.maximumf %320, %321 : vector<1x256xf32>
    %c0_102 = arith.constant 0 : index
    %c0_103 = arith.constant 0 : index
    %323 = vector.load %arg10[%c0_102, %c0_103] : memref<256x64xf32, #tpu.memory_space<vmem>>, vector<256x64xf32>
    %cst_104 = arith.constant dense<0.000000e+00> : vector<1x64xf32>
    %324 = tpu.matmul %322, %323, %cst_104 {dimension_numbers = #tpu.dot_dimension_numbers<[1], [0], [0], [1], [0, 0, 1, 1], [], []>} : vector<1x256xf32>, vector<256x64xf32>, vector<1x64xf32> -> vector<1x64xf32>
    %c0_105 = arith.constant 0 : index
    %c0_106 = arith.constant 0 : index
    %325 = vector.load %arg11[%c0_105, %c0_106] : memref<1x64xf32, #tpu.memory_space<vmem>>, vector<1x64xf32>
    %326 = arith.addf %324, %325 : vector<1x64xf32>
    %327 = math.tanh %326 : vector<1x64xf32>
    %c0_107 = arith.constant 0 : index
    %c0_108 = arith.constant 0 : index
    %328 = vector.load %arg12[%c0_107, %c0_108] : memref<1x64xf32, #tpu.memory_space<vmem>>, vector<1x64xf32>
    tpu.vector_store %arg12[%c0_107, %c0_108], %327 {strides = array<i32>} : memref<1x64xf32, #tpu.memory_space<vmem>>, vector<1x64xf32>,
    return
  }
  func.func @transform_0(%arg0: i32) -> (i32, i32) {
    %c0_i32 = arith.constant 0 : i32
    %c0_i32_0 = arith.constant 0 : i32
    %c0_i32_1 = arith.constant 0 : i32
    return %c0_i32, %c0_i32_0 : i32, i32
  }
  func.func @transform_1(%arg0: i32) -> (i32, i32) {
    %c0_i32 = arith.constant 0 : i32
    %c0_i32_0 = arith.constant 0 : i32
    %c0_i32_1 = arith.constant 0 : i32
    return %c0_i32, %c0_i32_0 : i32, i32
  }
  func.func @transform_2(%arg0: i32) -> (i32, i32) {
    %c0_i32 = arith.constant 0 : i32
    %c0_i32_0 = arith.constant 0 : i32
    %c0_i32_1 = arith.constant 0 : i32
    return %c0_i32, %c0_i32_0 : i32, i32
  }
  func.func @transform_3(%arg0: i32) -> (i32, i32) {
    %c0_i32 = arith.constant 0 : i32
    %c0_i32_0 = arith.constant 0 : i32
    %c0_i32_1 = arith.constant 0 : i32
    return %c0_i32, %c0_i32_0 : i32, i32
  }
  func.func @transform_4(%arg0: i32) -> (i32, i32) {
    %c0_i32 = arith.constant 0 : i32
    %c0_i32_0 = arith.constant 0 : i32
    %c0_i32_1 = arith.constant 0 : i32
    return %c0_i32, %c0_i32_0 : i32, i32
  }
  func.func @transform_5(%arg0: i32) -> (i32, i32) {
    %c0_i32 = arith.constant 0 : i32
    %c0_i32_0 = arith.constant 0 : i32
    %c0_i32_1 = arith.constant 0 : i32
    return %c0_i32, %c0_i32_0 : i32, i32
  }
  func.func @transform_6(%arg0: i32) -> (i32, i32, i32) {
    %c0_i32 = arith.constant 0 : i32
    %c0_i32_0 = arith.constant 0 : i32
    %c0_i32_1 = arith.constant 0 : i32
    %c0_i32_2 = arith.constant 0 : i32
    return %c0_i32, %c0_i32_0, %c0_i32_1 : i32, i32, i32
  }
  func.func @transform_7(%arg0: i32) -> (i32, i32, i32) {
    %c0_i32 = arith.constant 0 : i32
    %c0_i32_0 = arith.constant 0 : i32
    %c0_i32_1 = arith.constant 0 : i32
    %c0_i32_2 = arith.constant 0 : i32
    return %c0_i32, %c0_i32_0, %c0_i32_1 : i32, i32, i32
  }
  func.func @transform_8(%arg0: i32) -> (i32, i32, i32) {
    %c0_i32 = arith.constant 0 : i32
    %c0_i32_0 = arith.constant 0 : i32
    %c0_i32_1 = arith.constant 0 : i32
    %c0_i32_2 = arith.constant 0 : i32
    return %c0_i32, %c0_i32_0, %c0_i32_1 : i32, i32, i32
  }
  func.func @transform_9(%arg0: i32) -> (i32, i32) {
    %c0_i32 = arith.constant 0 : i32
    %c0_i32_0 = arith.constant 0 : i32
    %c0_i32_1 = arith.constant 0 : i32
    return %c0_i32, %c0_i32_0 : i32, i32
  }
  func.func @transform_10(%arg0: i32) -> (i32, i32) {
    %c0_i32 = arith.constant 0 : i32
    %c0_i32_0 = arith.constant 0 : i32
    %c0_i32_1 = arith.constant 0 : i32
    return %c0_i32, %c0_i32_0 : i32, i32
  }
  func.func @transform_11(%arg0: i32) -> (i32, i32) {
    %c0_i32 = arith.constant 0 : i32
    %c0_i32_0 = arith.constant 0 : i32
    %c0_i32_1 = arith.constant 0 : i32
    return %c0_i32, %c0_i32_0 : i32, i32
  }
}

</mosaic_0001>

<llo_original>
// kernel: cap_gat_attention_gru.1
$region0: #{cap_gat_attention_gru.1}
  #allocation0 [shape = 'u32[]', space=smem, size = 0x4, offset = 0x4, fixed_abs, tag = 'smem constant byte address 0x4 - core index']
  #allocation1 [shape = 'u32[144,128]{1,0:T(1,128)}', space=vmem, size = 0x12000, scoped, tag = 'internal scratch']
  %s0 = inlined_call_operand.vmem [shape: f32[12,256], index: 0, kind: input, shape index: {}]
  %s1 = inlined_call_operand.hbm [shape: f32[256,768], index: 1, kind: input, shape index: {}]
  %s2 = inlined_call_operand.hbm [shape: f32[256,768], index: 2, kind: input, shape index: {}]
  %s3 = inlined_call_operand.vmem [shape: f32[4,768], index: 3, kind: input, shape index: {}]
  %s4 = inlined_call_operand.vmem [shape: f32[12,12], index: 4, kind: input, shape index: {}]
  %s5 = inlined_call_operand.vmem [shape: f32[12,1], index: 5, kind: input, shape index: {}]
  %s6 = inlined_call_operand.vmem [shape: f32[2,32,64], index: 6, kind: input, shape index: {}]
  %s7 = inlined_call_operand.vmem [shape: f32[2,4,32], index: 7, kind: input, shape index: {}]
  %s8 = inlined_call_operand.vmem [shape: f32[2,32,256], index: 8, kind: input, shape index: {}]
  %s9 = inlined_call_operand.vmem [shape: f32[256,64], index: 9, kind: input, shape index: {}]
  %s10 = inlined_call_operand.vmem [shape: f32[1,64], index: 10, kind: input, shape index: {}]
  %s11 = inlined_call_operand.vmem [shape: f32[1,64], index: 11, kind: output, shape index: {}]
  %s12 = sld [smem:[#allocation0]]
  $region62: #{cap_gat_attention_gru.1} parent=0
    _
  %s14 = ssub.s32 1, %s12
  %s15 = scalar_select 0, %s14, %s12
  $region1: #{cap_gat_attention_gru.1} parent=0
    #allocation2 [shape = 'u8[786432]{0}', space=vmem, size = 0xc0000, scoped, tag = 'input window, operand 1, single buffered']
    #allocation3 [shape = 's32[1]{0}', space=sflag, size = 0x4, scoped, tag = 'scoped memory for cap_gat_attention_gru.1']
    #allocation4 [shape = 'u8[786432]{0}', space=vmem, size = 0xc0000, scoped, tag = 'input window, operand 2, single buffered']
    #allocation5 [shape = 's32[1]{0}', space=sflag, size = 0x4, scoped, tag = 'scoped memory for cap_gat_attention_gru.1']
    %16 = vsyncpa [#allocation3], 0
    %17 = vsyncpa [#allocation5], 0
    // Predicated region
    $region2: #{cap_gat_attention_gru.1} parent=1 // pred_check
      _
    $region3: #{cap_gat_attention_gru.1} parent=1 // pred_check_branch
      %19 = sbr.rel (0) target = $region5
    $region4: #{cap_gat_attention_gru.1} parent=1 // pred_region
      _
    $region5: #{cap_gat_attention_gru.1} parent=1 // pred_fallthru
      _
    // Predicated region
    $region6: #{cap_gat_attention_gru.1} parent=1 // pred_check
      _
    $region7: #{cap_gat_attention_gru.1} parent=1 // pred_check_branch
      %21 = sbr.rel (0) target = $region9
    $region8: #{cap_gat_attention_gru.1} parent=1 // pred_region
      %s23 = ssub.s32 24576, 24576
      %24 = vsyncadd [#allocation3], %s23
      %s25 = sshll.u32 [#allocation2], 4
      %s26 = int_to_ptr.vmem [resolvable:$true] %s25
      %31 = dma.hbm_to_vmem [thread:$0]  %s1, 24576, %s26, [#allocation3], 768, 768, 48
    $region9: #{cap_gat_attention_gru.1} parent=1 // pred_fallthru
      _
    // Predicated region
    $region10: #{cap_gat_attention_gru.1} parent=1 // pred_check
      _
    $region11: #{cap_gat_attention_gru.1} parent=1 // pred_check_branch
      %33 = sbr.rel (0) target = $region13
    $region12: #{cap_gat_attention_gru.1} parent=1 // pred_region
      %s35 = ssub.s32 24576, 24576
      %36 = vsyncadd [#allocation5], %s35
      %s37 = sshll.u32 [#allocation4], 4
      %s38 = int_to_ptr.vmem [resolvable:$true] %s37
      %43 = dma.hbm_to_vmem [thread:$0]  %s2, 24576, %s38, [#allocation5], 768, 768, 48
    $region13: #{cap_gat_attention_gru.1} parent=1 // pred_fallthru
      _
    // Predicated region
    $region14: #{cap_gat_attention_gru.1} parent=1 // pred_check
      _
    $region15: #{cap_gat_attention_gru.1} parent=1 // pred_check_branch
      %45 = sbr.rel (0) target = $region17
    $region16: #{cap_gat_attention_gru.1} parent=1 // pred_region
      _
    $region17: #{cap_gat_attention_gru.1} parent=1 // pred_fallthru
      _
    // Predicated region
    $region18: #{cap_gat_attention_gru.1} parent=1 // pred_check
      _
    $region19: #{cap_gat_attention_gru.1} parent=1 // pred_check_branch
      %47 = sbr.rel (0) target = $region21
    $region20: #{cap_gat_attention_gru.1} parent=1 // pred_region
      _
    $region21: #{cap_gat_attention_gru.1} parent=1 // pred_fallthru
      _
    // Predicated region
    $region22: #{cap_gat_attention_gru.1} parent=1 // pred_check
      _
    $region23: #{cap_gat_attention_gru.1} parent=1 // pred_check_branch
      %49 = sbr.rel (0) target = $region25
    $region24: #{cap_gat_attention_gru.1} parent=1 // pred_region
      _
    $region25: #{cap_gat_attention_gru.1} parent=1 // pred_fallthru
      _
    // Predicated region
    $region26: #{cap_gat_attention_gru.1} parent=1 // pred_check
      _
    $region27: #{cap_gat_attention_gru.1} parent=1 // pred_check_branch
      %51 = sbr.rel (0) target = $region29
    $region28: #{cap_gat_attention_gru.1} parent=1 // pred_region
      _
    $region29: #{cap_gat_attention_gru.1} parent=1 // pred_fallthru
      _
    // Predicated region
    $region30: #{cap_gat_attention_gru.1} parent=1 // pred_check
      _
    $region31: #{cap_gat_attention_gru.1} parent=1 // pred_check_branch
      %53 = sbr.rel (0) target = $region33
    $region32: #{cap_gat_attention_gru.1} parent=1 // pred_region
      _
    $region33: #{cap_gat_attention_gru.1} parent=1 // pred_fallthru
      _
    // Predicated region
    $region34: #{cap_gat_attention_gru.1} parent=1 // pred_check
      _
    $region35: #{cap_gat_attention_gru.1} parent=1 // pred_check_branch
      %55 = sbr.rel (0) target = $region37
    $region36: #{cap_gat_attention_gru.1} parent=1 // pred_region
      _
    $region37: #{cap_gat_attention_gru.1} parent=1 // pred_fallthru
      _
    // Predicated region
    $region38: #{cap_gat_attention_gru.1} parent=1 // pred_check
      _
    $region39: #{cap_gat_attention_gru.1} parent=1 // pred_check_branch
      %57 = sbr.rel (0) target = $region41
    $region40: #{cap_gat_attention_gru.1} parent=1 // pred_region
      _
    $region41: #{cap_gat_attention_gru.1} parent=1 // pred_fallthru
      _
    // Predicated region
    $region42: #{cap_gat_attention_gru.1} parent=1 // pred_check
      _
    $region43: #{cap_gat_attention_gru.1} parent=1 // pred_check_branch
      %59 = sbr.rel (0) target = $region45
    $region44: #{cap_gat_attention_gru.1} parent=1 // pred_region
      _
    $region45: #{cap_gat_attention_gru.1} parent=1 // pred_fallthru
      _
    // Predicated region
    $region46: #{cap_gat_attention_gru.1} parent=1 // pred_check
      _
    $region47: #{cap_gat_attention_gru.1} parent=1 // pred_check_branch
      %61 = sbr.rel (0) target = $region49
    $region48: #{cap_gat_attention_gru.1} parent=1 // pred_region
      %62 = dma.done [#allocation3], 24576
    $region49: #{cap_gat_attention_gru.1} parent=1 // pred_fallthru
      _
    // Predicated region
    $region50: #{cap_gat_attention_gru.1} parent=1 // pred_check
      _
    $region51: #{cap_gat_attention_gru.1} parent=1 // pred_check_branch
      %64 = sbr.rel (0) target = $region53
    $region52: #{cap_gat_attention_gru.1} parent=1 // pred_region
      %65 = dma.done [#allocation5], 24576
    $region53: #{cap_gat_attention_gru.1} parent=1 // pred_fallthru
      _
    %v66 = vld [vmem:[%s0] sm:$0xff]
    %v67 = vld [vmem:[%s0 + $0x8] sm:$0xff]
    %v68 = vld [vmem:[%s0 + $0x10] sm:$0xf]
    %v69 = vld [vmem:[%s0 + $0x18] sm:$0xf]
    %vm70 = vcmp.ne.f32.partialorder %v66, %v66
    %vm71 = vcmp.ne.f32.partialorder %v67, %v67
    %vm72 = vcmp.ne.f32.partialorder %v68, %v68
    %vm73 = vcmp.ne.f32.partialorder %v69, %v69
    %v74 = vsel %vm70, 0.0, %v66
    %v75 = vsel %vm71, 0.0, %v67
    %v76 = vsel %vm72, 0.0, %v68
    %v77 = vsel %vm73, 0.0, %v69
    %vm78 = vcmp.eq.f32.partialorder %v74, inf
    %vm79 = vcmp.eq.f32.partialorder %v75, inf
    %vm80 = vcmp.eq.f32.partialorder %v76, inf
    %vm81 = vcmp.eq.f32.partialorder %v77, inf
    %v82 = vsel %vm78, 1.0, %v74
    %v83 = vsel %vm79, 1.0, %v75
    %v84 = vsel %vm80, 1.0, %v76
    %v85 = vsel %vm81, 1.0, %v77
    %vm86 = vcmp.eq.f32.partialorder %v82, -inf
    %vm87 = vcmp.eq.f32.partialorder %v83, -inf
    %vm88 = vcmp.eq.f32.partialorder %v84, -inf
    %vm89 = vcmp.eq.f32.partialorder %v85, -inf
    %v90 = vsel %vm86, -3.4028235e+38, %v82
    %v91 = vsel %vm87, -3.4028235e+38, %v83
    %v92 = vsel %vm88, -3.4028235e+38, %v84
    %v93 = vsel %vm89, -3.4028235e+38, %v85
    %v94 = vld [vmem:[%s3] sm:$0xff]
    %v95 = vld [vmem:[%s3 + $0x8] sm:$0xff]
    %v96 = vld [vmem:[%s3 + $0x10] sm:$0xff]
    %v97 = vld [vmem:[#allocation2] sm:$0xff]
    %v98 = vld [vmem:[#allocation2 + $0x8] sm:$0xff]
    %v99 = vld [vmem:[#allocation2 + $0x10] sm:$0xff]
    %v100 = vld [vmem:[#allocation2 + $0x18] sm:$0xff]
    %v101 = vld [vmem:[#allocation2 + $0x20] sm:$0xff]
    %v102 = vld [vmem:[#allocation2 + $0x28] sm:$0xff]
    %v103 = vld [vmem:[#allocation2 + $0x30] sm:$0xff]
    %v104 = vld [vmem:[#allocation2 + $0x38] sm:$0xff]
    %v105 = vld [vmem:[#allocation2 + $0x40] sm:$0xff]
    %v106 = vld [vmem:[#allocation2 + $0x48] sm:$0xff]
    %v107 = vld [vmem:[#allocation2 + $0x50] sm:$0xff]
    %v108 = vld [vmem:[#allocation2 + $0x58] sm:$0xff]
    %v109 = vld [vmem:[#allocation2 + $0x60] sm:$0xff]
    %v110 = vld [vmem:[#allocation2 + $0x68] sm:$0xff]
    %v111 = vld [vmem:[#allocation2 + $0x70] sm:$0xff]
    %v112 = vld [vmem:[#allocation2 + $0x78] sm:$0xff]
    %v113 = vld [vmem:[#allocation2 + $0x80] sm:$0xff]
    %v114 = vld [vmem:[#allocation2 + $0x88] sm:$0xff]
    %v115 = vld [vmem:[#allocation2 + $0x90] sm:$0xff]
    %v116 = vld [vmem:[#allocation2 + $0x98] sm:$0xff]
    %v117 = vld [vmem:[#allocation2 + $0xa0] sm:$0xff]
    %v118 = vld [vmem:[#allocation2 + $0xa8] sm:$0xff]
    %v119 = vld [vmem:[#allocation2 + $0xb0] sm:$0xff]
    %v120 = vld [vmem:[#allocation2 + $0xb8] sm:$0xff]
    %v121 = vld [vmem:[#allocation2 + $0xc0] sm:$0xff]
    %v122 = vld [vmem:[#allocation2 + $0xc8] sm:$0xff]
    %v123 = vld [vmem:[#allocation2 + $0xd0] sm:$0xff]
    %v124 = vld [vmem:[#allocation2 + $0xd8] sm:$0xff]
    %v125 = vld [vmem:[#allocation2 + $0xe0] sm:$0xff]
    %v126 = vld [vmem:[#allocation2 + $0xe8] sm:$0xff]
    %v127 = vld [vmem:[#allocation2 + $0xf0] sm:$0xff]
    %v128 = vld [vmem:[#allocation2 + $0xf8] sm:$0xff]
    %v129 = vld [vmem:[#allocation2 + $0x100] sm:$0xff]
    %v130 = vld [vmem:[#allocation2 + $0x108] sm:$0xff]
    %v131 = vld [vmem:[#allocation2 + $0x110] sm:$0xff]
    %v132 = vld [vmem:[#allocation2 + $0x118] sm:$0xff]
    %v133 = vld [vmem:[#allocation2 + $0x120] sm:$0xff]
    %v134 = vld [vmem:[#allocation2 + $0x128] sm:$0xff]
    %v135 = vld [vmem:[#allocation2 + $0x130] sm:$0xff]
    %v136 = vld [vmem:[#allocation2 + $0x138] sm:$0xff]
    %v137 = vld [vmem:[#allocation2 + $0x140] sm:$0xff]
    %v138 = vld [vmem:[#allocation2 + $0x148] sm:$0xff]
    %v139 = vld [vmem:[#allocation2 + $0x150] sm:$0xff]
    %v140 = vld [vmem:[#allocation2 + $0x158] sm:$0xff]
    %v141 = vld [vmem:[#allocation2 + $0x160] sm:$0xff]
    %v142 = vld [vmem:[#allocation2 + $0x168] sm:$0xff]
    %v143 = vld [vmem:[#allocation2 + $0x170] sm:$0xff]
    %v144 = vld [vmem:[#allocation2 + $0x178] sm:$0xff]
    %v145 = vld [vmem:[#allocation2 + $0x180] sm:$0xff]
    %v146 = vld [vmem:[#allocation2 + $0x188] sm:$0xff]
    %v147 = vld [vmem:[#allocation2 + $0x190] sm:$0xff]
    %v148 = vld [vmem:[#allocation2 + $0x198] sm:$0xff]
    %v149 = vld [vmem:[#allocation2 + $0x1a0] sm:$0xff]
    %v150 = vld [vmem:[#allocation2 + $0x1a8] sm:$0xff]
    %v151 = vld [vmem:[#allocation2 + $0x1b0] sm:$0xff]
    %v152 = vld [vmem:[#allocation2 + $0x1b8] sm:$0xff]
    %v153 = vld [vmem:[#allocation2 + $0x1c0] sm:$0xff]
    %v154 = vld [vmem:[#allocation2 + $0x1c8] sm:$0xff]
    %v155 = vld [vmem:[#allocation2 + $0x1d0] sm:$0xff]
    %v156 = vld [vmem:[#allocation2 + $0x1d8] sm:$0xff]
    %v157 = vld [vmem:[#allocation2 + $0x1e0] sm:$0xff]
    %v158 = vld [vmem:[#allocation2 + $0x1e8] sm:$0xff]
    %v159 = vld [vmem:[#allocation2 + $0x1f0] sm:$0xff]
    %v160 = vld [vmem:[#allocation2 + $0x1f8] sm:$0xff]
    %v161 = vld [vmem:[#allocation2 + $0x200] sm:$0xff]
    %v162 = vld [vmem:[#allocation2 + $0x208] sm:$0xff]
    %v163 = vld [vmem:[#allocation2 + $0x210] sm:$0xff]
    %v164 = vld [vmem:[#allocation2 + $0x218] sm:$0xff]
    %v165 = vld [vmem:[#allocation2 + $0x220] sm:$0xff]
    %v166 = vld [vmem:[#allocation2 + $0x228] sm:$0xff]
    %v167 = vld [vmem:[#allocation2 + $0x230] sm:$0xff]
    %v168 = vld [vmem:[#allocation2 + $0x238] sm:$0xff]
    %v169 = vld [vmem:[#allocation2 + $0x240] sm:$0xff]
    %v170 = vld [vmem:[#allocation2 + $0x248] sm:$0xff]
    %v171 = vld [vmem:[#allocation2 + $0x250] sm:$0xff]
    %v172 = vld [vmem:[#allocation2 + $0x258] sm:$0xff]
    %v173 = vld [vmem:[#allocation2 + $0x260] sm:$0xff]
    %v174 = vld [vmem:[#allocation2 + $0x268] sm:$0xff]
    %v175 = vld [vmem:[#allocation2 + $0x270] sm:$0xff]
    %v176 = vld [vmem:[#allocation2 + $0x278] sm:$0xff]
    %v177 = vld [vmem:[#allocation2 + $0x280] sm:$0xff]
    %v178 = vld [vmem:[#allocation2 + $0x288] sm:$0xff]
    %v179 = vld [vmem:[#allocation2 + $0x290] sm:$0xff]
    %v180 = vld [vmem:[#allocation2 + $0x298] sm:$0xff]
    %v181 = vld [vmem:[#allocation2 + $0x2a0] sm:$0xff]
    %v182 = vld [vmem:[#allocation2 + $0x2a8] sm:$0xff]
    %v183 = vld [vmem:[#allocation2 + $0x2b0] sm:$0xff]
    %v184 = vld [vmem:[#allocation2 + $0x2b8] sm:$0xff]
    %v185 = vld [vmem:[#allocation2 + $0x2c0] sm:$0xff]
    %v186 = vld [vmem:[#allocation2 + $0x2c8] sm:$0xff]
    %v187 = vld [vmem:[#allocation2 + $0x2d0] sm:$0xff]
    %v188 = vld [vmem:[#allocation2 + $0x2d8] sm:$0xff]
    %v189 = vld [vmem:[#allocation2 + $0x2e0] sm:$0xff]
    %v190 = vld [vmem:[#allocation2 + $0x2e8] sm:$0xff]
    %v191 = vld [vmem:[#allocation2 + $0x2f0] sm:$0xff]
    %v192 = vld [vmem:[#allocation2 + $0x2f8] sm:$0xff]
    %v193 = vld [vmem:[#allocation2 + $0x300] sm:$0xff]
    %v194 = vld [vmem:[#allocation2 + $0x308] sm:$0xff]
    %v195 = vld [vmem:[#allocation2 + $0x310] sm:$0xff]
    %v196 = vld [vmem:[#allocation2 + $0x318] sm:$0xff]
    %v197 = vld [vmem:[#allocation2 + $0x320] sm:$0xff]
    %v198 = vld [vmem:[#allocation2 + $0x328] sm:$0xff]
    %v199 = vld [vmem:[#allocation2 + $0x330] sm:$0xff]
    %v200 = vld [vmem:[#allocation2 + $0x338] sm:$0xff]
    %v201 = vld [vmem:[#allocation2 + $0x340] sm:$0xff]
    %v202 = vld [vmem:[#allocation2 + $0x348] sm:$0xff]
    %v203 = vld [vmem:[#allocation2 + $0x350] sm:$0xff]
    %v204 = vld [vmem:[#allocation2 + $0x358] sm:$0xff]
    %v205 = vld [vmem:[#allocation2 + $0x360] sm:$0xff]
    %v206 = vld [vmem:[#allocation2 + $0x368] sm:$0xff]
    %v207 = vld [vmem:[#allocation2 + $0x370] sm:$0xff]
    %v208 = vld [vmem:[#allocation2 + $0x378] sm:$0xff]
    %v209 = vld [vmem:[#allocation2 + $0x380] sm:$0xff]
    %v210 = vld [vmem:[#allocation2 + $0x388] sm:$0xff]
    %v211 = vld [vmem:[#allocation2 + $0x390] sm:$0xff]
    %v212 = vld [vmem:[#allocation2 + $0x398] sm:$0xff]
    %v213 = vld [vmem:[#allocation2 + $0x3a0] sm:$0xff]
    %v214 = vld [vmem:[#allocation2 + $0x3a8] sm:$0xff]
    %v215 = vld [vmem:[#allocation2 + $0x3b0] sm:$0xff]
    %v216 = vld [vmem:[#allocation2 + $0x3b8] sm:$0xff]
    %v217 = vld [vmem:[#allocation2 + $0x3c0] sm:$0xff]
    %v218 = vld [vmem:[#allocation2 + $0x3c8] sm:$0xff]
    %v219 = vld [vmem:[#allocation2 + $0x3d0] sm:$0xff]
    %v220 = vld [vmem:[#allocation2 + $0x3d8] sm:$0xff]
    %v221 = vld [vmem:[#allocation2 + $0x3e0] sm:$0xff]
    %v222 = vld [vmem:[#allocation2 + $0x3e8] sm:$0xff]
    %v223 = vld [vmem:[#allocation2 + $0x3f0] sm:$0xff]
    %v224 = vld [vmem:[#allocation2 + $0x3f8] sm:$0xff]
    %v225 = vld [vmem:[#allocation2 + $0x400] sm:$0xff]
    %v226 = vld [vmem:[#allocation2 + $0x408] sm:$0xff]
    %v227 = vld [vmem:[#allocation2 + $0x410] sm:$0xff]
    %v228 = vld [vmem:[#allocation2 + $0x418] sm:$0xff]
    %v229 = vld [vmem:[#allocation2 + $0x420] sm:$0xff]
    %v230 = vld [vmem:[#allocation2 + $0x428] sm:$0xff]
    %v231 = vld [vmem:[#allocation2 + $0x430] sm:$0xff]
    %v232 = vld [vmem:[#allocation2 + $0x438] sm:$0xff]
    %v233 = vld [vmem:[#allocation2 + $0x440] sm:$0xff]
    %v234 = vld [vmem:[#allocation2 + $0x448] sm:$0xff]
    %v235 = vld [vmem:[#allocation2 + $0x450] sm:$0xff]
    %v236 = vld [vmem:[#allocation2 + $0x458] sm:$0xff]
    %v237 = vld [vmem:[#allocation2 + $0x460] sm:$0xff]
    %v238 = vld [vmem:[#allocation2 + $0x468] sm:$0xff]
    %v239 = vld [vmem:[#allocation2 + $0x470] sm:$0xff]
    %v240 = vld [vmem:[#allocation2 + $0x478] sm:$0xff]
    %v241 = vld [vmem:[#allocation2 + $0x480] sm:$0xff]
    %v242 = vld [vmem:[#allocation2 + $0x488] sm:$0xff]
    %v243 = vld [vmem:[#allocation2 + $0x490] sm:$0xff]
    %v244 = vld [vmem:[#allocation2 + $0x498] sm:$0xff]
    %v245 = vld [vmem:[#allocation2 + $0x4a0] sm:$0xff]
    %v246 = vld [vmem:[#allocation2 + $0x4a8] sm:$0xff]
    %v247 = vld [vmem:[#allocation2 + $0x4b0] sm:$0xff]
    %v248 = vld [vmem:[#allocation2 + $0x4b8] sm:$0xff]
    %v249 = vld [vmem:[#allocation2 + $0x4c0] sm:$0xff]
    %v250 = vld [vmem:[#allocation2 + $0x4c8] sm:$0xff]
    %v251 = vld [vmem:[#allocation2 + $0x4d0] sm:$0xff]
    %v252 = vld [vmem:[#allocation2 + $0x4d8] sm:$0xff]
    %v253 = vld [vmem:[#allocation2 + $0x4e0] sm:$0xff]
    %v254 = vld [vmem:[#allocation2 + $0x4e8] sm:$0xff]
    %v255 = vld [vmem:[#allocation2 + $0x4f0] sm:$0xff]
    %v256 = vld [vmem:[#allocation2 + $0x4f8] sm:$0xff]
    %v257 = vld [vmem:[#allocation2 + $0x500] sm:$0xff]
    %v258 = vld [vmem:[#allocation2 + $0x508] sm:$0xff]
    %v259 = vld [vmem:[#allocation2 + $0x510] sm:$0xff]
    %v260 = vld [vmem:[#allocation2 + $0x518] sm:$0xff]
    %v261 = vld [vmem:[#allocation2 + $0x520] sm:$0xff]
    %v262 = vld [vmem:[#allocation2 + $0x528] sm:$0xff]
    %v263 = vld [vmem:[#allocation2 + $0x530] sm:$0xff]
    %v264 = vld [vmem:[#allocation2 + $0x538] sm:$0xff]
    %v265 = vld [vmem:[#allocation2 + $0x540] sm:$0xff]
    %v266 = vld [vmem:[#allocation2 + $0x548] sm:$0xff]
    %v267 = vld [vmem:[#allocation2 + $0x550] sm:$0xff]
    %v268 = vld [vmem:[#allocation2 + $0x558] sm:$0xff]
    %v269 = vld [vmem:[#allocation2 + $0x560] sm:$0xff]
    %v270 = vld [vmem:[#allocation2 + $0x568] sm:$0xff]
    %v271 = vld [vmem:[#allocation2 + $0x570] sm:$0xff]
    %v272 = vld [vmem:[#allocation2 + $0x578] sm:$0xff]
    %v273 = vld [vmem:[#allocation2 + $0x580] sm:$0xff]
    %v274 = vld [vmem:[#allocation2 + $0x588] sm:$0xff]
    %v275 = vld [vmem:[#allocation2 + $0x590] sm:$0xff]
    %v276 = vld [vmem:[#allocation2 + $0x598] sm:$0xff]
    %v277 = vld [vmem:[#allocation2 + $0x5a0] sm:$0xff]
    %v278 = vld [vmem:[#allocation2 + $0x5a8] sm:$0xff]
    %v279 = vld [vmem:[#allocation2 + $0x5b0] sm:$0xff]
    %v280 = vld [vmem:[#allocation2 + $0x5b8] sm:$0xff]
    %v281 = vld [vmem:[#allocation2 + $0x5c0] sm:$0xff]
    %v282 = vld [vmem:[#allocation2 + $0x5c8] sm:$0xff]
    %v283 = vld [vmem:[#allocation2 + $0x5d0] sm:$0xff]
    %v284 = vld [vmem:[#allocation2 + $0x5d8] sm:$0xff]
    %v285 = vld [vmem:[#allocation2 + $0x5e0] sm:$0xff]
    %v286 = vld [vmem:[#allocation2 + $0x5e8] sm:$0xff]
    %v287 = vld [vmem:[#allocation2 + $0x5f0] sm:$0xff]
    %v288 = vld [vmem:[#allocation2 + $0x5f8] sm:$0xff]
    %v292 = vlaneseq
    %v293 = vshrl.u32 %v292, 7
    %v294 = vsub.s32 0, %v293
    %v295 = vrot.slane %v94, %v294
    %v296 = vlaneseq
    %v297 = vshrl.u32 %v296, 7
    %v298 = vsub.s32 4, %v297
    %v299 = vrot.slane %v94, %v298
    %v300 = vlaneseq
    %v301 = vshrl.u32 %v300, 7
    %v302 = vsub.s32 0, %v301
    %v303 = vrot.slane %v95, %v302
    %v304 = vlaneseq
    %v305 = vshrl.u32 %v304, 7
    %v306 = vsub.s32 4, %v305
    %v307 = vrot.slane %v95, %v306
    %v308 = vlaneseq
    %v309 = vshrl.u32 %v308, 7
    %v310 = vsub.s32 0, %v309
    %v311 = vrot.slane %v96, %v310
    %v312 = vlaneseq
    %v313 = vshrl.u32 %v312, 7
    %v314 = vsub.s32 4, %v313
    %v315 = vrot.slane %v96, %v314
    %v322 = vlaneseq
    %v323 = vshrl.u32 %v322, 7
    %v324 = vsub.s32 0, %v323
    %v325 = vrot.slane %v295, %v324
    %v326 = vlaneseq
    %v327 = vshrl.u32 %v326, 7
    %v328 = vsub.s32 0, %v327
    %v329 = vrot.slane %v299, %v328
    %v330 = vlaneseq
    %v331 = vshrl.u32 %v330, 7
    %v332 = vsub.s32 0, %v331
    %v333 = vrot.slane %v303, %v332
    %v334 = vlaneseq
    %v335 = vshrl.u32 %v334, 7
    %v336 = vsub.s32 0, %v335
    %v337 = vrot.slane %v307, %v336
    %v338 = vlaneseq
    %v339 = vshrl.u32 %v338, 7
    %v340 = vsub.s32 0, %v339
    %v341 = vrot.slane %v311, %v340
    %v342 = vlaneseq
    %v343 = vshrl.u32 %v342, 7
    %v344 = vsub.s32 0, %v343
    %v345 = vrot.slane %v315, %v344
    %346 = vmatprep.subr.mxu0 %v98
    %347 = vmatpush1.msra.mxu0 %v97
    %348 = vmatprep.subr.mxu0 %v104
    %349 = vmatpush1.msra.mxu0 %v103
    %350 = vmatprep.subr.mxu0 %v110
    %351 = vmatpush1.msra.mxu0 %v109
    %352 = vmatprep.subr.mxu0 %v116
    %353 = vmatpush1.msra.mxu0 %v115
    %354 = vmatprep.subr.mxu0 %v122
    %355 = vmatpush1.msra.mxu0 %v121
    %356 = vmatprep.subr.mxu0 %v128
    %357 = vmatpush1.msra.mxu0 %v127
    %358 = vmatprep.subr.mxu0 %v134
    %359 = vmatpush1.msra.mxu0 %v133
    %360 = vmatprep.subr.mxu0 %v140
    %361 = vmatpush1.msra.mxu0 %v139
    %362 = vmatprep.subr.mxu0 %v146
    %363 = vmatpush1.msra.mxu0 %v145
    %364 = vmatprep.subr.mxu0 %v152
    %365 = vmatpush1.msra.mxu0 %v151
    %366 = vmatprep.subr.mxu0 %v158
    %367 = vmatpush1.msra.mxu0 %v157
    %368 = vmatprep.subr.mxu0 %v164
    %369 = vmatpush1.msra.mxu0 %v163
    %370 = vmatprep.subr.mxu0 %v170
    %371 = vmatpush1.msra.mxu0 %v169
    %372 = vmatprep.subr.mxu0 %v176
    %373 = vmatpush1.msra.mxu0 %v175
    %374 = vmatprep.subr.mxu0 %v182
    %375 = vmatpush1.msra.mxu0 %v181
    %376 = vmatprep.subr.mxu0 %v188
    %377 = vmatpush1.msra.mxu0 %v187
    %378 = vmatprep.subr.mxu0 %v194
    %379 = vmatpush1.msra.mxu0 %v193
    %380 = vmatprep.subr.mxu0 %v200
    %381 = vmatpush1.msra.mxu0 %v199
    %382 = vmatprep.subr.mxu0 %v206
    %383 = vmatpush1.msra.mxu0 %v205
    %384 = vmatprep.subr.mxu0 %v212
    %385 = vmatpush1.msra.mxu0 %v211
    %386 = vmatprep.subr.mxu0 %v218
    %387 = vmatpush1.msra.mxu0 %v217
    %388 = vmatprep.subr.mxu0 %v224
    %389 = vmatpush1.msra.mxu0 %v223
    %390 = vmatprep.subr.mxu0 %v230
    %391 = vmatpush1.msra.mxu0 %v229
    %392 = vmatprep.subr.mxu0 %v236
    %393 = vmatpush1.msra.mxu0 %v235
    %394 = vmatprep.subr.mxu0 %v242
    %395 = vmatpush1.msra.mxu0 %v241
    %396 = vmatprep.subr.mxu0 %v248
    %397 = vmatpush1.msra.mxu0 %v247
    %398 = vmatprep.subr.mxu0 %v254
    %399 = vmatpush1.msra.mxu0 %v253
    %400 = vmatprep.subr.mxu0 %v260
    %401 = vmatpush1.msra.mxu0 %v259
    %402 = vmatprep.subr.mxu0 %v266
    %403 = vmatpush1.msra.mxu0 %v265
    %404 = vmatprep.subr.mxu0 %v272
    %405 = vmatpush1.msra.mxu0 %v271
    %406 = vmatprep.subr.mxu0 %v278
    %407 = vmatpush1.msra.mxu0 %v277
    %408 = vmatprep.subr.mxu0 %v284
    %409 = vmatpush1.msra.mxu0 %v283
    %410 = vmatprep.mubr.f32.mxu0 %v91
    %411 = vmatmul.mubr.f32.gmra.mrb[0].mxu0 %v90
    %v412 = vpop.f32.mrb[0].mxu0
    %v413 = vadd.f32 %v325, %v412
    %v414 = vpop.f32.mrb[0].mxu0
    %v415 = vadd.f32 %v329, %v414
    %416 = vmatprep.mubr.f32.mxu0 %v93
    %417 = vmatmul.mubr.f32.gmra.mrb[0].mxu0 %v92
    %v418 = vpop.f32.mrb[0].mxu0
    %v419 = vadd.f32 %v325, %v418
    %v420 = vpop.f32.mrb[0].mxu0
    %v421 = vadd.f32 %v329, %v420
    %422 = vdwg.mxu0
    %423 = vmatprep.subr.mxu0 %v100
    %424 = vmatpush1.msra.mxu0 %v99
    %425 = vmatprep.subr.mxu0 %v106
    %426 = vmatpush1.msra.mxu0 %v105
    %427 = vmatprep.subr.mxu0 %v112
    %428 = vmatpush1.msra.mxu0 %v111
    %429 = vmatprep.subr.mxu0 %v118
    %430 = vmatpush1.msra.mxu0 %v117
    %431 = vmatprep.subr.mxu0 %v124
    %432 = vmatpush1.msra.mxu0 %v123
    %433 = vmatprep.subr.mxu0 %v130
    %434 = vmatpush1.msra.mxu0 %v129
    %435 = vmatprep.subr.mxu0 %v136
    %436 = vmatpush1.msra.mxu0 %v135
    %437 = vmatprep.subr.mxu0 %v142
    %438 = vmatpush1.msra.mxu0 %v141
    %439 = vmatprep.subr.mxu0 %v148
    %440 = vmatpush1.msra.mxu0 %v147
    %441 = vmatprep.subr.mxu0 %v154
    %442 = vmatpush1.msra.mxu0 %v153
    %443 = vmatprep.subr.mxu0 %v160
    %444 = vmatpush1.msra.mxu0 %v159
    %445 = vmatprep.subr.mxu0 %v166
    %446 = vmatpush1.msra.mxu0 %v165
    %447 = vmatprep.subr.mxu0 %v172
    %448 = vmatpush1.msra.mxu0 %v171
    %449 = vmatprep.subr.mxu0 %v178
    %450 = vmatpush1.msra.mxu0 %v177
    %451 = vmatprep.subr.mxu0 %v184
    %452 = vmatpush1.msra.mxu0 %v183
    %453 = vmatprep.subr.mxu0 %v190
    %454 = vmatpush1.msra.mxu0 %v189
    %455 = vmatprep.subr.mxu0 %v196
    %456 = vmatpush1.msra.mxu0 %v195
    %457 = vmatprep.subr.mxu0 %v202
    %458 = vmatpush1.msra.mxu0 %v201
    %459 = vmatprep.subr.mxu0 %v208
    %460 = vmatpush1.msra.mxu0 %v207
    %461 = vmatprep.subr.mxu0 %v214
    %462 = vmatpush1.msra.mxu0 %v213
    %463 = vmatprep.subr.mxu0 %v220
    %464 = vmatpush1.msra.mxu0 %v219
    %465 = vmatprep.subr.mxu0 %v226
    %466 = vmatpush1.msra.mxu0 %v225
    %467 = vmatprep.subr.mxu0 %v232
    %468 = vmatpush1.msra.mxu0 %v231
    %469 = vmatprep.subr.mxu0 %v238
    %470 = vmatpush1.msra.mxu0 %v237
    %471 = vmatprep.subr.mxu0 %v244
    %472 = vmatpush1.msra.mxu0 %v243
    %473 = vmatprep.subr.mxu0 %v250
    %474 = vmatpush1.msra.mxu0 %v249
    %475 = vmatprep.subr.mxu0 %v256
    %476 = vmatpush1.msra.mxu0 %v255
    %477 = vmatprep.subr.mxu0 %v262
    %478 = vmatpush1.msra.mxu0 %v261
    %479 = vmatprep.subr.mxu0 %v268
    %480 = vmatpush1.msra.mxu0 %v267
    %481 = vmatprep.subr.mxu0 %v274
    %482 = vmatpush1.msra.mxu0 %v273
    %483 = vmatprep.subr.mxu0 %v280
    %484 = vmatpush1.msra.mxu0 %v279
    %485 = vmatprep.subr.mxu0 %v286
    %486 = vmatpush1.msra.mxu0 %v285
    %487 = vmatprep.mubr.f32.mxu0 %v91
    %488 = vmatmul.mubr.f32.gmra.mrb[0].mxu0 %v90
    %v489 = vpop.f32.mrb[0].mxu0
    %v490 = vadd.f32 %v333, %v489
    %v491 = vpop.f32.mrb[0].mxu0
    %v492 = vadd.f32 %v337, %v491
    %493 = vmatprep.mubr.f32.mxu0 %v93
    %494 = vmatmul.mubr.f32.gmra.mrb[0].mxu0 %v92
    %v495 = vpop.f32.mrb[0].mxu0
    %v496 = vadd.f32 %v333, %v495
    %v497 = vpop.f32.mrb[0].mxu0
    %v498 = vadd.f32 %v337, %v497
    %499 = vdwg.mxu0
    %500 = vmatprep.subr.mxu0 %v102
    %501 = vmatpush1.msra.mxu0 %v101
    %502 = vmatprep.subr.mxu0 %v108
    %503 = vmatpush1.msra.mxu0 %v107
    %504 = vmatprep.subr.mxu0 %v114
    %505 = vmatpush1.msra.mxu0 %v113
    %506 = vmatprep.subr.mxu0 %v120
    %507 = vmatpush1.msra.mxu0 %v119
    %508 = vmatprep.subr.mxu0 %v126
    %509 = vmatpush1.msra.mxu0 %v125
    %510 = vmatprep.subr.mxu0 %v132
    %511 = vmatpush1.msra.mxu0 %v131
    %512 = vmatprep.subr.mxu0 %v138
    %513 = vmatpush1.msra.mxu0 %v137
    %514 = vmatprep.subr.mxu0 %v144
    %515 = vmatpush1.msra.mxu0 %v143
    %516 = vmatprep.subr.mxu0 %v150
    %517 = vmatpush1.msra.mxu0 %v149
    %518 = vmatprep.subr.mxu0 %v156
    %519 = vmatpush1.msra.mxu0 %v155
    %520 = vmatprep.subr.mxu0 %v162
    %521 = vmatpush1.msra.mxu0 %v161
    %522 = vmatprep.subr.mxu0 %v168
    %523 = vmatpush1.msra.mxu0 %v167
    %524 = vmatprep.subr.mxu0 %v174
    %525 = vmatpush1.msra.mxu0 %v173
    %526 = vmatprep.subr.mxu0 %v180
    %527 = vmatpush1.msra.mxu0 %v179
    %528 = vmatprep.subr.mxu0 %v186
    %529 = vmatpush1.msra.mxu0 %v185
    %530 = vmatprep.subr.mxu0 %v192
    %531 = vmatpush1.msra.mxu0 %v191
    %532 = vmatprep.subr.mxu0 %v198
    %533 = vmatpush1.msra.mxu0 %v197
    %534 = vmatprep.subr.mxu0 %v204
    %535 = vmatpush1.msra.mxu0 %v203
    %536 = vmatprep.subr.mxu0 %v210
    %537 = vmatpush1.msra.mxu0 %v209
    %538 = vmatprep.subr.mxu0 %v216
    %539 = vmatpush1.msra.mxu0 %v215
    %540 = vmatprep.subr.mxu0 %v222
    %541 = vmatpush1.msra.mxu0 %v221
    %542 = vmatprep.subr.mxu0 %v228
    %543 = vmatpush1.msra.mxu0 %v227
    %544 = vmatprep.subr.mxu0 %v234
    %545 = vmatpush1.msra.mxu0 %v233
    %546 = vmatprep.subr.mxu0 %v240
    %547 = vmatpush1.msra.mxu0 %v239
    %548 = vmatprep.subr.mxu0 %v246
    %549 = vmatpush1.msra.mxu0 %v245
    %550 = vmatprep.subr.mxu0 %v252
    %551 = vmatpush1.msra.mxu0 %v251
    %552 = vmatprep.subr.mxu0 %v258
    %553 = vmatpush1.msra.mxu0 %v257
    %554 = vmatprep.subr.mxu0 %v264
    %555 = vmatpush1.msra.mxu0 %v263
    %556 = vmatprep.subr.mxu0 %v270
    %557 = vmatpush1.msra.mxu0 %v269
    %558 = vmatprep.subr.mxu0 %v276
    %559 = vmatpush1.msra.mxu0 %v275
    %560 = vmatprep.subr.mxu0 %v282
    %561 = vmatpush1.msra.mxu0 %v281
    %562 = vmatprep.subr.mxu0 %v288
    %563 = vmatpush1.msra.mxu0 %v287
    %564 = vmatprep.mubr.f32.mxu0 %v91
    %565 = vmatmul.mubr.f32.gmra.mrb[0].mxu0 %v90
    %v566 = vpop.f32.mrb[0].mxu0
    %v567 = vadd.f32 %v341, %v566
    %v568 = vpop.f32.mrb[0].mxu0
    %v569 = vadd.f32 %v345, %v568
    %570 = vmatprep.mubr.f32.mxu0 %v93
    %571 = vmatmul.mubr.f32.gmra.mrb[0].mxu0 %v92
    %v572 = vpop.f32.mrb[0].mxu0
    %v573 = vadd.f32 %v341, %v572
    %v574 = vpop.f32.mrb[0].mxu0
    %v575 = vadd.f32 %v345, %v574
    %576 = vdwg.mxu0
    %v577 = vlaneseq
    %v578 = vshrl.u32 %v577, 7
    %v579 = vsub.s32 1, %v578
    %v580 = vrot.slane %v94, %v579
    %v581 = vlaneseq
    %v582 = vshrl.u32 %v581, 7
    %v583 = vsub.s32 5, %v582
    %v584 = vrot.slane %v94, %v583
    %v587 = vlaneseq
    %v588 = vshrl.u32 %v587, 7
    %v589 = vsub.s32 1, %v588
    %v590 = vrot.slane %v580, %v589
    %v591 = vlaneseq
    %v592 = vshrl.u32 %v591, 7
    %v593 = vsub.s32 1, %v592
    %v594 = vrot.slane %v584, %v593
    %v595 = vadd.f32 %v413, %v590
    %v596 = vadd.f32 %v415, %v594
    %v597 = vadd.f32 %v419, %v590
    %v598 = vadd.f32 %v421, %v594
    %v599 = vxor.u32 %v595, 2147483648
    %v600 = vxor.u32 %v596, 2147483648
    %v601 = vxor.u32 %v597, 2147483648
    %v602 = vxor.u32 %v598, 2147483648
    %v603 = vmul.f32 %v599, 1.442695
    %v604 = vpow.pop %v603
    %v605 = vmul.f32 %v600, 1.442695
    %v606 = vpow.pop %v605
    %v607 = vmul.f32 %v601, 1.442695
    %v608 = vpow.pop %v607
    %v609 = vmul.f32 %v602, 1.442695
    %v610 = vpow.pop %v609
    %v611 = vadd.f32 %v604, 1.0
    %v612 = vadd.f32 %v606, 1.0
    %v613 = vadd.f32 %v608, 1.0
    %v614 = vadd.f32 %v610, 1.0
    %v615 = vrcp.pop %v611
    %v616 = vmul.f32 1.0, %v615
    %v617 = vrcp.pop %v612
    %v618 = vmul.f32 1.0, %v617
    %v619 = vrcp.pop %v613
    %v620 = vmul.f32 1.0, %v619
    %v621 = vrcp.pop %v614
    %v622 = vmul.f32 1.0, %v621
    %v623 = vlaneseq
    %v624 = vshrl.u32 %v623, 7
    %v625 = vsub.s32 1, %v624
    %v626 = vrot.slane %v95, %v625
    %v627 = vlaneseq
    %v628 = vshrl.u32 %v627, 7
    %v629 = vsub.s32 5, %v628
    %v630 = vrot.slane %v95, %v629
    %v633 = vlaneseq
    %v634 = vshrl.u32 %v633, 7
    %v635 = vsub.s32 1, %v634
    %v636 = vrot.slane %v626, %v635
    %v637 = vlaneseq
    %v638 = vshrl.u32 %v637, 7
    %v639 = vsub.s32 1, %v638
    %v640 = vrot.slane %v630, %v639
    %v641 = vadd.f32 %v490, %v636
    %v642 = vadd.f32 %v492, %v640
    %v643 = vadd.f32 %v496, %v636
    %v644 = vadd.f32 %v498, %v640
    %v645 = vxor.u32 %v641, 2147483648
    %v646 = vxor.u32 %v642, 2147483648
    %v647 = vxor.u32 %v643, 2147483648
    %v648 = vxor.u32 %v644, 2147483648
    %v649 = vmul.f32 %v645, 1.442695
    %v650 = vpow.pop %v649
    %v651 = vmul.f32 %v646, 1.442695
    %v652 = vpow.pop %v651
    %v653 = vmul.f32 %v647, 1.442695
    %v654 = vpow.pop %v653
    %v655 = vmul.f32 %v648, 1.442695
    %v656 = vpow.pop %v655
    %v657 = vadd.f32 %v650, 1.0
    %v658 = vadd.f32 %v652, 1.0
    %v659 = vadd.f32 %v654, 1.0
    %v660 = vadd.f32 %v656, 1.0
    %v661 = vrcp.pop %v657
    %v662 = vmul.f32 1.0, %v661
    %v663 = vrcp.pop %v658
    %v664 = vmul.f32 1.0, %v663
    %v665 = vrcp.pop %v659
    %v666 = vmul.f32 1.0, %v665
    %v667 = vrcp.pop %v660
    %v668 = vmul.f32 1.0, %v667
    %v669 = vlaneseq
    %v670 = vshrl.u32 %v669, 7
    %v671 = vsub.s32 1, %v670
    %v672 = vrot.slane %v96, %v671
    %v673 = vlaneseq
    %v674 = vshrl.u32 %v673, 7
    %v675 = vsub.s32 5, %v674
    %v676 = vrot.slane %v96, %v675
    %v679 = vlaneseq
    %v680 = vshrl.u32 %v679, 7
    %v681 = vsub.s32 1, %v680
    %v682 = vrot.slane %v672, %v681
    %v683 = vlaneseq
    %v684 = vshrl.u32 %v683, 7
    %v685 = vsub.s32 1, %v684
    %v686 = vrot.slane %v676, %v685
    %v687 = vmul.f32 %v616, %v682
    %v688 = vmul.f32 %v618, %v686
    %v689 = vmul.f32 %v620, %v682
    %v690 = vmul.f32 %v622, %v686
    %v691 = vadd.f32 %v567, %v687
    %v692 = vadd.f32 %v569, %v688
    %v693 = vadd.f32 %v573, %v689
    %v694 = vadd.f32 %v575, %v690
    %v695 = vtanh.pop %v691
    %v696 = vtanh.pop %v692
    %v697 = vtanh.pop %v693
    %v698 = vtanh.pop %v694
    %v699 = vsub.f32 1.0, %v662
    %v700 = vsub.f32 1.0, %v664
    %v701 = vsub.f32 1.0, %v666
    %v702 = vsub.f32 1.0, %v668
    %v703 = vmul.f32 %v699, %v695
    %v704 = vmul.f32 %v700, %v696
    %v705 = vmul.f32 %v701, %v697
    %v706 = vmul.f32 %v702, %v698
    %v707 = vld [vmem:[#allocation4] sm:$0xff]
    %v708 = vld [vmem:[#allocation4 + $0x8] sm:$0xff]
    %v709 = vld [vmem:[#allocation4 + $0x10] sm:$0xff]
    %v710 = vld [vmem:[#allocation4 + $0x18] sm:$0xff]
    %v711 = vld [vmem:[#allocation4 + $0x20] sm:$0xff]
    %v712 = vld [vmem:[#allocation4 + $0x28] sm:$0xff]
    %v713 = vld [vmem:[#allocation4 + $0x30] sm:$0xff]
    %v714 = vld [vmem:[#allocation4 + $0x38] sm:$0xff]
    %v715 = vld [vmem:[#allocation4 + $0x40] sm:$0xff]
    %v716 = vld [vmem:[#allocation4 + $0x48] sm:$0xff]
    %v717 = vld [vmem:[#allocation4 + $0x50] sm:$0xff]
    %v718 = vld [vmem:[#allocation4 + $0x58] sm:$0xff]
    %v719 = vld [vmem:[#allocation4 + $0x60] sm:$0xff]
    %v720 = vld [vmem:[#allocation4 + $0x68] sm:$0xff]
    %v721 = vld [vmem:[#allocation4 + $0x70] sm:$0xff]
    %v722 = vld [vmem:[#allocation4 + $0x78] sm:$0xff]
    %v723 = vld [vmem:[#allocation4 + $0x80] sm:$0xff]
    %v724 = vld [vmem:[#allocation4 + $0x88] sm:$0xff]
    %v725 = vld [vmem:[#allocation4 + $0x90] sm:$0xff]
    %v726 = vld [vmem:[#allocation4 + $0x98] sm:$0xff]
    %v727 = vld [vmem:[#allocation4 + $0xa0] sm:$0xff]
    %v728 = vld [vmem:[#allocation4 + $0xa8] sm:$0xff]
    %v729 = vld [vmem:[#allocation4 + $0xb0] sm:$0xff]
    %v730 = vld [vmem:[#allocation4 + $0xb8] sm:$0xff]
    %v731 = vld [vmem:[#allocation4 + $0xc0] sm:$0xff]
    %v732 = vld [vmem:[#allocation4 + $0xc8] sm:$0xff]
    %v733 = vld [vmem:[#allocation4 + $0xd0] sm:$0xff]
    %v734 = vld [vmem:[#allocation4 + $0xd8] sm:$0xff]
    %v735 = vld [vmem:[#allocation4 + $0xe0] sm:$0xff]
    %v736 = vld [vmem:[#allocation4 + $0xe8] sm:$0xff]
    %v737 = vld [vmem:[#allocation4 + $0xf0] sm:$0xff]
    %v738 = vld [vmem:[#allocation4 + $0xf8] sm:$0xff]
    %v739 = vld [vmem:[#allocation4 + $0x100] sm:$0xff]
    %v740 = vld [vmem:[#allocation4 + $0x108] sm:$0xff]
    %v741 = vld [vmem:[#allocation4 + $0x110] sm:$0xff]
    %v742 = vld [vmem:[#allocation4 + $0x118] sm:$0xff]
    %v743 = vld [vmem:[#allocation4 + $0x120] sm:$0xff]
    %v744 = vld [vmem:[#allocation4 + $0x128] sm:$0xff]
    %v745 = vld [vmem:[#allocation4 + $0x130] sm:$0xff]
    %v746 = vld [vmem:[#allocation4 + $0x138] sm:$0xff]
    %v747 = vld [vmem:[#allocation4 + $0x140] sm:$0xff]
    %v748 = vld [vmem:[#allocation4 + $0x148] sm:$0xff]
    %v749 = vld [vmem:[#allocation4 + $0x150] sm:$0xff]
    %v750 = vld [vmem:[#allocation4 + $0x158] sm:$0xff]
    %v751 = vld [vmem:[#allocation4 + $0x160] sm:$0xff]
    %v752 = vld [vmem:[#allocation4 + $0x168] sm:$0xff]
    %v753 = vld [vmem:[#allocation4 + $0x170] sm:$0xff]
    %v754 = vld [vmem:[#allocation4 + $0x178] sm:$0xff]
    %v755 = vld [vmem:[#allocation4 + $0x180] sm:$0xff]
    %v756 = vld [vmem:[#allocation4 + $0x188] sm:$0xff]
    %v757 = vld [vmem:[#allocation4 + $0x190] sm:$0xff]
    %v758 = vld [vmem:[#allocation4 + $0x198] sm:$0xff]
    %v759 = vld [vmem:[#allocation4 + $0x1a0] sm:$0xff]
    %v760 = vld [vmem:[#allocation4 + $0x1a8] sm:$0xff]
    %v761 = vld [vmem:[#allocation4 + $0x1b0] sm:$0xff]
    %v762 = vld [vmem:[#allocation4 + $0x1b8] sm:$0xff]
    %v763 = vld [vmem:[#allocation4 + $0x1c0] sm:$0xff]
    %v764 = vld [vmem:[#allocation4 + $0x1c8] sm:$0xff]
    %v765 = vld [vmem:[#allocation4 + $0x1d0] sm:$0xff]
    %v766 = vld [vmem:[#allocation4 + $0x1d8] sm:$0xff]
    %v767 = vld [vmem:[#allocation4 + $0x1e0] sm:$0xff]
    %v768 = vld [vmem:[#allocation4 + $0x1e8] sm:$0xff]
    %v769 = vld [vmem:[#allocation4 + $0x1f0] sm:$0xff]
    %v770 = vld [vmem:[#allocation4 + $0x1f8] sm:$0xff]
    %v771 = vld [vmem:[#allocation4 + $0x200] sm:$0xff]
    %v772 = vld [vmem:[#allocation4 + $0x208] sm:$0xff]
    %v773 = vld [vmem:[#allocation4 + $0x210] sm:$0xff]
    %v774 = vld [vmem:[#allocation4 + $0x218] sm:$0xff]
    %v775 = vld [vmem:[#allocation4 + $0x220] sm:$0xff]
    %v776 = vld [vmem:[#allocation4 + $0x228] sm:$0xff]
    %v777 = vld [vmem:[#allocation4 + $0x230] sm:$0xff]
    %v778 = vld [vmem:[#allocation4 + $0x238] sm:$0xff]
    %v779 = vld [vmem:[#allocation4 + $0x240] sm:$0xff]
    %v780 = vld [vmem:[#allocation4 + $0x248] sm:$0xff]
    %v781 = vld [vmem:[#allocation4 + $0x250] sm:$0xff]
    %v782 = vld [vmem:[#allocation4 + $0x258] sm:$0xff]
    %v783 = vld [vmem:[#allocation4 + $0x260] sm:$0xff]
    %v784 = vld [vmem:[#allocation4 + $0x268] sm:$0xff]
    %v785 = vld [vmem:[#allocation4 + $0x270] sm:$0xff]
    %v786 = vld [vmem:[#allocation4 + $0x278] sm:$0xff]
    %v787 = vld [vmem:[#allocation4 + $0x280] sm:$0xff]
    %v788 = vld [vmem:[#allocation4 + $0x288] sm:$0xff]
    %v789 = vld [vmem:[#allocation4 + $0x290] sm:$0xff]
    %v790 = vld [vmem:[#allocation4 + $0x298] sm:$0xff]
    %v791 = vld [vmem:[#allocation4 + $0x2a0] sm:$0xff]
    %v792 = vld [vmem:[#allocation4 + $0x2a8] sm:$0xff]
    %v793 = vld [vmem:[#allocation4 + $0x2b0] sm:$0xff]
    %v794 = vld [vmem:[#allocation4 + $0x2b8] sm:$0xff]
    %v795 = vld [vmem:[#allocation4 + $0x2c0] sm:$0xff]
    %v796 = vld [vmem:[#allocation4 + $0x2c8] sm:$0xff]
    %v797 = vld [vmem:[#allocation4 + $0x2d0] sm:$0xff]
    %v798 = vld [vmem:[#allocation4 + $0x2d8] sm:$0xff]
    %v799 = vld [vmem:[#allocation4 + $0x2e0] sm:$0xff]
    %v800 = vld [vmem:[#allocation4 + $0x2e8] sm:$0xff]
    %v801 = vld [vmem:[#allocation4 + $0x2f0] sm:$0xff]
    %v802 = vld [vmem:[#allocation4 + $0x2f8] sm:$0xff]
    %v803 = vld [vmem:[#allocation4 + $0x300] sm:$0xff]
    %v804 = vld [vmem:[#allocation4 + $0x308] sm:$0xff]
    %v805 = vld [vmem:[#allocation4 + $0x310] sm:$0xff]
    %v806 = vld [vmem:[#allocation4 + $0x318] sm:$0xff]
    %v807 = vld [vmem:[#allocation4 + $0x320] sm:$0xff]
    %v808 = vld [vmem:[#allocation4 + $0x328] sm:$0xff]
    %v809 = vld [vmem:[#allocation4 + $0x330] sm:$0xff]
    %v810 = vld [vmem:[#allocation4 + $0x338] sm:$0xff]
    %v811 = vld [vmem:[#allocation4 + $0x340] sm:$0xff]
    %v812 = vld [vmem:[#allocation4 + $0x348] sm:$0xff]
    %v813 = vld [vmem:[#allocation4 + $0x350] sm:$0xff]
    %v814 = vld [vmem:[#allocation4 + $0x358] sm:$0xff]
    %v815 = vld [vmem:[#allocation4 + $0x360] sm:$0xff]
    %v816 = vld [vmem:[#allocation4 + $0x368] sm:$0xff]
    %v817 = vld [vmem:[#allocation4 + $0x370] sm:$0xff]
    %v818 = vld [vmem:[#allocation4 + $0x378] sm:$0xff]
    %v819 = vld [vmem:[#allocation4 + $0x380] sm:$0xff]
    %v820 = vld [vmem:[#allocation4 + $0x388] sm:$0xff]
    %v821 = vld [vmem:[#allocation4 + $0x390] sm:$0xff]
    %v822 = vld [vmem:[#allocation4 + $0x398] sm:$0xff]
    %v823 = vld [vmem:[#allocation4 + $0x3a0] sm:$0xff]
    %v824 = vld [vmem:[#allocation4 + $0x3a8] sm:$0xff]
    %v825 = vld [vmem:[#allocation4 + $0x3b0] sm:$0xff]
    %v826 = vld [vmem:[#allocation4 + $0x3b8] sm:$0xff]
    %v827 = vld [vmem:[#allocation4 + $0x3c0] sm:$0xff]
    %v828 = vld [vmem:[#allocation4 + $0x3c8] sm:$0xff]
    %v829 = vld [vmem:[#allocation4 + $0x3d0] sm:$0xff]
    %v830 = vld [vmem:[#allocation4 + $0x3d8] sm:$0xff]
    %v831 = vld [vmem:[#allocation4 + $0x3e0] sm:$0xff]
    %v832 = vld [vmem:[#allocation4 + $0x3e8] sm:$0xff]
    %v833 = vld [vmem:[#allocation4 + $0x3f0] sm:$0xff]
    %v834 = vld [vmem:[#allocation4 + $0x3f8] sm:$0xff]
    %v835 = vld [vmem:[#allocation4 + $0x400] sm:$0xff]
    %v836 = vld [vmem:[#allocation4 + $0x408] sm:$0xff]
    %v837 = vld [vmem:[#allocation4 + $0x410] sm:$0xff]
    %v838 = vld [vmem:[#allocation4 + $0x418] sm:$0xff]
    %v839 = vld [vmem:[#allocation4 + $0x420] sm:$0xff]
    %v840 = vld [vmem:[#allocation4 + $0x428] sm:$0xff]
    %v841 = vld [vmem:[#allocation4 + $0x430] sm:$0xff]
    %v842 = vld [vmem:[#allocation4 + $0x438] sm:$0xff]
    %v843 = vld [vmem:[#allocation4 + $0x440] sm:$0xff]
    %v844 = vld [vmem:[#allocation4 + $0x448] sm:$0xff]
    %v845 = vld [vmem:[#allocation4 + $0x450] sm:$0xff]
    %v846 = vld [vmem:[#allocation4 + $0x458] sm:$0xff]
    %v847 = vld [vmem:[#allocation4 + $0x460] sm:$0xff]
    %v848 = vld [vmem:[#allocation4 + $0x468] sm:$0xff]
    %v849 = vld [vmem:[#allocation4 + $0x470] sm:$0xff]
    %v850 = vld [vmem:[#allocation4 + $0x478] sm:$0xff]
    %v851 = vld [vmem:[#allocation4 + $0x480] sm:$0xff]
    %v852 = vld [vmem:[#allocation4 + $0x488] sm:$0xff]
    %v853 = vld [vmem:[#allocation4 + $0x490] sm:$0xff]
    %v854 = vld [vmem:[#allocation4 + $0x498] sm:$0xff]
    %v855 = vld [vmem:[#allocation4 + $0x4a0] sm:$0xff]
    %v856 = vld [vmem:[#allocation4 + $0x4a8] sm:$0xff]
    %v857 = vld [vmem:[#allocation4 + $0x4b0] sm:$0xff]
    %v858 = vld [vmem:[#allocation4 + $0x4b8] sm:$0xff]
    %v859 = vld [vmem:[#allocation4 + $0x4c0] sm:$0xff]
    %v860 = vld [vmem:[#allocation4 + $0x4c8] sm:$0xff]
    %v861 = vld [vmem:[#allocation4 + $0x4d0] sm:$0xff]
    %v862 = vld [vmem:[#allocation4 + $0x4d8] sm:$0xff]
    %v863 = vld [vmem:[#allocation4 + $0x4e0] sm:$0xff]
    %v864 = vld [vmem:[#allocation4 + $0x4e8] sm:$0xff]
    %v865 = vld [vmem:[#allocation4 + $0x4f0] sm:$0xff]
    %v866 = vld [vmem:[#allocation4 + $0x4f8] sm:$0xff]
    %v867 = vld [vmem:[#allocation4 + $0x500] sm:$0xff]
    %v868 = vld [vmem:[#allocation4 + $0x508] sm:$0xff]
    %v869 = vld [vmem:[#allocation4 + $0x510] sm:$0xff]
    %v870 = vld [vmem:[#allocation4 + $0x518] sm:$0xff]
    %v871 = vld [vmem:[#allocation4 + $0x520] sm:$0xff]
    %v872 = vld [vmem:[#allocation4 + $0x528] sm:$0xff]
    %v873 = vld [vmem:[#allocation4 + $0x530] sm:$0xff]
    %v874 = vld [vmem:[#allocation4 + $0x538] sm:$0xff]
    %v875 = vld [vmem:[#allocation4 + $0x540] sm:$0xff]
    %v876 = vld [vmem:[#allocation4 + $0x548] sm:$0xff]
    %v877 = vld [vmem:[#allocation4 + $0x550] sm:$0xff]
    %v878 = vld [vmem:[#allocation4 + $0x558] sm:$0xff]
    %v879 = vld [vmem:[#allocation4 + $0x560] sm:$0xff]
    %v880 = vld [vmem:[#allocation4 + $0x568] sm:$0xff]
    %v881 = vld [vmem:[#allocation4 + $0x570] sm:$0xff]
    %v882 = vld [vmem:[#allocation4 + $0x578] sm:$0xff]
    %v883 = vld [vmem:[#allocation4 + $0x580] sm:$0xff]
    %v884 = vld [vmem:[#allocation4 + $0x588] sm:$0xff]
    %v885 = vld [vmem:[#allocation4 + $0x590] sm:$0xff]
    %v886 = vld [vmem:[#allocation4 + $0x598] sm:$0xff]
    %v887 = vld [vmem:[#allocation4 + $0x5a0] sm:$0xff]
    %v888 = vld [vmem:[#allocation4 + $0x5a8] sm:$0xff]
    %v889 = vld [vmem:[#allocation4 + $0x5b0] sm:$0xff]
    %v890 = vld [vmem:[#allocation4 + $0x5b8] sm:$0xff]
    %v891 = vld [vmem:[#allocation4 + $0x5c0] sm:$0xff]
    %v892 = vld [vmem:[#allocation4 + $0x5c8] sm:$0xff]
    %v893 = vld [vmem:[#allocation4 + $0x5d0] sm:$0xff]
    %v894 = vld [vmem:[#allocation4 + $0x5d8] sm:$0xff]
    %v895 = vld [vmem:[#allocation4 + $0x5e0] sm:$0xff]
    %v896 = vld [vmem:[#allocation4 + $0x5e8] sm:$0xff]
    %v897 = vld [vmem:[#allocation4 + $0x5f0] sm:$0xff]
    %v898 = vld [vmem:[#allocation4 + $0x5f8] sm:$0xff]
    %v899 = vlaneseq
    %v900 = vshrl.u32 %v899, 7
    %v901 = vsub.s32 2, %v900
    %v902 = vrot.slane %v94, %v901
    %v903 = vlaneseq
    %v904 = vshrl.u32 %v903, 7
    %v905 = vsub.s32 6, %v904
    %v906 = vrot.slane %v94, %v905
    %v907 = vlaneseq
    %v908 = vshrl.u32 %v907, 7
    %v909 = vsub.s32 2, %v908
    %v910 = vrot.slane %v95, %v909
    %v911 = vlaneseq
    %v912 = vshrl.u32 %v911, 7
    %v913 = vsub.s32 6, %v912
    %v914 = vrot.slane %v95, %v913
    %v915 = vlaneseq
    %v916 = vshrl.u32 %v915, 7
    %v917 = vsub.s32 2, %v916
    %v918 = vrot.slane %v96, %v917
    %v919 = vlaneseq
    %v920 = vshrl.u32 %v919, 7
    %v921 = vsub.s32 6, %v920
    %v922 = vrot.slane %v96, %v921
    %v929 = vlaneseq
    %v930 = vshrl.u32 %v929, 7
    %v931 = vsub.s32 2, %v930
    %v932 = vrot.slane %v902, %v931
    %v933 = vlaneseq
    %v934 = vshrl.u32 %v933, 7
    %v935 = vsub.s32 2, %v934
    %v936 = vrot.slane %v906, %v935
    %v937 = vlaneseq
    %v938 = vshrl.u32 %v937, 7
    %v939 = vsub.s32 2, %v938
    %v940 = vrot.slane %v910, %v939
    %v941 = vlaneseq
    %v942 = vshrl.u32 %v941, 7
    %v943 = vsub.s32 2, %v942
    %v944 = vrot.slane %v914, %v943
    %v945 = vlaneseq
    %v946 = vshrl.u32 %v945, 7
    %v947 = vsub.s32 2, %v946
    %v948 = vrot.slane %v918, %v947
    %v949 = vlaneseq
    %v950 = vshrl.u32 %v949, 7
    %v951 = vsub.s32 2, %v950
    %v952 = vrot.slane %v922, %v951
    %953 = vmatprep.subr.mxu0 %v708
    %954 = vmatpush1.msra.mxu0 %v707
    %955 = vmatprep.subr.mxu0 %v714
    %956 = vmatpush1.msra.mxu0 %v713
    %957 = vmatprep.subr.mxu0 %v720
    %958 = vmatpush1.msra.mxu0 %v719
    %959 = vmatprep.subr.mxu0 %v726
    %960 = vmatpush1.msra.mxu0 %v725
    %961 = vmatprep.subr.mxu0 %v732
    %962 = vmatpush1.msra.mxu0 %v731
    %963 = vmatprep.subr.mxu0 %v738
    %964 = vmatpush1.msra.mxu0 %v737
    %965 = vmatprep.subr.mxu0 %v744
    %966 = vmatpush1.msra.mxu0 %v743
    %967 = vmatprep.subr.mxu0 %v750
    %968 = vmatpush1.msra.mxu0 %v749
    %969 = vmatprep.subr.mxu0 %v756
    %970 = vmatpush1.msra.mxu0 %v755
    %971 = vmatprep.subr.mxu0 %v762
    %972 = vmatpush1.msra.mxu0 %v761
    %973 = vmatprep.subr.mxu0 %v768
    %974 = vmatpush1.msra.mxu0 %v767
    %975 = vmatprep.subr.mxu0 %v774
    %976 = vmatpush1.msra.mxu0 %v773
    %977 = vmatprep.subr.mxu0 %v780
    %978 = vmatpush1.msra.mxu0 %v779
    %979 = vmatprep.subr.mxu0 %v786
    %980 = vmatpush1.msra.mxu0 %v785
    %981 = vmatprep.subr.mxu0 %v792
    %982 = vmatpush1.msra.mxu0 %v791
    %983 = vmatprep.subr.mxu0 %v798
    %984 = vmatpush1.msra.mxu0 %v797
    %985 = vmatprep.subr.mxu0 %v804
    %986 = vmatpush1.msra.mxu0 %v803
    %987 = vmatprep.subr.mxu0 %v810
    %988 = vmatpush1.msra.mxu0 %v809
    %989 = vmatprep.subr.mxu0 %v816
    %990 = vmatpush1.msra.mxu0 %v815
    %991 = vmatprep.subr.mxu0 %v822
    %992 = vmatpush1.msra.mxu0 %v821
    %993 = vmatprep.subr.mxu0 %v828
    %994 = vmatpush1.msra.mxu0 %v827
    %995 = vmatprep.subr.mxu0 %v834
    %996 = vmatpush1.msra.mxu0 %v833
    %997 = vmatprep.subr.mxu0 %v840
    %998 = vmatpush1.msra.mxu0 %v839
    %999 = vmatprep.subr.mxu0 %v846
    %1000 = vmatpush1.msra.mxu0 %v845
    %1001 = vmatprep.subr.mxu0 %v852
    %1002 = vmatpush1.msra.mxu0 %v851
    %1003 = vmatprep.subr.mxu0 %v858
    %1004 = vmatpush1.msra.mxu0 %v857
    %1005 = vmatprep.subr.mxu0 %v864
    %1006 = vmatpush1.msra.mxu0 %v863
    %1007 = vmatprep.subr.mxu0 %v870
    %1008 = vmatpush1.msra.mxu0 %v869
    %1009 = vmatprep.subr.mxu0 %v876
    %1010 = vmatpush1.msra.mxu0 %v875
    %1011 = vmatprep.subr.mxu0 %v882
    %1012 = vmatpush1.msra.mxu0 %v881
    %1013 = vmatprep.subr.mxu0 %v888
    %1014 = vmatpush1.msra.mxu0 %v887
    %1015 = vmatprep.subr.mxu0 %v894
    %1016 = vmatpush1.msra.mxu0 %v893
    %1017 = vmatprep.mubr.f32.mxu0 %v704
    %1018 = vmatmul.mubr.f32.gmra.mrb[0].mxu0 %v703
    %v1019 = vpop.f32.mrb[0].mxu0
    %v1020 = vadd.f32 %v932, %v1019
    %v1021 = vpop.f32.mrb[0].mxu0
    %v1022 = vadd.f32 %v936, %v1021
    %1023 = vmatprep.mubr.f32.mxu0 %v706
    %1024 = vmatmul.mubr.f32.gmra.mrb[0].mxu0 %v705
    %v1025 = vpop.f32.mrb[0].mxu0
    %v1026 = vadd.f32 %v932, %v1025
    %v1027 = vpop.f32.mrb[0].mxu0
    %v1028 = vadd.f32 %v936, %v1027
    %1029 = vdwg.mxu0
    %1030 = vmatprep.subr.mxu0 %v710
    %1031 = vmatpush1.msra.mxu0 %v709
    %1032 = vmatprep.subr.mxu0 %v716
    %1033 = vmatpush1.msra.mxu0 %v715
    %1034 = vmatprep.subr.mxu0 %v722
    %1035 = vmatpush1.msra.mxu0 %v721
    %1036 = vmatprep.subr.mxu0 %v728
    %1037 = vmatpush1.msra.mxu0 %v727
    %1038 = vmatprep.subr.mxu0 %v734
    %1039 = vmatpush1.msra.mxu0 %v733
    %1040 = vmatprep.subr.mxu0 %v740
    %1041 = vmatpush1.msra.mxu0 %v739
    %1042 = vmatprep.subr.mxu0 %v746
    %1043 = vmatpush1.msra.mxu0 %v745
    %1044 = vmatprep.subr.mxu0 %v752
    %1045 = vmatpush1.msra.mxu0 %v751
    %1046 = vmatprep.subr.mxu0 %v758
    %1047 = vmatpush1.msra.mxu0 %v757
    %1048 = vmatprep.subr.mxu0 %v764
    %1049 = vmatpush1.msra.mxu0 %v763
    %1050 = vmatprep.subr.mxu0 %v770
    %1051 = vmatpush1.msra.mxu0 %v769
    %1052 = vmatprep.subr.mxu0 %v776
    %1053 = vmatpush1.msra.mxu0 %v775
    %1054 = vmatprep.subr.mxu0 %v782
    %1055 = vmatpush1.msra.mxu0 %v781
    %1056 = vmatprep.subr.mxu0 %v788
    %1057 = vmatpush1.msra.mxu0 %v787
    %1058 = vmatprep.subr.mxu0 %v794
    %1059 = vmatpush1.msra.mxu0 %v793
    %1060 = vmatprep.subr.mxu0 %v800
    %1061 = vmatpush1.msra.mxu0 %v799
    %1062 = vmatprep.subr.mxu0 %v806
    %1063 = vmatpush1.msra.mxu0 %v805
    %1064 = vmatprep.subr.mxu0 %v812
    %1065 = vmatpush1.msra.mxu0 %v811
    %1066 = vmatprep.subr.mxu0 %v818
    %1067 = vmatpush1.msra.mxu0 %v817
    %1068 = vmatprep.subr.mxu0 %v824
    %1069 = vmatpush1.msra.mxu0 %v823
    %1070 = vmatprep.subr.mxu0 %v830
    %1071 = vmatpush1.msra.mxu0 %v829
    %1072 = vmatprep.subr.mxu0 %v836
    %1073 = vmatpush1.msra.mxu0 %v835
    %1074 = vmatprep.subr.mxu0 %v842
    %1075 = vmatpush1.msra.mxu0 %v841
    %1076 = vmatprep.subr.mxu0 %v848
    %1077 = vmatpush1.msra.mxu0 %v847
    %1078 = vmatprep.subr.mxu0 %v854
    %1079 = vmatpush1.msra.mxu0 %v853
    %1080 = vmatprep.subr.mxu0 %v860
    %1081 = vmatpush1.msra.mxu0 %v859
    %1082 = vmatprep.subr.mxu0 %v866
    %1083 = vmatpush1.msra.mxu0 %v865
    %1084 = vmatprep.subr.mxu0 %v872
    %1085 = vmatpush1.msra.mxu0 %v871
    %1086 = vmatprep.subr.mxu0 %v878
    %1087 = vmatpush1.msra.mxu0 %v877
    %1088 = vmatprep.subr.mxu0 %v884
    %1089 = vmatpush1.msra.mxu0 %v883
    %1090 = vmatprep.subr.mxu0 %v890
    %1091 = vmatpush1.msra.mxu0 %v889
    %1092 = vmatprep.subr.mxu0 %v896
    %1093 = vmatpush1.msra.mxu0 %v895
    %1094 = vmatprep.mubr.f32.mxu0 %v704
    %1095 = vmatmul.mubr.f32.gmra.mrb[0].mxu0 %v703
    %v1096 = vpop.f32.mrb[0].mxu0
    %v1097 = vadd.f32 %v940, %v1096
    %v1098 = vpop.f32.mrb[0].mxu0
    %v1099 = vadd.f32 %v944, %v1098
    %1100 = vmatprep.mubr.f32.mxu0 %v706
    %1101 = vmatmul.mubr.f32.gmra.mrb[0].mxu0 %v705
    %v1102 = vpop.f32.mrb[0].mxu0
    %v1103 = vadd.f32 %v940, %v1102
    %v1104 = vpop.f32.mrb[0].mxu0
    %v1105 = vadd.f32 %v944, %v1104
    %1106 = vdwg.mxu0
    %1107 = vmatprep.subr.mxu0 %v712
    %1108 = vmatpush1.msra.mxu0 %v711
    %1109 = vmatprep.subr.mxu0 %v718
    %1110 = vmatpush1.msra.mxu0 %v717
    %1111 = vmatprep.subr.mxu0 %v724
    %1112 = vmatpush1.msra.mxu0 %v723
    %1113 = vmatprep.subr.mxu0 %v730
    %1114 = vmatpush1.msra.mxu0 %v729
    %1115 = vmatprep.subr.mxu0 %v736
    %1116 = vmatpush1.msra.mxu0 %v735
    %1117 = vmatprep.subr.mxu0 %v742
    %1118 = vmatpush1.msra.mxu0 %v741
    %1119 = vmatprep.subr.mxu0 %v748
    %1120 = vmatpush1.msra.mxu0 %v747
    %1121 = vmatprep.subr.mxu0 %v754
    %1122 = vmatpush1.msra.mxu0 %v753
    %1123 = vmatprep.subr.mxu0 %v760
    %1124 = vmatpush1.msra.mxu0 %v759
    %1125 = vmatprep.subr.mxu0 %v766
    %1126 = vmatpush1.msra.mxu0 %v765
    %1127 = vmatprep.subr.mxu0 %v772
    %1128 = vmatpush1.msra.mxu0 %v771
    %1129 = vmatprep.subr.mxu0 %v778
    %1130 = vmatpush1.msra.mxu0 %v777
    %1131 = vmatprep.subr.mxu0 %v784
    %1132 = vmatpush1.msra.mxu0 %v783
    %1133 = vmatprep.subr.mxu0 %v790
    %1134 = vmatpush1.msra.mxu0 %v789
    %1135 = vmatprep.subr.mxu0 %v796
    %1136 = vmatpush1.msra.mxu0 %v795
    %1137 = vmatprep.subr.mxu0 %v802
    %1138 = vmatpush1.msra.mxu0 %v801
    %1139 = vmatprep.subr.mxu0 %v808
    %1140 = vmatpush1.msra.mxu0 %v807
    %1141 = vmatprep.subr.mxu0 %v814
    %1142 = vmatpush1.msra.mxu0 %v813
    %1143 = vmatprep.subr.mxu0 %v820
    %1144 = vmatpush1.msra.mxu0 %v819
    %1145 = vmatprep.subr.mxu0 %v826
    %1146 = vmatpush1.msra.mxu0 %v825
    %1147 = vmatprep.subr.mxu0 %v832
    %1148 = vmatpush1.msra.mxu0 %v831
    %1149 = vmatprep.subr.mxu0 %v838
    %1150 = vmatpush1.msra.mxu0 %v837
    %1151 = vmatprep.subr.mxu0 %v844
    %1152 = vmatpush1.msra.mxu0 %v843
    %1153 = vmatprep.subr.mxu0 %v850
    %1154 = vmatpush1.msra.mxu0 %v849
    %1155 = vmatprep.subr.mxu0 %v856
    %1156 = vmatpush1.msra.mxu0 %v855
    %1157 = vmatprep.subr.mxu0 %v862
    %1158 = vmatpush1.msra.mxu0 %v861
    %1159 = vmatprep.subr.mxu0 %v868
    %1160 = vmatpush1.msra.mxu0 %v867
    %1161 = vmatprep.subr.mxu0 %v874
    %1162 = vmatpush1.msra.mxu0 %v873
    %1163 = vmatprep.subr.mxu0 %v880
    %1164 = vmatpush1.msra.mxu0 %v879
    %1165 = vmatprep.subr.mxu0 %v886
    %1166 = vmatpush1.msra.mxu0 %v885
    %1167 = vmatprep.subr.mxu0 %v892
    %1168 = vmatpush1.msra.mxu0 %v891
    %1169 = vmatprep.subr.mxu0 %v898
    %1170 = vmatpush1.msra.mxu0 %v897
    %1171 = vmatprep.mubr.f32.mxu0 %v704
    %1172 = vmatmul.mubr.f32.gmra.mrb[0].mxu0 %v703
    %v1173 = vpop.f32.mrb[0].mxu0
    %v1174 = vadd.f32 %v948, %v1173
    %v1175 = vpop.f32.mrb[0].mxu0
    %v1176 = vadd.f32 %v952, %v1175
    %1177 = vmatprep.mubr.f32.mxu0 %v706
    %1178 = vmatmul.mubr.f32.gmra.mrb[0].mxu0 %v705
    %v1179 = vpop.f32.mrb[0].mxu0
    %v1180 = vadd.f32 %v948, %v1179
    %v1181 = vpop.f32.mrb[0].mxu0
    %v1182 = vadd.f32 %v952, %v1181
    %1183 = vdwg.mxu0
    %v1184 = vlaneseq
    %v1185 = vshrl.u32 %v1184, 7
    %v1186 = vsub.s32 3, %v1185
    %v1187 = vrot.slane %v94, %v1186
    %v1188 = vlaneseq
    %v1189 = vshrl.u32 %v1188, 7
    %v1190 = vsub.s32 7, %v1189
    %v1191 = vrot.slane %v94, %v1190
    %v1194 = vlaneseq
    %v1195 = vshrl.u32 %v1194, 7
    %v1196 = vsub.s32 3, %v1195
    %v1197 = vrot.slane %v1187, %v1196
    %v1198 = vlaneseq
    %v1199 = vshrl.u32 %v1198, 7
    %v1200 = vsub.s32 3, %v1199
    %v1201 = vrot.slane %v1191, %v1200
    %v1202 = vadd.f32 %v1020, %v1197
    %v1203 = vadd.f32 %v1022, %v1201
    %v1204 = vadd.f32 %v1026, %v1197
    %v1205 = vadd.f32 %v1028, %v1201
    %v1206 = vxor.u32 %v1202, 2147483648
    %v1207 = vxor.u32 %v1203, 2147483648
    %v1208 = vxor.u32 %v1204, 2147483648
    %v1209 = vxor.u32 %v1205, 2147483648
    %v1210 = vmul.f32 %v1206, 1.442695
    %v1211 = vpow.pop %v1210
    %v1212 = vmul.f32 %v1207, 1.442695
    %v1213 = vpow.pop %v1212
    %v1214 = vmul.f32 %v1208, 1.442695
    %v1215 = vpow.pop %v1214
    %v1216 = vmul.f32 %v1209, 1.442695
    %v1217 = vpow.pop %v1216
    %v1218 = vadd.f32 %v1211, 1.0
    %v1219 = vadd.f32 %v1213, 1.0
    %v1220 = vadd.f32 %v1215, 1.0
    %v1221 = vadd.f32 %v1217, 1.0
    %v1222 = vrcp.pop %v1218
    %v1223 = vmul.f32 1.0, %v1222
    %v1224 = vrcp.pop %v1219
    %v1225 = vmul.f32 1.0, %v1224
    %v1226 = vrcp.pop %v1220
    %v1227 = vmul.f32 1.0, %v1226
    %v1228 = vrcp.pop %v1221
    %v1229 = vmul.f32 1.0, %v1228
    %v1230 = vlaneseq
    %v1231 = vshrl.u32 %v1230, 7
    %v1232 = vsub.s32 3, %v1231
    %v1233 = vrot.slane %v95, %v1232
    %v1234 = vlaneseq
    %v1235 = vshrl.u32 %v1234, 7
    %v1236 = vsub.s32 7, %v1235
    %v1237 = vrot.slane %v95, %v1236
    %v1240 = vlaneseq
    %v1241 = vshrl.u32 %v1240, 7
    %v1242 = vsub.s32 3, %v1241
    %v1243 = vrot.slane %v1233, %v1242
    %v1244 = vlaneseq
    %v1245 = vshrl.u32 %v1244, 7
    %v1246 = vsub.s32 3, %v1245
    %v1247 = vrot.slane %v1237, %v1246
    %v1248 = vadd.f32 %v1097, %v1243
    %v1249 = vadd.f32 %v1099, %v1247
    %v1250 = vadd.f32 %v1103, %v1243
    %v1251 = vadd.f32 %v1105, %v1247
    %v1252 = vxor.u32 %v1248, 2147483648
    %v1253 = vxor.u32 %v1249, 2147483648
    %v1254 = vxor.u32 %v1250, 2147483648
    %v1255 = vxor.u32 %v1251, 2147483648
    %v1256 = vmul.f32 %v1252, 1.442695
    %v1257 = vpow.pop %v1256
    %v1258 = vmul.f32 %v1253, 1.442695
    %v1259 = vpow.pop %v1258
    %v1260 = vmul.f32 %v1254, 1.442695
    %v1261 = vpow.pop %v1260
    %v1262 = vmul.f32 %v1255, 1.442695
    %v1263 = vpow.pop %v1262
    %v1264 = vadd.f32 %v1257, 1.0
    %v1265 = vadd.f32 %v1259, 1.0
    %v1266 = vadd.f32 %v1261, 1.0
    %v1267 = vadd.f32 %v1263, 1.0
    %v1268 = vrcp.pop %v1264
    %v1269 = vmul.f32 1.0, %v1268
    %v1270 = vrcp.pop %v1265
    %v1271 = vmul.f32 1.0, %v1270
    %v1272 = vrcp.pop %v1266
    %v1273 = vmul.f32 1.0, %v1272
    %v1274 = vrcp.pop %v1267
    %v1275 = vmul.f32 1.0, %v1274
    %v1276 = vlaneseq
    %v1277 = vshrl.u32 %v1276, 7
    %v1278 = vsub.s32 3, %v1277
    %v1279 = vrot.slane %v96, %v1278
    %v1280 = vlaneseq
    %v1281 = vshrl.u32 %v1280, 7
    %v1282 = vsub.s32 7, %v1281
    %v1283 = vrot.slane %v96, %v1282
    %v1286 = vlaneseq
    %v1287 = vshrl.u32 %v1286, 7
    %v1288 = vsub.s32 3, %v1287
    %v1289 = vrot.slane %v1279, %v1288
    %v1290 = vlaneseq
    %v1291 = vshrl.u32 %v1290, 7
    %v1292 = vsub.s32 3, %v1291
    %v1293 = vrot.slane %v1283, %v1292
    %v1294 = vmul.f32 %v1223, %v1289
    %v1295 = vmul.f32 %v1225, %v1293
    %v1296 = vmul.f32 %v1227, %v1289
    %v1297 = vmul.f32 %v1229, %v1293
    %v1298 = vadd.f32 %v1174, %v1294
    %v1299 = vadd.f32 %v1176, %v1295
    %v1300 = vadd.f32 %v1180, %v1296
    %v1301 = vadd.f32 %v1182, %v1297
    %v1302 = vtanh.pop %v1298
    %v1303 = vtanh.pop %v1299
    %v1304 = vtanh.pop %v1300
    %v1305 = vtanh.pop %v1301
    %v1306 = vsub.f32 1.0, %v1269
    %v1307 = vsub.f32 1.0, %v1271
    %v1308 = vsub.f32 1.0, %v1273
    %v1309 = vsub.f32 1.0, %v1275
    %v1310 = vmul.f32 %v1306, %v1302
    %v1311 = vmul.f32 %v1307, %v1303
    %v1312 = vmul.f32 %v1308, %v1304
    %v1313 = vmul.f32 %v1309, %v1305
    %v1314 = vmax.f32 %v1310, 0.0
    %v1315 = vmax.f32 %v1311, 0.0
    %v1316 = vmax.f32 %v1312, 0.0
    %v1317 = vmax.f32 %v1313, 0.0
    %v1318 = vld [vmem:[%s4] sm:$0xff]
    %v1319 = vld [vmem:[%s4 + $0x8] sm:$0xf]
    %v1320 = vld [vmem:[%s5] sm:$0xff]
    %v1321 = vld [vmem:[%s5 + $0x8] sm:$0xf]
    %1323 = vset.pattern.permute.xlu0 0
    %1324 = vperm.xlu0 %1323, %v1320
    %v1325 = vpop.permute.xlu0 %1324
    %1328 = vset.pattern.permute.xlu0 0
    %1329 = vperm.xlu0 %1328, %v1321
    %v1330 = vpop.permute.xlu0 %1329
    %vm1332 = vcmask 97280
    %v1334 = vsel %vm1332, %v1318, 0
    %v1337 = vsel %vm1332, %v1319, 0
    %vm1339 = vcmask 1043456
    %v1341 = vsel %vm1339, %v1316, 0
    %v1344 = vsel %vm1339, %v1317, 0
    %1346 = vmatprep.subr.mxu0 %v1315
    %1347 = vmatpush1.msra.mxu0 %v1314
    %1348 = vmatprep.subr.mxu0 %v1344
    %1349 = vmatpush1.msra.mxu0 %v1341
    %1350 = vmatprep.subr.mxu0 0.0
    %1351 = vmatpush1.msra.mxu0 0.0
    %1352 = vmatprep.subr.mxu0 0.0
    %1353 = vmatpush1.msra.mxu0 0.0
    %1354 = vmatprep.subr.mxu0 0.0
    %1355 = vmatpush1.msra.mxu0 0.0
    %1356 = vmatprep.subr.mxu0 0.0
    %1357 = vmatpush1.msra.mxu0 0.0
    %1358 = vmatprep.subr.mxu0 0.0
    %1359 = vmatpush1.msra.mxu0 0.0
    %1360 = vmatprep.subr.mxu0 0.0
    %1361 = vmatpush1.msra.mxu0 0.0
    %1362 = vmatprep.subr.mxu0 0.0
    %1363 = vmatpush1.msra.mxu0 0.0
    %1364 = vmatprep.subr.mxu0 0.0
    %1365 = vmatpush1.msra.mxu0 0.0
    %1366 = vmatprep.subr.mxu0 0.0
    %1367 = vmatpush1.msra.mxu0 0.0
    %1368 = vmatprep.subr.mxu0 0.0
    %1369 = vmatpush1.msra.mxu0 0.0
    %1370 = vmatprep.subr.mxu0 0.0
    %1371 = vmatpush1.msra.mxu0 0.0
    %1372 = vmatprep.subr.mxu0 0.0
    %1373 = vmatpush1.msra.mxu0 0.0
    %1374 = vmatprep.subr.mxu0 0.0
    %1375 = vmatpush1.msra.mxu0 0.0
    %1376 = vmatprep.subr.mxu0 0.0
    %1377 = vmatpush1.msra.mxu0 0.0
    %1378 = vmatprep.subr.mxu0 0.0
    %1379 = vmatpush1.msra.mxu0 0.0
    %1380 = vmatprep.subr.mxu0 0.0
    %1381 = vmatpush1.msra.mxu0 0.0
    %1382 = vmatprep.subr.mxu0 0.0
    %1383 = vmatpush1.msra.mxu0 0.0
    %1384 = vmatprep.subr.mxu0 0.0
    %1385 = vmatpush1.msra.mxu0 0.0
    %1386 = vmatprep.subr.mxu0 0.0
    %1387 = vmatpush1.msra.mxu0 0.0
    %1388 = vmatprep.subr.mxu0 0.0
    %1389 = vmatpush1.msra.mxu0 0.0
    %1390 = vmatprep.subr.mxu0 0.0
    %1391 = vmatpush1.msra.mxu0 0.0
    %1392 = vmatprep.subr.mxu0 0.0
    %1393 = vmatpush1.msra.mxu0 0.0
    %1394 = vmatprep.subr.mxu0 0.0
    %1395 = vmatpush1.msra.mxu0 0.0
    %1396 = vmatprep.subr.mxu0 0.0
    %1397 = vmatpush1.msra.mxu0 0.0
    %1398 = vmatprep.subr.mxu0 0.0
    %1399 = vmatpush1.msra.mxu0 0.0
    %1400 = vmatprep.subr.mxu0 0.0
    %1401 = vmatpush1.msra.mxu0 0.0
    %1402 = vmatprep.subr.mxu0 0.0
    %1403 = vmatpush1.msra.mxu0 0.0
    %1404 = vmatprep.subr.mxu0 0.0
    %1405 = vmatpush1.msra.mxu0 0.0
    %1406 = vmatprep.subr.mxu0 0.0
    %1407 = vmatpush1.msra.mxu0 0.0
    %1408 = vmatprep.subr.mxu0 0.0
    %1409 = vmatpush1.msra.mxu0 0.0
    %1410 = vmatprep.mubr.f32.mxu0 0.0
    %1411 = vmatmul.mubr.f32.gmra.mrb[0].mxu0 %v1334
    %v1412 = vpop.f32.mrb[0].mxu0
    %v1413 = vadd.f32 %v1325, %v1412
    %v1414 = vpop.f32.mrb[0].mxu0
    %v1415 = vadd.f32 %v1325, %v1414
    %1416 = vmatprep.mubr.f32.mxu0 0.0
    %1417 = vmatmul.mubr.f32.gmra.mrb[0].mxu0 %v1337
    %v1418 = vpop.f32.mrb[0].mxu0
    %v1419 = vadd.f32 %v1330, %v1418
    %v1420 = vpop.f32.mrb[0].mxu0
    %v1421 = vadd.f32 %v1330, %v1420
    %1422 = vdwg.mxu0
    %v1423 = vsel %vm1339, %v1419, -inf
    %v1424 = vmax.f32 %v1413, %v1423
    %v1425 = vrot.slane %v1424, 4
    %v1426 = vmax.f32 %v1424, %v1425
    %v1427 = vrot.slane %v1426, 2
    %v1428 = vmax.f32 %v1426, %v1427
    %v1429 = vrot.slane %v1428, 1
    %v1430 = vmax.f32 %v1428, %v1429
    %v1431 = vsel %vm1339, %v1421, -inf
    %v1432 = vmax.f32 %v1415, %v1431
    %v1433 = vrot.slane %v1432, 4
    %v1434 = vmax.f32 %v1432, %v1433
    %v1435 = vrot.slane %v1434, 2
    %v1436 = vmax.f32 %v1434, %v1435
    %v1437 = vrot.slane %v1436, 1
    %v1438 = vmax.f32 %v1436, %v1437
    %v1439 = vsub.f32 %v1413, %v1430
    %v1440 = vsub.f32 %v1415, %v1438
    %v1441 = vsub.f32 %v1419, %v1430
    %v1442 = vsub.f32 %v1421, %v1438
    %v1443 = vmul.f32 %v1439, 1.442695
    %v1444 = vpow.pop %v1443
    %v1445 = vmul.f32 %v1440, 1.442695
    %v1446 = vpow.pop %v1445
    %v1447 = vmul.f32 %v1441, 1.442695
    %v1448 = vpow.pop %v1447
    %v1449 = vmul.f32 %v1442, 1.442695
    %v1450 = vpow.pop %v1449
    %v1451 = vsel %vm1339, %v1448, 0.0
    %v1452 = vadd.f32 %v1444, %v1451
    %v1453 = vrot.slane %v1452, 4
    %v1454 = vadd.f32 %v1452, %v1453
    %v1455 = vrot.slane %v1454, 2
    %v1456 = vadd.f32 %v1454, %v1455
    %v1457 = vrot.slane %v1456, 1
    %v1458 = vadd.f32 %v1456, %v1457
    %v1459 = vsel %vm1339, %v1450, 0.0
    %v1460 = vadd.f32 %v1446, %v1459
    %v1461 = vrot.slane %v1460, 4
    %v1462 = vadd.f32 %v1460, %v1461
    %v1463 = vrot.slane %v1462, 2
    %v1464 = vadd.f32 %v1462, %v1463
    %v1465 = vrot.slane %v1464, 1
    %v1466 = vadd.f32 %v1464, %v1465
    %v1467 = vrcp.pop %v1458
    %v1468 = vmul.f32 %v1444, %v1467
    %v1469 = vrcp.pop %v1466
    %v1470 = vmul.f32 %v1446, %v1469
    %v1471 = vmul.f32 %v1448, %v1467
    %v1472 = vmul.f32 %v1450, %v1469
    %v1473 = vmul.f32 %v1468, %v1314
    %v1474 = vmul.f32 %v1470, %v1315
    %v1475 = vmul.f32 %v1471, %v1316
    %v1476 = vmul.f32 %v1472, %v1317
    %v1477 = vsel %vm1339, %v1475, 0.0
    %v1478 = vadd.f32 %v1473, %v1477
    %v1479 = vrot.slane %v1478, 4
    %v1480 = vadd.f32 %v1478, %v1479
    %v1481 = vrot.slane %v1480, 2
    %v1482 = vadd.f32 %v1480, %v1481
    %v1483 = vrot.slane %v1482, 1
    %v1484 = vadd.f32 %v1482, %v1483
    %v1485 = vsel %vm1339, %v1476, 0.0
    %v1486 = vadd.f32 %v1474, %v1485
    %v1487 = vrot.slane %v1486, 4
    %v1488 = vadd.f32 %v1486, %v1487
    %v1489 = vrot.slane %v1488, 2
    %v1490 = vadd.f32 %v1488, %v1489
    %v1491 = vrot.slane %v1490, 1
    %v1492 = vadd.f32 %v1490, %v1491
    %v1493 = vtanh.pop %v1484
    %v1494 = vtanh.pop %v1492
    %v1495 = vlaneseq
    %v1496 = vshrl.u32 %v1495, 7
    %v1497 = vadd.s32 %v1496, 8
    %v1498 = vadd.s32 %v1496, 16
    %v1499 = vadd.s32 %v1496, 24
    %v1500 = vadd.s32 %v1496, 32
    %v1501 = vadd.s32 %v1496, 40
    %v1502 = vadd.s32 %v1496, 48
    %v1503 = vadd.s32 %v1496, 56
    %v1504 = vadd.s32 %v1496, 64
    %v1505 = vadd.s32 %v1496, 72
    %v1506 = vadd.s32 %v1496, 80
    %v1507 = vadd.s32 %v1496, 88
    %v1508 = vadd.s32 %v1496, 96
    %v1509 = vadd.s32 %v1496, 104
    %v1510 = vadd.s32 %v1496, 112
    %v1511 = vadd.s32 %v1496, 120
    %v1512 = vadd.s32 %v1496, 128
    %v1513 = vadd.s32 %v1496, 136
    %v1514 = vadd.s32 %v1496, 144
    %v1515 = vadd.s32 %v1496, 152
    %v1516 = vadd.s32 %v1496, 160
    %v1517 = vadd.s32 %v1496, 168
    %v1518 = vadd.s32 %v1496, 176
    %v1519 = vadd.s32 %v1496, 184
    %v1520 = vadd.s32 %v1496, 192
    %v1521 = vadd.s32 %v1496, 200
    %v1522 = vadd.s32 %v1496, 208
    %v1523 = vadd.s32 %v1496, 216
    %v1524 = vadd.s32 %v1496, 224
    %v1525 = vadd.s32 %v1496, 232
    %v1526 = vadd.s32 %v1496, 240
    %v1527 = vadd.s32 %v1496, 248
    %v1528 = vlaneseq
    %v1529 = vand.u32 %v1528, 127
    %v1530 = vmul.u32 %v1529, 32
    %vm1531 = vcmp.ge.s32.totalorder %v1496, %v1530
    %vm1532 = vcmp.ge.s32.totalorder %v1497, %v1530
    %vm1533 = vcmp.ge.s32.totalorder %v1498, %v1530
    %vm1534 = vcmp.ge.s32.totalorder %v1499, %v1530
    %vm1535 = vcmp.ge.s32.totalorder %v1500, %v1530
    %vm1536 = vcmp.ge.s32.totalorder %v1501, %v1530
    %vm1537 = vcmp.ge.s32.totalorder %v1502, %v1530
    %vm1538 = vcmp.ge.s32.totalorder %v1503, %v1530
    %vm1539 = vcmp.ge.s32.totalorder %v1504, %v1530
    %vm1540 = vcmp.ge.s32.totalorder %v1505, %v1530
    %vm1541 = vcmp.ge.s32.totalorder %v1506, %v1530
    %vm1542 = vcmp.ge.s32.totalorder %v1507, %v1530
    %vm1543 = vcmp.ge.s32.totalorder %v1508, %v1530
    %vm1544 = vcmp.ge.s32.totalorder %v1509, %v1530
    %vm1545 = vcmp.ge.s32.totalorder %v1510, %v1530
    %vm1546 = vcmp.ge.s32.totalorder %v1511, %v1530
    %vm1547 = vcmp.ge.s32.totalorder %v1512, %v1530
    %vm1548 = vcmp.ge.s32.totalorder %v1513, %v1530
    %vm1549 = vcmp.ge.s32.totalorder %v1514, %v1530
    %vm1550 = vcmp.ge.s32.totalorder %v1515, %v1530
    %vm1551 = vcmp.ge.s32.totalorder %v1516, %v1530
    %vm1552 = vcmp.ge.s32.totalorder %v1517, %v1530
    %vm1553 = vcmp.ge.s32.totalorder %v1518, %v1530
    %vm1554 = vcmp.ge.s32.totalorder %v1519, %v1530
    %vm1555 = vcmp.ge.s32.totalorder %v1520, %v1530
    %vm1556 = vcmp.ge.s32.totalorder %v1521, %v1530
    %vm1557 = vcmp.ge.s32.totalorder %v1522, %v1530
    %vm1558 = vcmp.ge.s32.totalorder %v1523, %v1530
    %vm1559 = vcmp.ge.s32.totalorder %v1524, %v1530
    %vm1560 = vcmp.ge.s32.totalorder %v1525, %v1530
    %vm1561 = vcmp.ge.s32.totalorder %v1526, %v1530
    %vm1562 = vcmp.ge.s32.totalorder %v1527, %v1530
    %v1563 = vadd.s32 %v1529, 1
    %v1564 = vmul.u32 %v1563, 32
    %vm1565 = vcmp.lt.s32.totalorder %v1496, %v1564
    %vm1566 = vcmp.lt.s32.totalorder %v1497, %v1564
    %vm1567 = vcmp.lt.s32.totalorder %v1498, %v1564
    %vm1568 = vcmp.lt.s32.totalorder %v1499, %v1564
    %vm1569 = vcmp.lt.s32.totalorder %v1500, %v1564
    %vm1570 = vcmp.lt.s32.totalorder %v1501, %v1564
    %vm1571 = vcmp.lt.s32.totalorder %v1502, %v1564
    %vm1572 = vcmp.lt.s32.totalorder %v1503, %v1564
    %vm1573 = vcmp.lt.s32.totalorder %v1504, %v1564
    %vm1574 = vcmp.lt.s32.totalorder %v1505, %v1564
    %vm1575 = vcmp.lt.s32.totalorder %v1506, %v1564
    %vm1576 = vcmp.lt.s32.totalorder %v1507, %v1564
    %vm1577 = vcmp.lt.s32.totalorder %v1508, %v1564
    %vm1578 = vcmp.lt.s32.totalorder %v1509, %v1564
    %vm1579 = vcmp.lt.s32.totalorder %v1510, %v1564
    %vm1580 = vcmp.lt.s32.totalorder %v1511, %v1564
    %vm1581 = vcmp.lt.s32.totalorder %v1512, %v1564
    %vm1582 = vcmp.lt.s32.totalorder %v1513, %v1564
    %vm1583 = vcmp.lt.s32.totalorder %v1514, %v1564
    %vm1584 = vcmp.lt.s32.totalorder %v1515, %v1564
    %vm1585 = vcmp.lt.s32.totalorder %v1516, %v1564
    %vm1586 = vcmp.lt.s32.totalorder %v1517, %v1564
    %vm1587 = vcmp.lt.s32.totalorder %v1518, %v1564
    %vm1588 = vcmp.lt.s32.totalorder %v1519, %v1564
    %vm1589 = vcmp.lt.s32.totalorder %v1520, %v1564
    %vm1590 = vcmp.lt.s32.totalorder %v1521, %v1564
    %vm1591 = vcmp.lt.s32.totalorder %v1522, %v1564
    %vm1592 = vcmp.lt.s32.totalorder %v1523, %v1564
    %vm1593 = vcmp.lt.s32.totalorder %v1524, %v1564
    %vm1594 = vcmp.lt.s32.totalorder %v1525, %v1564
    %vm1595 = vcmp.lt.s32.totalorder %v1526, %v1564
    %vm1596 = vcmp.lt.s32.totalorder %v1527, %v1564
    %vm1597 = vmand %vm1531, %vm1565
    %vm1598 = vmand %vm1532, %vm1566
    %vm1599 = vmand %vm1533, %vm1567
    %vm1600 = vmand %vm1534, %vm1568
    %vm1601 = vmand %vm1535, %vm1569
    %vm1602 = vmand %vm1536, %vm1570
    %vm1603 = vmand %vm1537, %vm1571
    %vm1604 = vmand %vm1538, %vm1572
    %vm1605 = vmand %vm1539, %vm1573
    %vm1606 = vmand %vm1540, %vm1574
    %vm1607 = vmand %vm1541, %vm1575
    %vm1608 = vmand %vm1542, %vm1576
    %vm1609 = vmand %vm1543, %vm1577
    %vm1610 = vmand %vm1544, %vm1578
    %vm1611 = vmand %vm1545, %vm1579
    %vm1612 = vmand %vm1546, %vm1580
    %vm1613 = vmand %vm1547, %vm1581
    %vm1614 = vmand %vm1548, %vm1582
    %vm1615 = vmand %vm1549, %vm1583
    %vm1616 = vmand %vm1550, %vm1584
    %vm1617 = vmand %vm1551, %vm1585
    %vm1618 = vmand %vm1552, %vm1586
    %vm1619 = vmand %vm1553, %vm1587
    %vm1620 = vmand %vm1554, %vm1588
    %vm1621 = vmand %vm1555, %vm1589
    %vm1622 = vmand %vm1556, %vm1590
    %vm1623 = vmand %vm1557, %vm1591
    %vm1624 = vmand %vm1558, %vm1592
    %vm1625 = vmand %vm1559, %vm1593
    %vm1626 = vmand %vm1560, %vm1594
    %vm1627 = vmand %vm1561, %vm1595
    %vm1628 = vmand %vm1562, %vm1596
    %v1629 = vsel %vm1597, 1, 0
    %v1630 = vsel %vm1598, 1, 0
    %v1631 = vsel %vm1599, 1, 0
    %v1632 = vsel %vm1600, 1, 0
    %v1633 = vsel %vm1601, 1, 0
    %v1634 = vsel %vm1602, 1, 0
    %v1635 = vsel %vm1603, 1, 0
    %v1636 = vsel %vm1604, 1, 0
    %v1637 = vsel %vm1605, 1, 0
    %v1638 = vsel %vm1606, 1, 0
    %v1639 = vsel %vm1607, 1, 0
    %v1640 = vsel %vm1608, 1, 0
    %v1641 = vsel %vm1609, 1, 0
    %v1642 = vsel %vm1610, 1, 0
    %v1643 = vsel %vm1611, 1, 0
    %v1644 = vsel %vm1612, 1, 0
    %v1645 = vsel %vm1613, 1, 0
    %v1646 = vsel %vm1614, 1, 0
    %v1647 = vsel %vm1615, 1, 0
    %v1648 = vsel %vm1616, 1, 0
    %v1649 = vsel %vm1617, 1, 0
    %v1650 = vsel %vm1618, 1, 0
    %v1651 = vsel %vm1619, 1, 0
    %v1652 = vsel %vm1620, 1, 0
    %v1653 = vsel %vm1621, 1, 0
    %v1654 = vsel %vm1622, 1, 0
    %v1655 = vsel %vm1623, 1, 0
    %v1656 = vsel %vm1624, 1, 0
    %v1657 = vsel %vm1625, 1, 0
    %v1658 = vsel %vm1626, 1, 0
    %v1659 = vsel %vm1627, 1, 0
    %v1660 = vsel %vm1628, 1, 0
    %v1661 = vcvt.s32.f32 %v1629
    %v1662 = vcvt.s32.f32 %v1630
    %v1663 = vcvt.s32.f32 %v1631
    %v1664 = vcvt.s32.f32 %v1632
    %v1665 = vcvt.s32.f32 %v1633
    %v1666 = vcvt.s32.f32 %v1634
    %v1667 = vcvt.s32.f32 %v1635
    %v1668 = vcvt.s32.f32 %v1636
    %v1669 = vcvt.s32.f32 %v1637
    %v1670 = vcvt.s32.f32 %v1638
    %v1671 = vcvt.s32.f32 %v1639
    %v1672 = vcvt.s32.f32 %v1640
    %v1673 = vcvt.s32.f32 %v1641
    %v1674 = vcvt.s32.f32 %v1642
    %v1675 = vcvt.s32.f32 %v1643
    %v1676 = vcvt.s32.f32 %v1644
    %v1677 = vcvt.s32.f32 %v1645
    %v1678 = vcvt.s32.f32 %v1646
    %v1679 = vcvt.s32.f32 %v1647
    %v1680 = vcvt.s32.f32 %v1648
    %v1681 = vcvt.s32.f32 %v1649
    %v1682 = vcvt.s32.f32 %v1650
    %v1683 = vcvt.s32.f32 %v1651
    %v1684 = vcvt.s32.f32 %v1652
    %v1685 = vcvt.s32.f32 %v1653
    %v1686 = vcvt.s32.f32 %v1654
    %v1687 = vcvt.s32.f32 %v1655
    %v1688 = vcvt.s32.f32 %v1656
    %v1689 = vcvt.s32.f32 %v1657
    %v1690 = vcvt.s32.f32 %v1658
    %v1691 = vcvt.s32.f32 %v1659
    %v1692 = vcvt.s32.f32 %v1660
    %v1693 = vadd.s32 %v1529, 128
    %v1694 = vmul.u32 %v1496, 32
    %vm1695 = vcmp.ge.s32.totalorder %v1529, %v1694
    %vm1696 = vcmp.ge.s32.totalorder %v1693, %v1694
    %v1697 = vadd.s32 %v1496, 1
    %v1698 = vmul.u32 %v1697, 32
    %vm1699 = vcmp.lt.s32.totalorder %v1529, %v1698
    %vm1700 = vcmp.lt.s32.totalorder %v1693, %v1698
    %vm1701 = vmand %vm1695, %vm1699
    %vm1702 = vmand %vm1696, %vm1700
    %v1703 = vsel %vm1701, 1, 0
    %v1704 = vsel %vm1702, 1, 0
    %v1705 = vcvt.s32.f32 %v1703
    %v1706 = vcvt.s32.f32 %v1704
    %vm1707 = vcmp.eq.s32.totalorder %v1496, %v1529
    %vm1708 = vcmp.eq.s32.totalorder %v1497, %v1529
    %vm1709 = vcmp.eq.s32.totalorder %v1498, %v1529
    %vm1710 = vcmp.eq.s32.totalorder %v1499, %v1529
    %v1711 = vsel %vm1707, 1, 0
    %v1712 = vsel %vm1708, 1, 0
    %v1713 = vsel %vm1709, 1, 0
    %v1714 = vsel %vm1710, 1, 0
    %v1715 = vcvt.s32.f32 %v1711
    %v1716 = vcvt.s32.f32 %v1712
    %v1717 = vcvt.s32.f32 %v1713
    %v1718 = vcvt.s32.f32 %v1714
    %v1719 = vmul.f32 %v1493, %v1705
    %v1720 = vmul.f32 %v1494, %v1706
    %1721 = vmatprep.subr.mxu0 0.0
    %1722 = vmatpush1.msra.mxu0 %v1715
    %1723 = vmatprep.subr.mxu0 0.0
    %1724 = vmatpush1.msra.mxu0 %v1716
    %1725 = vmatprep.subr.mxu0 0.0
    %1726 = vmatpush1.msra.mxu0 %v1717
    %1727 = vmatprep.subr.mxu0 0.0
    %1728 = vmatpush1.msra.mxu0 %v1718
    %1729 = vmatprep.subr.mxu0 0.0
    %1730 = vmatpush1.msra.mxu0 %v1715
    %1731 = vmatprep.subr.mxu0 0.0
    %1732 = vmatpush1.msra.mxu0 %v1716
    %1733 = vmatprep.subr.mxu0 0.0
    %1734 = vmatpush1.msra.mxu0 %v1717
    %1735 = vmatprep.subr.mxu0 0.0
    %1736 = vmatpush1.msra.mxu0 %v1718
    %1737 = vmatprep.subr.mxu0 0.0
    %1738 = vmatpush1.msra.mxu0 %v1715
    %1739 = vmatprep.subr.mxu0 0.0
    %1740 = vmatpush1.msra.mxu0 %v1716
    %1741 = vmatprep.subr.mxu0 0.0
    %1742 = vmatpush1.msra.mxu0 %v1717
    %1743 = vmatprep.subr.mxu0 0.0
    %1744 = vmatpush1.msra.mxu0 %v1718
    %1745 = vmatprep.subr.mxu0 0.0
    %1746 = vmatpush1.msra.mxu0 %v1715
    %1747 = vmatprep.subr.mxu0 0.0
    %1748 = vmatpush1.msra.mxu0 %v1716
    %1749 = vmatprep.subr.mxu0 0.0
    %1750 = vmatpush1.msra.mxu0 %v1717
    %1751 = vmatprep.subr.mxu0 0.0
    %1752 = vmatpush1.msra.mxu0 %v1718
    %1753 = vmatprep.subr.mxu0 0.0
    %1754 = vmatpush1.msra.mxu0 %v1715
    %1755 = vmatprep.subr.mxu0 0.0
    %1756 = vmatpush1.msra.mxu0 %v1716
    %1757 = vmatprep.subr.mxu0 0.0
    %1758 = vmatpush1.msra.mxu0 %v1717
    %1759 = vmatprep.subr.mxu0 0.0
    %1760 = vmatpush1.msra.mxu0 %v1718
    %1761 = vmatprep.subr.mxu0 0.0
    %1762 = vmatpush1.msra.mxu0 %v1715
    %1763 = vmatprep.subr.mxu0 0.0
    %1764 = vmatpush1.msra.mxu0 %v1716
    %1765 = vmatprep.subr.mxu0 0.0
    %1766 = vmatpush1.msra.mxu0 %v1717
    %1767 = vmatprep.subr.mxu0 0.0
    %1768 = vmatpush1.msra.mxu0 %v1718
    %1769 = vmatprep.subr.mxu0 0.0
    %1770 = vmatpush1.msra.mxu0 %v1715
    %1771 = vmatprep.subr.mxu0 0.0
    %1772 = vmatpush1.msra.mxu0 %v1716
    %1773 = vmatprep.subr.mxu0 0.0
    %1774 = vmatpush1.msra.mxu0 %v1717
    %1775 = vmatprep.subr.mxu0 0.0
    %1776 = vmatpush1.msra.mxu0 %v1718
    %1777 = vmatprep.subr.mxu0 0.0
    %1778 = vmatpush1.msra.mxu0 %v1715
    %1779 = vmatprep.subr.mxu0 0.0
    %1780 = vmatpush1.msra.mxu0 %v1716
    %1781 = vmatprep.subr.mxu0 0.0
    %1782 = vmatpush1.msra.mxu0 %v1717
    %1783 = vmatprep.subr.mxu0 0.0
    %1784 = vmatpush1.msra.mxu0 %v1718
    %1785 = vmatprep.mubr.f32.mxu0 %v1720
    %1786 = vmatmul.mubr.f32.gmra.mrb[0].mxu0 %v1719
    %v1787 = vpop.f32.mrb[0].mxu0
    %v1788 = vadd.f32 0.0, %v1787
    %v1789 = vpop.f32.mrb[0].mxu0
    %1790 = vdwg.mxu0
    %v1791 = vld [vmem:[%s6] sm:$0xff]
    %v1792 = vld [vmem:[%s6 + $0x8] sm:$0xff]
    %v1793 = vld [vmem:[%s6 + $0x10] sm:$0xff]
    %v1794 = vld [vmem:[%s6 + $0x18] sm:$0xff]
    %v1795 = vld [vmem:[%s7] sm:$0xf]
    %vm1796 = vcmask 261120
    %v1798 = vsel %vm1796, %v1788, 0
    %1800 = vmatprep.subr.mxu0 0.0
    %1801 = vmatpush1.msra.mxu0 %v1791
    %1802 = vmatprep.subr.mxu0 0.0
    %1803 = vmatpush1.msra.mxu0 %v1792
    %1804 = vmatprep.subr.mxu0 0.0
    %1805 = vmatpush1.msra.mxu0 %v1793
    %1806 = vmatprep.subr.mxu0 0.0
    %1807 = vmatpush1.msra.mxu0 %v1794
    %1808 = vmatprep.subr.mxu0 0.0
    %1809 = vmatpush1.msra.mxu0 0.0
    %1810 = vmatprep.subr.mxu0 0.0
    %1811 = vmatpush1.msra.mxu0 0.0
    %1812 = vmatprep.subr.mxu0 0.0
    %1813 = vmatpush1.msra.mxu0 0.0
    %1814 = vmatprep.subr.mxu0 0.0
    %1815 = vmatpush1.msra.mxu0 0.0
    %1816 = vmatprep.subr.mxu0 0.0
    %1817 = vmatpush1.msra.mxu0 0.0
    %1818 = vmatprep.subr.mxu0 0.0
    %1819 = vmatpush1.msra.mxu0 0.0
    %1820 = vmatprep.subr.mxu0 0.0
    %1821 = vmatpush1.msra.mxu0 0.0
    %1822 = vmatprep.subr.mxu0 0.0
    %1823 = vmatpush1.msra.mxu0 0.0
    %1824 = vmatprep.subr.mxu0 0.0
    %1825 = vmatpush1.msra.mxu0 0.0
    %1826 = vmatprep.subr.mxu0 0.0
    %1827 = vmatpush1.msra.mxu0 0.0
    %1828 = vmatprep.subr.mxu0 0.0
    %1829 = vmatpush1.msra.mxu0 0.0
    %1830 = vmatprep.subr.mxu0 0.0
    %1831 = vmatpush1.msra.mxu0 0.0
    %1832 = vmatprep.subr.mxu0 0.0
    %1833 = vmatpush1.msra.mxu0 0.0
    %1834 = vmatprep.subr.mxu0 0.0
    %1835 = vmatpush1.msra.mxu0 0.0
    %1836 = vmatprep.subr.mxu0 0.0
    %1837 = vmatpush1.msra.mxu0 0.0
    %1838 = vmatprep.subr.mxu0 0.0
    %1839 = vmatpush1.msra.mxu0 0.0
    %1840 = vmatprep.subr.mxu0 0.0
    %1841 = vmatpush1.msra.mxu0 0.0
    %1842 = vmatprep.subr.mxu0 0.0
    %1843 = vmatpush1.msra.mxu0 0.0
    %1844 = vmatprep.subr.mxu0 0.0
    %1845 = vmatpush1.msra.mxu0 0.0
    %1846 = vmatprep.subr.mxu0 0.0
    %1847 = vmatpush1.msra.mxu0 0.0
    %1848 = vmatprep.subr.mxu0 0.0
    %1849 = vmatpush1.msra.mxu0 0.0
    %1850 = vmatprep.subr.mxu0 0.0
    %1851 = vmatpush1.msra.mxu0 0.0
    %1852 = vmatprep.subr.mxu0 0.0
    %1853 = vmatpush1.msra.mxu0 0.0
    %1854 = vmatprep.subr.mxu0 0.0
    %1855 = vmatpush1.msra.mxu0 0.0
    %1856 = vmatprep.subr.mxu0 0.0
    %1857 = vmatpush1.msra.mxu0 0.0
    %1858 = vmatprep.subr.mxu0 0.0
    %1859 = vmatpush1.msra.mxu0 0.0
    %1860 = vmatprep.subr.mxu0 0.0
    %1861 = vmatpush1.msra.mxu0 0.0
    %1862 = vmatprep.subr.mxu0 0.0
    %1863 = vmatpush1.msra.mxu0 0.0
    %1864 = vmatprep.mubr.f32.mxu0 0.0
    %1865 = vmatmul.mubr.f32.gmra.mrb[0].mxu0 %v1798
    %v1866 = vpop.f32.mrb[0].mxu0
    %v1867 = vadd.f32 0.0, %v1866
    %v1868 = vpop.f32.mrb[0].mxu0
    %1869 = vdwg.mxu0
    %v1870 = vlaneseq
    %v1871 = vshrl.u32 %v1870, 7
    %v1872 = vsub.s32 0, %v1871
    %v1873 = vrot.slane %v1795, %v1872
    %v1874 = vadd.f32 %v1867, %v1873
    %v1875 = vlaneseq
    %v1876 = vshrl.u32 %v1875, 7
    %v1877 = vsub.s32 1, %v1876
    %v1878 = vrot.slane %v1795, %v1877
    %1880 = vrot.lane.b32.xlu0 %v1878, 32
    %v1881 = vpop.permute.xlu0 %1880
    %v1883 = vadd.f32 %v1867, %v1881
    %v1885 = vcombine.high %v1883, %v1883
    %v1887 = vunpack.c.l.s4 1966171168
    %v1888 = vunpack.c.0.s8 %v1887
    %v1889 = vlaneseq
    %v1890 = vshrl.u32 %v1889, 7
    %v1891 = vsub.s32 %v1888, %v1890
    %v1892 = vrot.slane %v1883, %v1891
    %v1894 = vunpack.c.l.s4 1966171168
    %v1895 = vunpack.c.0.s8 %v1894
    %v1896 = vlaneseq
    %v1897 = vshrl.u32 %v1896, 7
    %v1898 = vsub.s32 %v1895, %v1897
    %v1899 = vrot.slane %v1885, %v1898
    %v1900 = vcombine.high %v1892, %v1892
    %v1901 = vcombine.high %v1899, %v1899
    %v1903 = vunpack.c.l.s4 1966171168
    %v1904 = vunpack.c.0.s8 %v1903
    %v1905 = vlaneseq
    %v1906 = vshrl.u32 %v1905, 7
    %v1907 = vsub.s32 %v1904, %v1906
    %v1908 = vrot.slane %v1892, %v1907
    %v1910 = vunpack.c.l.s4 1966171168
    %v1911 = vunpack.c.0.s8 %v1910
    %v1912 = vlaneseq
    %v1913 = vshrl.u32 %v1912, 7
    %v1914 = vsub.s32 %v1911, %v1913
    %v1915 = vrot.slane %v1899, %v1914
    %v1917 = vunpack.c.l.s4 1966171168
    %v1918 = vunpack.c.0.s8 %v1917
    %v1919 = vlaneseq
    %v1920 = vshrl.u32 %v1919, 7
    %v1921 = vsub.s32 %v1918, %v1920
    %v1922 = vrot.slane %v1900, %v1921
    %v1924 = vunpack.c.l.s4 1966171168
    %v1925 = vunpack.c.0.s8 %v1924
    %v1926 = vlaneseq
    %v1927 = vshrl.u32 %v1926, 7
    %v1928 = vsub.s32 %v1925, %v1927
    %v1929 = vrot.slane %v1901, %v1928
    %v1930 = vcombine.high %v1908, %v1908
    %v1931 = vcombine.high %v1915, %v1915
    %v1932 = vcombine.high %v1922, %v1922
    %v1933 = vcombine.high %v1929, %v1929
    %v1934 = vlaneseq
    %v1935 = vshrl.u32 %v1934, 7
    %v1936 = vsub.s32 0, %v1935
    %v1937 = vrot.slane %v1908, %v1936
    %v1938 = vlaneseq
    %v1939 = vshrl.u32 %v1938, 7
    %v1940 = vsub.s32 0, %v1939
    %v1941 = vrot.slane %v1922, %v1940
    %v1942 = vlaneseq
    %v1943 = vshrl.u32 %v1942, 7
    %v1944 = vsub.s32 0, %v1943
    %v1945 = vrot.slane %v1930, %v1944
    %v1946 = vlaneseq
    %v1947 = vshrl.u32 %v1946, 7
    %v1948 = vsub.s32 0, %v1947
    %v1949 = vrot.slane %v1932, %v1948
    %v1950 = vlaneseq
    %v1951 = vshrl.u32 %v1950, 7
    %v1952 = vsub.s32 0, %v1951
    %v1953 = vrot.slane %v1915, %v1952
    %v1954 = vlaneseq
    %v1955 = vshrl.u32 %v1954, 7
    %v1956 = vsub.s32 0, %v1955
    %v1957 = vrot.slane %v1929, %v1956
    %v1958 = vlaneseq
    %v1959 = vshrl.u32 %v1958, 7
    %v1960 = vsub.s32 0, %v1959
    %v1961 = vrot.slane %v1931, %v1960
    %v1962 = vlaneseq
    %v1963 = vshrl.u32 %v1962, 7
    %v1964 = vsub.s32 0, %v1963
    %v1965 = vrot.slane %v1933, %v1964
    %1975 = vrot.lane.b32.xlu0 %v1874, 32
    %v1976 = vpop.permute.xlu0 %1975
    %v1978 = vadd.f32 %v1937, %v1976
    %v1979 = vadd.f32 %v1941, %v1976
    %v1980 = vadd.f32 %v1945, %v1976
    %v1981 = vadd.f32 %v1949, %v1976
    %v1982 = vadd.f32 %v1953, %v1976
    %v1983 = vadd.f32 %v1957, %v1976
    %v1984 = vadd.f32 %v1961, %v1976
    %v1985 = vadd.f32 %v1965, %v1976
    %vm1986 = vcmp.gt.f32.partialorder %v1978, 0.0
    %vm1987 = vcmp.gt.f32.partialorder %v1979, 0.0
    %vm1988 = vcmp.gt.f32.partialorder %v1980, 0.0
    %vm1989 = vcmp.gt.f32.partialorder %v1981, 0.0
    %vm1990 = vcmp.gt.f32.partialorder %v1982, 0.0
    %vm1991 = vcmp.gt.f32.partialorder %v1983, 0.0
    %vm1992 = vcmp.gt.f32.partialorder %v1984, 0.0
    %vm1993 = vcmp.gt.f32.partialorder %v1985, 0.0
    %v1994 = vmul.f32 %v1978, 0.2
    %v1995 = vmul.f32 %v1979, 0.2
    %v1996 = vmul.f32 %v1980, 0.2
    %v1997 = vmul.f32 %v1981, 0.2
    %v1998 = vmul.f32 %v1982, 0.2
    %v1999 = vmul.f32 %v1983, 0.2
    %v2000 = vmul.f32 %v1984, 0.2
    %v2001 = vmul.f32 %v1985, 0.2
    %v2002 = vsel %vm1986, %v1978, %v1994
    %v2003 = vsel %vm1987, %v1979, %v1995
    %v2004 = vsel %vm1988, %v1980, %v1996
    %v2005 = vsel %vm1989, %v1981, %v1997
    %v2006 = vsel %vm1990, %v1982, %v1998
    %v2007 = vsel %vm1991, %v1983, %v1999
    %v2008 = vsel %vm1992, %v1984, %v2000
    %v2009 = vsel %vm1993, %v1985, %v2001
    %v2010 = vlaneseq
    %v2011 = vshrl.u32 %v2010, 7
    %v2012 = vsub.s32 2, %v2011
    %v2013 = vrot.slane %v1795, %v2012
    %2015 = vrot.lane.b32.xlu0 %v2013, 32
    %v2016 = vpop.permute.xlu0 %2015
    %v2018 = vmul.f32 %v2002, %v2016
    %v2019 = vmul.f32 %v2003, %v2016
    %v2020 = vmul.f32 %v2004, %v2016
    %v2021 = vmul.f32 %v2005, %v2016
    %v2022 = vmul.f32 %v2006, %v2016
    %v2023 = vmul.f32 %v2007, %v2016
    %v2024 = vmul.f32 %v2008, %v2016
    %v2025 = vmul.f32 %v2009, %v2016
    %2034 = vrot.lane.b32.xlu0 %v2018, 96
    %v2035 = vpop.permute.xlu0 %2034
    %2036 = vrot.lane.b32.xlu0 %v2019, 96
    %v2037 = vpop.permute.xlu0 %2036
    %2038 = vrot.lane.b32.xlu0 %v2020, 96
    %v2039 = vpop.permute.xlu0 %2038
    %2040 = vrot.lane.b32.xlu0 %v2021, 96
    %v2041 = vpop.permute.xlu0 %2040
    %2042 = vrot.lane.b32.xlu0 %v2022, 96
    %v2043 = vpop.permute.xlu0 %2042
    %2044 = vrot.lane.b32.xlu0 %v2023, 96
    %v2045 = vpop.permute.xlu0 %2044
    %2046 = vrot.lane.b32.xlu0 %v2024, 96
    %v2047 = vpop.permute.xlu0 %2046
    %2048 = vrot.lane.b32.xlu0 %v2025, 96
    %v2049 = vpop.permute.xlu0 %2048
    %v2058 = vsel %vm1796, %v2035, 0.0
    %2059 = vadd.xlane.f32.xlu0 %v2058
    %v2060 = vpop.xlane.xlu0 %2059
    %v2061 = vsel %vm1796, %v2037, 0.0
    %2062 = vadd.xlane.f32.xlu0 %v2061
    %v2063 = vpop.xlane.xlu0 %2062
    %v2064 = vsel %vm1796, %v2039, 0.0
    %2065 = vadd.xlane.f32.xlu0 %v2064
    %v2066 = vpop.xlane.xlu0 %2065
    %v2067 = vsel %vm1796, %v2041, 0.0
    %2068 = vadd.xlane.f32.xlu0 %v2067
    %v2069 = vpop.xlane.xlu0 %2068
    %v2070 = vsel %vm1796, %v2043, 0.0
    %2071 = vadd.xlane.f32.xlu0 %v2070
    %v2072 = vpop.xlane.xlu0 %2071
    %v2073 = vsel %vm1796, %v2045, 0.0
    %2074 = vadd.xlane.f32.xlu0 %v2073
    %v2075 = vpop.xlane.xlu0 %2074
    %v2076 = vsel %vm1796, %v2047, 0.0
    %2077 = vadd.xlane.f32.xlu0 %v2076
    %v2078 = vpop.xlane.xlu0 %2077
    %v2079 = vsel %vm1796, %v2049, 0.0
    %2080 = vadd.xlane.f32.xlu0 %v2079
    %v2081 = vpop.xlane.xlu0 %2080
    %v2090 = vlaneseq
    %v2091 = vshrl.u32 %v2090, 7
    %v2092 = vsub.s32 %v1529, %v2091
    %v2093 = vrot.slane %v2060, %v2092
    %v2094 = vlaneseq
    %v2095 = vshrl.u32 %v2094, 7
    %v2096 = vsub.s32 %v1529, %v2095
    %v2097 = vrot.slane %v2063, %v2096
    %v2098 = vlaneseq
    %v2099 = vshrl.u32 %v2098, 7
    %v2100 = vsub.s32 %v1529, %v2099
    %v2101 = vrot.slane %v2066, %v2100
    %v2102 = vlaneseq
    %v2103 = vshrl.u32 %v2102, 7
    %v2104 = vsub.s32 %v1529, %v2103
    %v2105 = vrot.slane %v2069, %v2104
    %v2106 = vlaneseq
    %v2107 = vshrl.u32 %v2106, 7
    %v2108 = vsub.s32 %v1529, %v2107
    %v2109 = vrot.slane %v2072, %v2108
    %v2110 = vlaneseq
    %v2111 = vshrl.u32 %v2110, 7
    %v2112 = vsub.s32 %v1529, %v2111
    %v2113 = vrot.slane %v2075, %v2112
    %v2114 = vlaneseq
    %v2115 = vshrl.u32 %v2114, 7
    %v2116 = vsub.s32 %v1529, %v2115
    %v2117 = vrot.slane %v2078, %v2116
    %v2118 = vlaneseq
    %v2119 = vshrl.u32 %v2118, 7
    %v2120 = vsub.s32 %v1529, %v2119
    %v2121 = vrot.slane %v2081, %v2120
    %vm2122 = vcmask 1041409
    %v2123 = vsel %vm2122, %v2097, %v2093
    %vm2124 = vcmask 1042434
    %v2125 = vsel %vm2124, %v2101, %v2123
    %vm2126 = vcmask 1043459
    %v2127 = vsel %vm2126, %v2105, %v2125
    %vm2128 = vcmask 1044484
    %v2129 = vsel %vm2128, %v2109, %v2127
    %vm2130 = vcmask 1045509
    %v2131 = vsel %vm2130, %v2113, %v2129
    %vm2132 = vcmask 1046534
    %v2133 = vsel %vm2132, %v2117, %v2131
    %vm2134 = vcmask 1047559
    %v2135 = vsel %vm2134, %v2121, %v2133
    %vm2137 = vcmask 64512
    %v2138 = vsel %vm2137, %v2135, -inf
    %2139 = vmax.xlane.f32.xlu0 %v2138
    %v2140 = vpop.xlane.xlu0 %2139
    %v2142 = vlaneseq
    %v2143 = vshrl.u32 %v2142, 7
    %v2144 = vsub.s32 0, %v2143
    %v2145 = vrot.slane %v2140, %v2144
    %v2146 = vlaneseq
    %v2147 = vshrl.u32 %v2146, 7
    %v2148 = vsub.s32 1, %v2147
    %v2149 = vrot.slane %v2140, %v2148
    %v2150 = vlaneseq
    %v2151 = vshrl.u32 %v2150, 7
    %v2152 = vsub.s32 2, %v2151
    %v2153 = vrot.slane %v2140, %v2152
    %v2154 = vlaneseq
    %v2155 = vshrl.u32 %v2154, 7
    %v2156 = vsub.s32 3, %v2155
    %v2157 = vrot.slane %v2140, %v2156
    %v2158 = vlaneseq
    %v2159 = vshrl.u32 %v2158, 7
    %v2160 = vsub.s32 4, %v2159
    %v2161 = vrot.slane %v2140, %v2160
    %v2162 = vlaneseq
    %v2163 = vshrl.u32 %v2162, 7
    %v2164 = vsub.s32 5, %v2163
    %v2165 = vrot.slane %v2140, %v2164
    %v2166 = vlaneseq
    %v2167 = vshrl.u32 %v2166, 7
    %v2168 = vsub.s32 6, %v2167
    %v2169 = vrot.slane %v2140, %v2168
    %v2170 = vlaneseq
    %v2171 = vshrl.u32 %v2170, 7
    %v2172 = vsub.s32 7, %v2171
    %v2173 = vrot.slane %v2140, %v2172
    %v2182 = vsub.f32 %v2060, %v2145
    %v2183 = vsub.f32 %v2063, %v2149
    %v2184 = vsub.f32 %v2066, %v2153
    %v2185 = vsub.f32 %v2069, %v2157
    %v2186 = vsub.f32 %v2072, %v2161
    %v2187 = vsub.f32 %v2075, %v2165
    %v2188 = vsub.f32 %v2078, %v2169
    %v2189 = vsub.f32 %v2081, %v2173
    %v2190 = vmul.f32 %v2182, 1.442695
    %v2191 = vpow.pop %v2190
    %v2192 = vmul.f32 %v2183, 1.442695
    %v2193 = vpow.pop %v2192
    %v2194 = vmul.f32 %v2184, 1.442695
    %v2195 = vpow.pop %v2194
    %v2196 = vmul.f32 %v2185, 1.442695
    %v2197 = vpow.pop %v2196
    %v2198 = vmul.f32 %v2186, 1.442695
    %v2199 = vpow.pop %v2198
    %v2200 = vmul.f32 %v2187, 1.442695
    %v2201 = vpow.pop %v2200
    %v2202 = vmul.f32 %v2188, 1.442695
    %v2203 = vpow.pop %v2202
    %v2204 = vmul.f32 %v2189, 1.442695
    %v2205 = vpow.pop %v2204
    %2214 = vset.pattern.permute.xlu0 0
    %2215 = vperm.xlu0 %2214, %v2191
    %v2216 = vpop.permute.xlu0 %2215
    %2217 = vset.pattern.permute.xlu0 0
    %2218 = vperm.xlu0 %2217, %v2193
    %v2219 = vpop.permute.xlu0 %2218
    %2220 = vset.pattern.permute.xlu0 0
    %2221 = vperm.xlu0 %2220, %v2195
    %v2222 = vpop.permute.xlu0 %2221
    %2223 = vset.pattern.permute.xlu0 0
    %2224 = vperm.xlu0 %2223, %v2197
    %v2225 = vpop.permute.xlu0 %2224
    %2226 = vset.pattern.permute.xlu0 0
    %2227 = vperm.xlu0 %2226, %v2199
    %v2228 = vpop.permute.xlu0 %2227
    %2229 = vset.pattern.permute.xlu0 0
    %2230 = vperm.xlu0 %2229, %v2201
    %v2231 = vpop.permute.xlu0 %2230
    %2232 = vset.pattern.permute.xlu0 0
    %2233 = vperm.xlu0 %2232, %v2203
    %v2234 = vpop.permute.xlu0 %2233
    %2235 = vset.pattern.permute.xlu0 0
    %2236 = vperm.xlu0 %2235, %v2205
    %v2237 = vpop.permute.xlu0 %2236
    %v2238 = vlaneseq
    %v2239 = vshrl.u32 %v2238, 7
    %v2240 = vsub.s32 %v1529, %v2239
    %v2241 = vrot.slane %v2216, %v2240
    %v2242 = vlaneseq
    %v2243 = vshrl.u32 %v2242, 7
    %v2244 = vsub.s32 %v1529, %v2243
    %v2245 = vrot.slane %v2219, %v2244
    %v2246 = vlaneseq
    %v2247 = vshrl.u32 %v2246, 7
    %v2248 = vsub.s32 %v1529, %v2247
    %v2249 = vrot.slane %v2222, %v2248
    %v2250 = vlaneseq
    %v2251 = vshrl.u32 %v2250, 7
    %v2252 = vsub.s32 %v1529, %v2251
    %v2253 = vrot.slane %v2225, %v2252
    %v2254 = vlaneseq
    %v2255 = vshrl.u32 %v2254, 7
    %v2256 = vsub.s32 %v1529, %v2255
    %v2257 = vrot.slane %v2228, %v2256
    %v2258 = vlaneseq
    %v2259 = vshrl.u32 %v2258, 7
    %v2260 = vsub.s32 %v1529, %v2259
    %v2261 = vrot.slane %v2231, %v2260
    %v2262 = vlaneseq
    %v2263 = vshrl.u32 %v2262, 7
    %v2264 = vsub.s32 %v1529, %v2263
    %v2265 = vrot.slane %v2234, %v2264
    %v2266 = vlaneseq
    %v2267 = vshrl.u32 %v2266, 7
    %v2268 = vsub.s32 %v1529, %v2267
    %v2269 = vrot.slane %v2237, %v2268
    %v2270 = vsel %vm2122, %v2245, %v2241
    %v2271 = vsel %vm2124, %v2249, %v2270
    %v2272 = vsel %vm2126, %v2253, %v2271
    %v2273 = vsel %vm2128, %v2257, %v2272
    %v2274 = vsel %vm2130, %v2261, %v2273
    %v2275 = vsel %vm2132, %v2265, %v2274
    %v2276 = vsel %vm2134, %v2269, %v2275
    %v2278 = vsel %vm2137, %v2276, 0.0
    %2279 = vadd.xlane.f32.xlu0 %v2278
    %v2280 = vpop.xlane.xlu0 %2279
    %v2282 = vlaneseq
    %v2283 = vshrl.u32 %v2282, 7
    %v2284 = vsub.s32 0, %v2283
    %v2285 = vrot.slane %v2280, %v2284
    %v2286 = vlaneseq
    %v2287 = vshrl.u32 %v2286, 7
    %v2288 = vsub.s32 1, %v2287
    %v2289 = vrot.slane %v2280, %v2288
    %v2290 = vlaneseq
    %v2291 = vshrl.u32 %v2290, 7
    %v2292 = vsub.s32 2, %v2291
    %v2293 = vrot.slane %v2280, %v2292
    %v2294 = vlaneseq
    %v2295 = vshrl.u32 %v2294, 7
    %v2296 = vsub.s32 3, %v2295
    %v2297 = vrot.slane %v2280, %v2296
    %v2298 = vlaneseq
    %v2299 = vshrl.u32 %v2298, 7
    %v2300 = vsub.s32 4, %v2299
    %v2301 = vrot.slane %v2280, %v2300
    %v2302 = vlaneseq
    %v2303 = vshrl.u32 %v2302, 7
    %v2304 = vsub.s32 5, %v2303
    %v2305 = vrot.slane %v2280, %v2304
    %v2306 = vlaneseq
    %v2307 = vshrl.u32 %v2306, 7
    %v2308 = vsub.s32 6, %v2307
    %v2309 = vrot.slane %v2280, %v2308
    %v2310 = vlaneseq
    %v2311 = vshrl.u32 %v2310, 7
    %v2312 = vsub.s32 7, %v2311
    %v2313 = vrot.slane %v2280, %v2312
    %v2322 = vrcp.pop %v2285
    %v2323 = vmul.f32 %v2191, %v2322
    %v2324 = vrcp.pop %v2289
    %v2325 = vmul.f32 %v2193, %v2324
    %v2326 = vrcp.pop %v2293
    %v2327 = vmul.f32 %v2195, %v2326
    %v2328 = vrcp.pop %v2297
    %v2329 = vmul.f32 %v2197, %v2328
    %v2330 = vrcp.pop %v2301
    %v2331 = vmul.f32 %v2199, %v2330
    %v2332 = vrcp.pop %v2305
    %v2333 = vmul.f32 %v2201, %v2332
    %v2334 = vrcp.pop %v2309
    %v2335 = vmul.f32 %v2203, %v2334
    %v2336 = vrcp.pop %v2313
    %v2337 = vmul.f32 %v2205, %v2336
    %v2338 = vlaneseq
    %v2339 = vshrl.u32 %v2338, 7
    %v2340 = vsub.s32 3, %v2339
    %v2341 = vrot.slane %v1795, %v2340
    %2350 = vset.pattern.permute.xlu0 0
    %2351 = vperm.xlu0 %2350, %v2323
    %v2352 = vpop.permute.xlu0 %2351
    %2353 = vset.pattern.permute.xlu0 0
    %2354 = vperm.xlu0 %2353, %v2325
    %v2355 = vpop.permute.xlu0 %2354
    %2356 = vset.pattern.permute.xlu0 0
    %2357 = vperm.xlu0 %2356, %v2327
    %v2358 = vpop.permute.xlu0 %2357
    %2359 = vset.pattern.permute.xlu0 0
    %2360 = vperm.xlu0 %2359, %v2329
    %v2361 = vpop.permute.xlu0 %2360
    %2362 = vset.pattern.permute.xlu0 0
    %2363 = vperm.xlu0 %2362, %v2331
    %v2364 = vpop.permute.xlu0 %2363
    %2365 = vset.pattern.permute.xlu0 0
    %2366 = vperm.xlu0 %2365, %v2333
    %v2367 = vpop.permute.xlu0 %2366
    %2368 = vset.pattern.permute.xlu0 0
    %2369 = vperm.xlu0 %2368, %v2335
    %v2370 = vpop.permute.xlu0 %2369
    %2371 = vset.pattern.permute.xlu0 0
    %2372 = vperm.xlu0 %2371, %v2337
    %v2373 = vpop.permute.xlu0 %2372
    %v2374 = vlaneseq
    %v2375 = vshrl.u32 %v2374, 7
    %v2376 = vsub.s32 %v1529, %v2375
    %v2377 = vrot.slane %v2352, %v2376
    %v2378 = vlaneseq
    %v2379 = vshrl.u32 %v2378, 7
    %v2380 = vsub.s32 %v1529, %v2379
    %v2381 = vrot.slane %v2355, %v2380
    %v2382 = vlaneseq
    %v2383 = vshrl.u32 %v2382, 7
    %v2384 = vsub.s32 %v1529, %v2383
    %v2385 = vrot.slane %v2358, %v2384
    %v2386 = vlaneseq
    %v2387 = vshrl.u32 %v2386, 7
    %v2388 = vsub.s32 %v1529, %v2387
    %v2389 = vrot.slane %v2361, %v2388
    %v2390 = vlaneseq
    %v2391 = vshrl.u32 %v2390, 7
    %v2392 = vsub.s32 %v1529, %v2391
    %v2393 = vrot.slane %v2364, %v2392
    %v2394 = vlaneseq
    %v2395 = vshrl.u32 %v2394, 7
    %v2396 = vsub.s32 %v1529, %v2395
    %v2397 = vrot.slane %v2367, %v2396
    %v2398 = vlaneseq
    %v2399 = vshrl.u32 %v2398, 7
    %v2400 = vsub.s32 %v1529, %v2399
    %v2401 = vrot.slane %v2370, %v2400
    %v2402 = vlaneseq
    %v2403 = vshrl.u32 %v2402, 7
    %v2404 = vsub.s32 %v1529, %v2403
    %v2405 = vrot.slane %v2373, %v2404
    %v2406 = vsel %vm2122, %v2381, %v2377
    %v2407 = vsel %vm2124, %v2385, %v2406
    %v2408 = vsel %vm2126, %v2389, %v2407
    %v2409 = vsel %vm2128, %v2393, %v2408
    %v2410 = vsel %vm2130, %v2397, %v2409
    %v2411 = vsel %vm2132, %v2401, %v2410
    %v2412 = vsel %vm2134, %v2405, %v2411
    %v2413 = vsel %vm2137, %v2412, 0
    %2415 = vmatprep.subr.mxu0 0.0
    %2416 = vmatpush1.msra.mxu0 %v1874
    %2417 = vmatprep.subr.mxu0 0.0
    %2418 = vmatpush1.msra.mxu0 0.0
    %2419 = vmatprep.subr.mxu0 0.0
    %2420 = vmatpush1.msra.mxu0 0.0
    %2421 = vmatprep.subr.mxu0 0.0
    %2422 = vmatpush1.msra.mxu0 0.0
    %2423 = vmatprep.subr.mxu0 0.0
    %2424 = vmatpush1.msra.mxu0 0.0
    %2425 = vmatprep.subr.mxu0 0.0
    %2426 = vmatpush1.msra.mxu0 0.0
    %2427 = vmatprep.subr.mxu0 0.0
    %2428 = vmatpush1.msra.mxu0 0.0
    %2429 = vmatprep.subr.mxu0 0.0
    %2430 = vmatpush1.msra.mxu0 0.0
    %2431 = vmatprep.subr.mxu0 0.0
    %2432 = vmatpush1.msra.mxu0 0.0
    %2433 = vmatprep.subr.mxu0 0.0
    %2434 = vmatpush1.msra.mxu0 0.0
    %2435 = vmatprep.subr.mxu0 0.0
    %2436 = vmatpush1.msra.mxu0 0.0
    %2437 = vmatprep.subr.mxu0 0.0
    %2438 = vmatpush1.msra.mxu0 0.0
    %2439 = vmatprep.subr.mxu0 0.0
    %2440 = vmatpush1.msra.mxu0 0.0
    %2441 = vmatprep.subr.mxu0 0.0
    %2442 = vmatpush1.msra.mxu0 0.0
    %2443 = vmatprep.subr.mxu0 0.0
    %2444 = vmatpush1.msra.mxu0 0.0
    %2445 = vmatprep.subr.mxu0 0.0
    %2446 = vmatpush1.msra.mxu0 0.0
    %2447 = vmatprep.subr.mxu0 0.0
    %2448 = vmatpush1.msra.mxu0 0.0
    %2449 = vmatprep.subr.mxu0 0.0
    %2450 = vmatpush1.msra.mxu0 0.0
    %2451 = vmatprep.subr.mxu0 0.0
    %2452 = vmatpush1.msra.mxu0 0.0
    %2453 = vmatprep.subr.mxu0 0.0
    %2454 = vmatpush1.msra.mxu0 0.0
    %2455 = vmatprep.subr.mxu0 0.0
    %2456 = vmatpush1.msra.mxu0 0.0
    %2457 = vmatprep.subr.mxu0 0.0
    %2458 = vmatpush1.msra.mxu0 0.0
    %2459 = vmatprep.subr.mxu0 0.0
    %2460 = vmatpush1.msra.mxu0 0.0
    %2461 = vmatprep.subr.mxu0 0.0
    %2462 = vmatpush1.msra.mxu0 0.0
    %2463 = vmatprep.subr.mxu0 0.0
    %2464 = vmatpush1.msra.mxu0 0.0
    %2465 = vmatprep.subr.mxu0 0.0
    %2466 = vmatpush1.msra.mxu0 0.0
    %2467 = vmatprep.subr.mxu0 0.0
    %2468 = vmatpush1.msra.mxu0 0.0
    %2469 = vmatprep.subr.mxu0 0.0
    %2470 = vmatpush1.msra.mxu0 0.0
    %2471 = vmatprep.subr.mxu0 0.0
    %2472 = vmatpush1.msra.mxu0 0.0
    %2473 = vmatprep.subr.mxu0 0.0
    %2474 = vmatpush1.msra.mxu0 0.0
    %2475 = vmatprep.subr.mxu0 0.0
    %2476 = vmatpush1.msra.mxu0 0.0
    %2477 = vmatprep.subr.mxu0 0.0
    %2478 = vmatpush1.msra.mxu0 0.0
    %2479 = vmatprep.mubr.f32.mxu0 0.0
    %2480 = vmatmul.mubr.f32.gmra.mrb[0].mxu0 %v2413
    %v2481 = vpop.f32.mrb[0].mxu0
    %v2482 = vadd.f32 %v2341, %v2481
    %v2483 = vpop.f32.mrb[0].mxu0
    %2484 = vdwg.mxu0
    %v2485 = vmax.f32 %v2482, 0.0
    %s2486 = scalar_lea.vmem %s6, 32
    %v2487 = vld [vmem:[%s2486] sm:$0xff]
    %v2488 = vld [vmem:[%s2486 + $0x8] sm:$0xff]
    %v2489 = vld [vmem:[%s2486 + $0x10] sm:$0xff]
    %v2490 = vld [vmem:[%s2486 + $0x18] sm:$0xff]
    %s2491 = scalar_lea.vmem %s7, 4
    %v2492 = vld [vmem:[%s2491] sm:$0xf]
    %v2494 = vsel %vm1796, %v2485, 0
    %2496 = vmatprep.subr.mxu0 0.0
    %2497 = vmatpush1.msra.mxu0 %v2487
    %2498 = vmatprep.subr.mxu0 0.0
    %2499 = vmatpush1.msra.mxu0 %v2488
    %2500 = vmatprep.subr.mxu0 0.0
    %2501 = vmatpush1.msra.mxu0 %v2489
    %2502 = vmatprep.subr.mxu0 0.0
    %2503 = vmatpush1.msra.mxu0 %v2490
    %2504 = vmatprep.subr.mxu0 0.0
    %2505 = vmatpush1.msra.mxu0 0.0
    %2506 = vmatprep.subr.mxu0 0.0
    %2507 = vmatpush1.msra.mxu0 0.0
    %2508 = vmatprep.subr.mxu0 0.0
    %2509 = vmatpush1.msra.mxu0 0.0
    %2510 = vmatprep.subr.mxu0 0.0
    %2511 = vmatpush1.msra.mxu0 0.0
    %2512 = vmatprep.subr.mxu0 0.0
    %2513 = vmatpush1.msra.mxu0 0.0
    %2514 = vmatprep.subr.mxu0 0.0
    %2515 = vmatpush1.msra.mxu0 0.0
    %2516 = vmatprep.subr.mxu0 0.0
    %2517 = vmatpush1.msra.mxu0 0.0
    %2518 = vmatprep.subr.mxu0 0.0
    %2519 = vmatpush1.msra.mxu0 0.0
    %2520 = vmatprep.subr.mxu0 0.0
    %2521 = vmatpush1.msra.mxu0 0.0
    %2522 = vmatprep.subr.mxu0 0.0
    %2523 = vmatpush1.msra.mxu0 0.0
    %2524 = vmatprep.subr.mxu0 0.0
    %2525 = vmatpush1.msra.mxu0 0.0
    %2526 = vmatprep.subr.mxu0 0.0
    %2527 = vmatpush1.msra.mxu0 0.0
    %2528 = vmatprep.subr.mxu0 0.0
    %2529 = vmatpush1.msra.mxu0 0.0
    %2530 = vmatprep.subr.mxu0 0.0
    %2531 = vmatpush1.msra.mxu0 0.0
    %2532 = vmatprep.subr.mxu0 0.0
    %2533 = vmatpush1.msra.mxu0 0.0
    %2534 = vmatprep.subr.mxu0 0.0
    %2535 = vmatpush1.msra.mxu0 0.0
    %2536 = vmatprep.subr.mxu0 0.0
    %2537 = vmatpush1.msra.mxu0 0.0
    %2538 = vmatprep.subr.mxu0 0.0
    %2539 = vmatpush1.msra.mxu0 0.0
    %2540 = vmatprep.subr.mxu0 0.0
    %2541 = vmatpush1.msra.mxu0 0.0
    %2542 = vmatprep.subr.mxu0 0.0
    %2543 = vmatpush1.msra.mxu0 0.0
    %2544 = vmatprep.subr.mxu0 0.0
    %2545 = vmatpush1.msra.mxu0 0.0
    %2546 = vmatprep.subr.mxu0 0.0
    %2547 = vmatpush1.msra.mxu0 0.0
    %2548 = vmatprep.subr.mxu0 0.0
    %2549 = vmatpush1.msra.mxu0 0.0
    %2550 = vmatprep.subr.mxu0 0.0
    %2551 = vmatpush1.msra.mxu0 0.0
    %2552 = vmatprep.subr.mxu0 0.0
    %2553 = vmatpush1.msra.mxu0 0.0
    %2554 = vmatprep.subr.mxu0 0.0
    %2555 = vmatpush1.msra.mxu0 0.0
    %2556 = vmatprep.subr.mxu0 0.0
    %2557 = vmatpush1.msra.mxu0 0.0
    %2558 = vmatprep.subr.mxu0 0.0
    %2559 = vmatpush1.msra.mxu0 0.0
    %2560 = vmatprep.mubr.f32.mxu0 0.0
    %2561 = vmatmul.mubr.f32.gmra.mrb[0].mxu0 %v2494
    %v2562 = vpop.f32.mrb[0].mxu0
    %v2563 = vadd.f32 0.0, %v2562
    %v2564 = vpop.f32.mrb[0].mxu0
    %2565 = vdwg.mxu0
    %v2566 = vlaneseq
    %v2567 = vshrl.u32 %v2566, 7
    %v2568 = vsub.s32 0, %v2567
    %v2569 = vrot.slane %v2492, %v2568
    %v2570 = vadd.f32 %v2563, %v2569
    %v2571 = vlaneseq
    %v2572 = vshrl.u32 %v2571, 7
    %v2573 = vsub.s32 1, %v2572
    %v2574 = vrot.slane %v2492, %v2573
    %2576 = vrot.lane.b32.xlu0 %v2574, 32
    %v2577 = vpop.permute.xlu0 %2576
    %v2579 = vadd.f32 %v2563, %v2577
    %v2581 = vcombine.high %v2579, %v2579
    %v2583 = vunpack.c.l.s4 1966171168
    %v2584 = vunpack.c.0.s8 %v2583
    %v2585 = vlaneseq
    %v2586 = vshrl.u32 %v2585, 7
    %v2587 = vsub.s32 %v2584, %v2586
    %v2588 = vrot.slane %v2579, %v2587
    %v2590 = vunpack.c.l.s4 1966171168
    %v2591 = vunpack.c.0.s8 %v2590
    %v2592 = vlaneseq
    %v2593 = vshrl.u32 %v2592, 7
    %v2594 = vsub.s32 %v2591, %v2593
    %v2595 = vrot.slane %v2581, %v2594
    %v2596 = vcombine.high %v2588, %v2588
    %v2597 = vcombine.high %v2595, %v2595
    %v2599 = vunpack.c.l.s4 1966171168
    %v2600 = vunpack.c.0.s8 %v2599
    %v2601 = vlaneseq
    %v2602 = vshrl.u32 %v2601, 7
    %v2603 = vsub.s32 %v2600, %v2602
    %v2604 = vrot.slane %v2588, %v2603
    %v2606 = vunpack.c.l.s4 1966171168
    %v2607 = vunpack.c.0.s8 %v2606
    %v2608 = vlaneseq
    %v2609 = vshrl.u32 %v2608, 7
    %v2610 = vsub.s32 %v2607, %v2609
    %v2611 = vrot.slane %v2595, %v2610
    %v2613 = vunpack.c.l.s4 1966171168
    %v2614 = vunpack.c.0.s8 %v2613
    %v2615 = vlaneseq
    %v2616 = vshrl.u32 %v2615, 7
    %v2617 = vsub.s32 %v2614, %v2616
    %v2618 = vrot.slane %v2596, %v2617
    %v2620 = vunpack.c.l.s4 1966171168
    %v2621 = vunpack.c.0.s8 %v2620
    %v2622 = vlaneseq
    %v2623 = vshrl.u32 %v2622, 7
    %v2624 = vsub.s32 %v2621, %v2623
    %v2625 = vrot.slane %v2597, %v2624
    %v2626 = vcombine.high %v2604, %v2604
    %v2627 = vcombine.high %v2611, %v2611
    %v2628 = vcombine.high %v2618, %v2618
    %v2629 = vcombine.high %v2625, %v2625
    %v2630 = vlaneseq
    %v2631 = vshrl.u32 %v2630, 7
    %v2632 = vsub.s32 0, %v2631
    %v2633 = vrot.slane %v2604, %v2632
    %v2634 = vlaneseq
    %v2635 = vshrl.u32 %v2634, 7
    %v2636 = vsub.s32 0, %v2635
    %v2637 = vrot.slane %v2618, %v2636
    %v2638 = vlaneseq
    %v2639 = vshrl.u32 %v2638, 7
    %v2640 = vsub.s32 0, %v2639
    %v2641 = vrot.slane %v2626, %v2640
    %v2642 = vlaneseq
    %v2643 = vshrl.u32 %v2642, 7
    %v2644 = vsub.s32 0, %v2643
    %v2645 = vrot.slane %v2628, %v2644
    %v2646 = vlaneseq
    %v2647 = vshrl.u32 %v2646, 7
    %v2648 = vsub.s32 0, %v2647
    %v2649 = vrot.slane %v2611, %v2648
    %v2650 = vlaneseq
    %v2651 = vshrl.u32 %v2650, 7
    %v2652 = vsub.s32 0, %v2651
    %v2653 = vrot.slane %v2625, %v2652
    %v2654 = vlaneseq
    %v2655 = vshrl.u32 %v2654, 7
    %v2656 = vsub.s32 0, %v2655
    %v2657 = vrot.slane %v2627, %v2656
    %v2658 = vlaneseq
    %v2659 = vshrl.u32 %v2658, 7
    %v2660 = vsub.s32 0, %v2659
    %v2661 = vrot.slane %v2629, %v2660
    %2671 = vrot.lane.b32.xlu0 %v2570, 32
    %v2672 = vpop.permute.xlu0 %2671
    %v2674 = vadd.f32 %v2633, %v2672
    %v2675 = vadd.f32 %v2637, %v2672
    %v2676 = vadd.f32 %v2641, %v2672
    %v2677 = vadd.f32 %v2645, %v2672
    %v2678 = vadd.f32 %v2649, %v2672
    %v2679 = vadd.f32 %v2653, %v2672
    %v2680 = vadd.f32 %v2657, %v2672
    %v2681 = vadd.f32 %v2661, %v2672
    %vm2682 = vcmp.gt.f32.partialorder %v2674, 0.0
    %vm2683 = vcmp.gt.f32.partialorder %v2675, 0.0
    %vm2684 = vcmp.gt.f32.partialorder %v2676, 0.0
    %vm2685 = vcmp.gt.f32.partialorder %v2677, 0.0
    %vm2686 = vcmp.gt.f32.partialorder %v2678, 0.0
    %vm2687 = vcmp.gt.f32.partialorder %v2679, 0.0
    %vm2688 = vcmp.gt.f32.partialorder %v2680, 0.0
    %vm2689 = vcmp.gt.f32.partialorder %v2681, 0.0
    %v2690 = vmul.f32 %v2674, 0.2
    %v2691 = vmul.f32 %v2675, 0.2
    %v2692 = vmul.f32 %v2676, 0.2
    %v2693 = vmul.f32 %v2677, 0.2
    %v2694 = vmul.f32 %v2678, 0.2
    %v2695 = vmul.f32 %v2679, 0.2
    %v2696 = vmul.f32 %v2680, 0.2
    %v2697 = vmul.f32 %v2681, 0.2
    %v2698 = vsel %vm2682, %v2674, %v2690
    %v2699 = vsel %vm2683, %v2675, %v2691
    %v2700 = vsel %vm2684, %v2676, %v2692
    %v2701 = vsel %vm2685, %v2677, %v2693
    %v2702 = vsel %vm2686, %v2678, %v2694
    %v2703 = vsel %vm2687, %v2679, %v2695
    %v2704 = vsel %vm2688, %v2680, %v2696
    %v2705 = vsel %vm2689, %v2681, %v2697
    %v2706 = vlaneseq
    %v2707 = vshrl.u32 %v2706, 7
    %v2708 = vsub.s32 2, %v2707
    %v2709 = vrot.slane %v2492, %v2708
    %2711 = vrot.lane.b32.xlu0 %v2709, 32
    %v2712 = vpop.permute.xlu0 %2711
    %v2714 = vmul.f32 %v2698, %v2712
    %v2715 = vmul.f32 %v2699, %v2712
    %v2716 = vmul.f32 %v2700, %v2712
    %v2717 = vmul.f32 %v2701, %v2712
    %v2718 = vmul.f32 %v2702, %v2712
    %v2719 = vmul.f32 %v2703, %v2712
    %v2720 = vmul.f32 %v2704, %v2712
    %v2721 = vmul.f32 %v2705, %v2712
    %2730 = vrot.lane.b32.xlu0 %v2714, 96
    %v2731 = vpop.permute.xlu0 %2730
    %2732 = vrot.lane.b32.xlu0 %v2715, 96
    %v2733 = vpop.permute.xlu0 %2732
    %2734 = vrot.lane.b32.xlu0 %v2716, 96
    %v2735 = vpop.permute.xlu0 %2734
    %2736 = vrot.lane.b32.xlu0 %v2717, 96
    %v2737 = vpop.permute.xlu0 %2736
    %2738 = vrot.lane.b32.xlu0 %v2718, 96
    %v2739 = vpop.permute.xlu0 %2738
    %2740 = vrot.lane.b32.xlu0 %v2719, 96
    %v2741 = vpop.permute.xlu0 %2740
    %2742 = vrot.lane.b32.xlu0 %v2720, 96
    %v2743 = vpop.permute.xlu0 %2742
    %2744 = vrot.lane.b32.xlu0 %v2721, 96
    %v2745 = vpop.permute.xlu0 %2744
    %v2754 = vsel %vm1796, %v2731, 0.0
    %2755 = vadd.xlane.f32.xlu0 %v2754
    %v2756 = vpop.xlane.xlu0 %2755
    %v2757 = vsel %vm1796, %v2733, 0.0
    %2758 = vadd.xlane.f32.xlu0 %v2757
    %v2759 = vpop.xlane.xlu0 %2758
    %v2760 = vsel %vm1796, %v2735, 0.0
    %2761 = vadd.xlane.f32.xlu0 %v2760
    %v2762 = vpop.xlane.xlu0 %2761
    %v2763 = vsel %vm1796, %v2737, 0.0
    %2764 = vadd.xlane.f32.xlu0 %v2763
    %v2765 = vpop.xlane.xlu0 %2764
    %v2766 = vsel %vm1796, %v2739, 0.0
    %2767 = vadd.xlane.f32.xlu0 %v2766
    %v2768 = vpop.xlane.xlu0 %2767
    %v2769 = vsel %vm1796, %v2741, 0.0
    %2770 = vadd.xlane.f32.xlu0 %v2769
    %v2771 = vpop.xlane.xlu0 %2770
    %v2772 = vsel %vm1796, %v2743, 0.0
    %2773 = vadd.xlane.f32.xlu0 %v2772
    %v2774 = vpop.xlane.xlu0 %2773
    %v2775 = vsel %vm1796, %v2745, 0.0
    %2776 = vadd.xlane.f32.xlu0 %v2775
    %v2777 = vpop.xlane.xlu0 %2776
    %v2786 = vlaneseq
    %v2787 = vshrl.u32 %v2786, 7
    %v2788 = vsub.s32 %v1529, %v2787
    %v2789 = vrot.slane %v2756, %v2788
    %v2790 = vlaneseq
    %v2791 = vshrl.u32 %v2790, 7
    %v2792 = vsub.s32 %v1529, %v2791
    %v2793 = vrot.slane %v2759, %v2792
    %v2794 = vlaneseq
    %v2795 = vshrl.u32 %v2794, 7
    %v2796 = vsub.s32 %v1529, %v2795
    %v2797 = vrot.slane %v2762, %v2796
    %v2798 = vlaneseq
    %v2799 = vshrl.u32 %v2798, 7
    %v2800 = vsub.s32 %v1529, %v2799
    %v2801 = vrot.slane %v2765, %v2800
    %v2802 = vlaneseq
    %v2803 = vshrl.u32 %v2802, 7
    %v2804 = vsub.s32 %v1529, %v2803
    %v2805 = vrot.slane %v2768, %v2804
    %v2806 = vlaneseq
    %v2807 = vshrl.u32 %v2806, 7
    %v2808 = vsub.s32 %v1529, %v2807
    %v2809 = vrot.slane %v2771, %v2808
    %v2810 = vlaneseq
    %v2811 = vshrl.u32 %v2810, 7
    %v2812 = vsub.s32 %v1529, %v2811
    %v2813 = vrot.slane %v2774, %v2812
    %v2814 = vlaneseq
    %v2815 = vshrl.u32 %v2814, 7
    %v2816 = vsub.s32 %v1529, %v2815
    %v2817 = vrot.slane %v2777, %v2816
    %v2818 = vsel %vm2122, %v2793, %v2789
    %v2819 = vsel %vm2124, %v2797, %v2818
    %v2820 = vsel %vm2126, %v2801, %v2819
    %v2821 = vsel %vm2128, %v2805, %v2820
    %v2822 = vsel %vm2130, %v2809, %v2821
    %v2823 = vsel %vm2132, %v2813, %v2822
    %v2824 = vsel %vm2134, %v2817, %v2823
    %v2826 = vsel %vm2137, %v2824, -inf
    %2827 = vmax.xlane.f32.xlu0 %v2826
    %v2828 = vpop.xlane.xlu0 %2827
    %v2830 = vlaneseq
    %v2831 = vshrl.u32 %v2830, 7
    %v2832 = vsub.s32 0, %v2831
    %v2833 = vrot.slane %v2828, %v2832
    %v2834 = vlaneseq
    %v2835 = vshrl.u32 %v2834, 7
    %v2836 = vsub.s32 1, %v2835
    %v2837 = vrot.slane %v2828, %v2836
    %v2838 = vlaneseq
    %v2839 = vshrl.u32 %v2838, 7
    %v2840 = vsub.s32 2, %v2839
    %v2841 = vrot.slane %v2828, %v2840
    %v2842 = vlaneseq
    %v2843 = vshrl.u32 %v2842, 7
    %v2844 = vsub.s32 3, %v2843
    %v2845 = vrot.slane %v2828, %v2844
    %v2846 = vlaneseq
    %v2847 = vshrl.u32 %v2846, 7
    %v2848 = vsub.s32 4, %v2847
    %v2849 = vrot.slane %v2828, %v2848
    %v2850 = vlaneseq
    %v2851 = vshrl.u32 %v2850, 7
    %v2852 = vsub.s32 5, %v2851
    %v2853 = vrot.slane %v2828, %v2852
    %v2854 = vlaneseq
    %v2855 = vshrl.u32 %v2854, 7
    %v2856 = vsub.s32 6, %v2855
    %v2857 = vrot.slane %v2828, %v2856
    %v2858 = vlaneseq
    %v2859 = vshrl.u32 %v2858, 7
    %v2860 = vsub.s32 7, %v2859
    %v2861 = vrot.slane %v2828, %v2860
    %v2870 = vsub.f32 %v2756, %v2833
    %v2871 = vsub.f32 %v2759, %v2837
    %v2872 = vsub.f32 %v2762, %v2841
    %v2873 = vsub.f32 %v2765, %v2845
    %v2874 = vsub.f32 %v2768, %v2849
    %v2875 = vsub.f32 %v2771, %v2853
    %v2876 = vsub.f32 %v2774, %v2857
    %v2877 = vsub.f32 %v2777, %v2861
    %v2878 = vmul.f32 %v2870, 1.442695
    %v2879 = vpow.pop %v2878
    %v2880 = vmul.f32 %v2871, 1.442695
    %v2881 = vpow.pop %v2880
    %v2882 = vmul.f32 %v2872, 1.442695
    %v2883 = vpow.pop %v2882
    %v2884 = vmul.f32 %v2873, 1.442695
    %v2885 = vpow.pop %v2884
    %v2886 = vmul.f32 %v2874, 1.442695
    %v2887 = vpow.pop %v2886
    %v2888 = vmul.f32 %v2875, 1.442695
    %v2889 = vpow.pop %v2888
    %v2890 = vmul.f32 %v2876, 1.442695
    %v2891 = vpow.pop %v2890
    %v2892 = vmul.f32 %v2877, 1.442695
    %v2893 = vpow.pop %v2892
    %2902 = vset.pattern.permute.xlu0 0
    %2903 = vperm.xlu0 %2902, %v2879
    %v2904 = vpop.permute.xlu0 %2903
    %2905 = vset.pattern.permute.xlu0 0
    %2906 = vperm.xlu0 %2905, %v2881
    %v2907 = vpop.permute.xlu0 %2906
    %2908 = vset.pattern.permute.xlu0 0
    %2909 = vperm.xlu0 %2908, %v2883
    %v2910 = vpop.permute.xlu0 %2909
    %2911 = vset.pattern.permute.xlu0 0
    %2912 = vperm.xlu0 %2911, %v2885
    %v2913 = vpop.permute.xlu0 %2912
    %2914 = vset.pattern.permute.xlu0 0
    %2915 = vperm.xlu0 %2914, %v2887
    %v2916 = vpop.permute.xlu0 %2915
    %2917 = vset.pattern.permute.xlu0 0
    %2918 = vperm.xlu0 %2917, %v2889
    %v2919 = vpop.permute.xlu0 %2918
    %2920 = vset.pattern.permute.xlu0 0
    %2921 = vperm.xlu0 %2920, %v2891
    %v2922 = vpop.permute.xlu0 %2921
    %2923 = vset.pattern.permute.xlu0 0
    %2924 = vperm.xlu0 %2923, %v2893
    %v2925 = vpop.permute.xlu0 %2924
    %v2926 = vlaneseq
    %v2927 = vshrl.u32 %v2926, 7
    %v2928 = vsub.s32 %v1529, %v2927
    %v2929 = vrot.slane %v2904, %v2928
    %v2930 = vlaneseq
    %v2931 = vshrl.u32 %v2930, 7
    %v2932 = vsub.s32 %v1529, %v2931
    %v2933 = vrot.slane %v2907, %v2932
    %v2934 = vlaneseq
    %v2935 = vshrl.u32 %v2934, 7
    %v2936 = vsub.s32 %v1529, %v2935
    %v2937 = vrot.slane %v2910, %v2936
    %v2938 = vlaneseq
    %v2939 = vshrl.u32 %v2938, 7
    %v2940 = vsub.s32 %v1529, %v2939
    %v2941 = vrot.slane %v2913, %v2940
    %v2942 = vlaneseq
    %v2943 = vshrl.u32 %v2942, 7
    %v2944 = vsub.s32 %v1529, %v2943
    %v2945 = vrot.slane %v2916, %v2944
    %v2946 = vlaneseq
    %v2947 = vshrl.u32 %v2946, 7
    %v2948 = vsub.s32 %v1529, %v2947
    %v2949 = vrot.slane %v2919, %v2948
    %v2950 = vlaneseq
    %v2951 = vshrl.u32 %v2950, 7
    %v2952 = vsub.s32 %v1529, %v2951
    %v2953 = vrot.slane %v2922, %v2952
    %v2954 = vlaneseq
    %v2955 = vshrl.u32 %v2954, 7
    %v2956 = vsub.s32 %v1529, %v2955
    %v2957 = vrot.slane %v2925, %v2956
    %v2958 = vsel %vm2122, %v2933, %v2929
    %v2959 = vsel %vm2124, %v2937, %v2958
    %v2960 = vsel %vm2126, %v2941, %v2959
    %v2961 = vsel %vm2128, %v2945, %v2960
    %v2962 = vsel %vm2130, %v2949, %v2961
    %v2963 = vsel %vm2132, %v2953, %v2962
    %v2964 = vsel %vm2134, %v2957, %v2963
    %v2966 = vsel %vm2137, %v2964, 0.0
    %2967 = vadd.xlane.f32.xlu0 %v2966
    %v2968 = vpop.xlane.xlu0 %2967
    %v2970 = vlaneseq
    %v2971 = vshrl.u32 %v2970, 7
    %v2972 = vsub.s32 0, %v2971
    %v2973 = vrot.slane %v2968, %v2972
    %v2974 = vlaneseq
    %v2975 = vshrl.u32 %v2974, 7
    %v2976 = vsub.s32 1, %v2975
    %v2977 = vrot.slane %v2968, %v2976
    %v2978 = vlaneseq
    %v2979 = vshrl.u32 %v2978, 7
    %v2980 = vsub.s32 2, %v2979
    %v2981 = vrot.slane %v2968, %v2980
    %v2982 = vlaneseq
    %v2983 = vshrl.u32 %v2982, 7
    %v2984 = vsub.s32 3, %v2983
    %v2985 = vrot.slane %v2968, %v2984
    %v2986 = vlaneseq
    %v2987 = vshrl.u32 %v2986, 7
    %v2988 = vsub.s32 4, %v2987
    %v2989 = vrot.slane %v2968, %v2988
    %v2990 = vlaneseq
    %v2991 = vshrl.u32 %v2990, 7
    %v2992 = vsub.s32 5, %v2991
    %v2993 = vrot.slane %v2968, %v2992
    %v2994 = vlaneseq
    %v2995 = vshrl.u32 %v2994, 7
    %v2996 = vsub.s32 6, %v2995
    %v2997 = vrot.slane %v2968, %v2996
    %v2998 = vlaneseq
    %v2999 = vshrl.u32 %v2998, 7
    %v3000 = vsub.s32 7, %v2999
    %v3001 = vrot.slane %v2968, %v3000
    %v3010 = vrcp.pop %v2973
    %v3011 = vmul.f32 %v2879, %v3010
    %v3012 = vrcp.pop %v2977
    %v3013 = vmul.f32 %v2881, %v3012
    %v3014 = vrcp.pop %v2981
    %v3015 = vmul.f32 %v2883, %v3014
    %v3016 = vrcp.pop %v2985
    %v3017 = vmul.f32 %v2885, %v3016
    %v3018 = vrcp.pop %v2989
    %v3019 = vmul.f32 %v2887, %v3018
    %v3020 = vrcp.pop %v2993
    %v3021 = vmul.f32 %v2889, %v3020
    %v3022 = vrcp.pop %v2997
    %v3023 = vmul.f32 %v2891, %v3022
    %v3024 = vrcp.pop %v3001
    %v3025 = vmul.f32 %v2893, %v3024
    %v3026 = vlaneseq
    %v3027 = vshrl.u32 %v3026, 7
    %v3028 = vsub.s32 3, %v3027
    %v3029 = vrot.slane %v2492, %v3028
    %3038 = vset.pattern.permute.xlu0 0
    %3039 = vperm.xlu0 %3038, %v3011
    %v3040 = vpop.permute.xlu0 %3039
    %3041 = vset.pattern.permute.xlu0 0
    %3042 = vperm.xlu0 %3041, %v3013
    %v3043 = vpop.permute.xlu0 %3042
    %3044 = vset.pattern.permute.xlu0 0
    %3045 = vperm.xlu0 %3044, %v3015
    %v3046 = vpop.permute.xlu0 %3045
    %3047 = vset.pattern.permute.xlu0 0
    %3048 = vperm.xlu0 %3047, %v3017
    %v3049 = vpop.permute.xlu0 %3048
    %3050 = vset.pattern.permute.xlu0 0
    %3051 = vperm.xlu0 %3050, %v3019
    %v3052 = vpop.permute.xlu0 %3051
    %3053 = vset.pattern.permute.xlu0 0
    %3054 = vperm.xlu0 %3053, %v3021
    %v3055 = vpop.permute.xlu0 %3054
    %3056 = vset.pattern.permute.xlu0 0
    %3057 = vperm.xlu0 %3056, %v3023
    %v3058 = vpop.permute.xlu0 %3057
    %3059 = vset.pattern.permute.xlu0 0
    %3060 = vperm.xlu0 %3059, %v3025
    %v3061 = vpop.permute.xlu0 %3060
    %v3062 = vlaneseq
    %v3063 = vshrl.u32 %v3062, 7
    %v3064 = vsub.s32 %v1529, %v3063
    %v3065 = vrot.slane %v3040, %v3064
    %v3066 = vlaneseq
    %v3067 = vshrl.u32 %v3066, 7
    %v3068 = vsub.s32 %v1529, %v3067
    %v3069 = vrot.slane %v3043, %v3068
    %v3070 = vlaneseq
    %v3071 = vshrl.u32 %v3070, 7
    %v3072 = vsub.s32 %v1529, %v3071
    %v3073 = vrot.slane %v3046, %v3072
    %v3074 = vlaneseq
    %v3075 = vshrl.u32 %v3074, 7
    %v3076 = vsub.s32 %v1529, %v3075
    %v3077 = vrot.slane %v3049, %v3076
    %v3078 = vlaneseq
    %v3079 = vshrl.u32 %v3078, 7
    %v3080 = vsub.s32 %v1529, %v3079
    %v3081 = vrot.slane %v3052, %v3080
    %v3082 = vlaneseq
    %v3083 = vshrl.u32 %v3082, 7
    %v3084 = vsub.s32 %v1529, %v3083
    %v3085 = vrot.slane %v3055, %v3084
    %v3086 = vlaneseq
    %v3087 = vshrl.u32 %v3086, 7
    %v3088 = vsub.s32 %v1529, %v3087
    %v3089 = vrot.slane %v3058, %v3088
    %v3090 = vlaneseq
    %v3091 = vshrl.u32 %v3090, 7
    %v3092 = vsub.s32 %v1529, %v3091
    %v3093 = vrot.slane %v3061, %v3092
    %v3094 = vsel %vm2122, %v3069, %v3065
    %v3095 = vsel %vm2124, %v3073, %v3094
    %v3096 = vsel %vm2126, %v3077, %v3095
    %v3097 = vsel %vm2128, %v3081, %v3096
    %v3098 = vsel %vm2130, %v3085, %v3097
    %v3099 = vsel %vm2132, %v3089, %v3098
    %v3100 = vsel %vm2134, %v3093, %v3099
    %v3101 = vsel %vm2137, %v3100, 0
    %3103 = vmatprep.subr.mxu0 0.0
    %3104 = vmatpush1.msra.mxu0 %v2570
    %3105 = vmatprep.subr.mxu0 0.0
    %3106 = vmatpush1.msra.mxu0 0.0
    %3107 = vmatprep.subr.mxu0 0.0
    %3108 = vmatpush1.msra.mxu0 0.0
    %3109 = vmatprep.subr.mxu0 0.0
    %3110 = vmatpush1.msra.mxu0 0.0
    %3111 = vmatprep.subr.mxu0 0.0
    %3112 = vmatpush1.msra.mxu0 0.0
    %3113 = vmatprep.subr.mxu0 0.0
    %3114 = vmatpush1.msra.mxu0 0.0
    %3115 = vmatprep.subr.mxu0 0.0
    %3116 = vmatpush1.msra.mxu0 0.0
    %3117 = vmatprep.subr.mxu0 0.0
    %3118 = vmatpush1.msra.mxu0 0.0
    %3119 = vmatprep.subr.mxu0 0.0
    %3120 = vmatpush1.msra.mxu0 0.0
    %3121 = vmatprep.subr.mxu0 0.0
    %3122 = vmatpush1.msra.mxu0 0.0
    %3123 = vmatprep.subr.mxu0 0.0
    %3124 = vmatpush1.msra.mxu0 0.0
    %3125 = vmatprep.subr.mxu0 0.0
    %3126 = vmatpush1.msra.mxu0 0.0
    %3127 = vmatprep.subr.mxu0 0.0
    %3128 = vmatpush1.msra.mxu0 0.0
    %3129 = vmatprep.subr.mxu0 0.0
    %3130 = vmatpush1.msra.mxu0 0.0
    %3131 = vmatprep.subr.mxu0 0.0
    %3132 = vmatpush1.msra.mxu0 0.0
    %3133 = vmatprep.subr.mxu0 0.0
    %3134 = vmatpush1.msra.mxu0 0.0
    %3135 = vmatprep.subr.mxu0 0.0
    %3136 = vmatpush1.msra.mxu0 0.0
    %3137 = vmatprep.subr.mxu0 0.0
    %3138 = vmatpush1.msra.mxu0 0.0
    %3139 = vmatprep.subr.mxu0 0.0
    %3140 = vmatpush1.msra.mxu0 0.0
    %3141 = vmatprep.subr.mxu0 0.0
    %3142 = vmatpush1.msra.mxu0 0.0
    %3143 = vmatprep.subr.mxu0 0.0
    %3144 = vmatpush1.msra.mxu0 0.0
    %3145 = vmatprep.subr.mxu0 0.0
    %3146 = vmatpush1.msra.mxu0 0.0
    %3147 = vmatprep.subr.mxu0 0.0
    %3148 = vmatpush1.msra.mxu0 0.0
    %3149 = vmatprep.subr.mxu0 0.0
    %3150 = vmatpush1.msra.mxu0 0.0
    %3151 = vmatprep.subr.mxu0 0.0
    %3152 = vmatpush1.msra.mxu0 0.0
    %3153 = vmatprep.subr.mxu0 0.0
    %3154 = vmatpush1.msra.mxu0 0.0
    %3155 = vmatprep.subr.mxu0 0.0
    %3156 = vmatpush1.msra.mxu0 0.0
    %3157 = vmatprep.subr.mxu0 0.0
    %3158 = vmatpush1.msra.mxu0 0.0
    %3159 = vmatprep.subr.mxu0 0.0
    %3160 = vmatpush1.msra.mxu0 0.0
    %3161 = vmatprep.subr.mxu0 0.0
    %3162 = vmatpush1.msra.mxu0 0.0
    %3163 = vmatprep.subr.mxu0 0.0
    %3164 = vmatpush1.msra.mxu0 0.0
    %3165 = vmatprep.subr.mxu0 0.0
    %3166 = vmatpush1.msra.mxu0 0.0
    %3167 = vmatprep.mubr.f32.mxu0 0.0
    %3168 = vmatmul.mubr.f32.gmra.mrb[0].mxu0 %v3101
    %v3169 = vpop.f32.mrb[0].mxu0
    %v3170 = vadd.f32 %v3029, %v3169
    %v3171 = vpop.f32.mrb[0].mxu0
    %3172 = vdwg.mxu0
    %v3173 = vmax.f32 %v3170, 0.0
    %v3174 = vadd.f32 %v2485, %v3173
    %v3175 = vld [vmem:[%s8] sm:$0xff]
    %v3176 = vld [vmem:[%s8 + $0x8] sm:$0xff]
    %v3177 = vld [vmem:[%s8 + $0x10] sm:$0xff]
    %v3178 = vld [vmem:[%s8 + $0x18] sm:$0xff]
    %v3179 = vld [vmem:[%s8 + $0x20] sm:$0xff]
    %v3180 = vld [vmem:[%s8 + $0x28] sm:$0xff]
    %v3181 = vld [vmem:[%s8 + $0x30] sm:$0xff]
    %v3182 = vld [vmem:[%s8 + $0x38] sm:$0xff]
    %s3183 = scalar_lea.vmem %s8, 64
    %v3184 = vld [vmem:[%s3183] sm:$0xff]
    %v3185 = vld [vmem:[%s3183 + $0x8] sm:$0xff]
    %v3186 = vld [vmem:[%s3183 + $0x10] sm:$0xff]
    %v3187 = vld [vmem:[%s3183 + $0x18] sm:$0xff]
    %v3188 = vld [vmem:[%s3183 + $0x20] sm:$0xff]
    %v3189 = vld [vmem:[%s3183 + $0x28] sm:$0xff]
    %v3190 = vld [vmem:[%s3183 + $0x30] sm:$0xff]
    %v3191 = vld [vmem:[%s3183 + $0x38] sm:$0xff]
    %v3193 = vsel %vm1796, %v3174, 0
    %3195 = vmatprep.subr.mxu0 %v3185
    %3196 = vmatpush1.msra.mxu0 %v3184
    %3197 = vmatprep.subr.mxu0 %v3187
    %3198 = vmatpush1.msra.mxu0 %v3186
    %3199 = vmatprep.subr.mxu0 %v3189
    %3200 = vmatpush1.msra.mxu0 %v3188
    %3201 = vmatprep.subr.mxu0 %v3191
    %3202 = vmatpush1.msra.mxu0 %v3190
    %3203 = vmatprep.subr.mxu0 0.0
    %3204 = vmatpush1.msra.mxu0 0.0
    %3205 = vmatprep.subr.mxu0 0.0
    %3206 = vmatpush1.msra.mxu0 0.0
    %3207 = vmatprep.subr.mxu0 0.0
    %3208 = vmatpush1.msra.mxu0 0.0
    %3209 = vmatprep.subr.mxu0 0.0
    %3210 = vmatpush1.msra.mxu0 0.0
    %3211 = vmatprep.subr.mxu0 0.0
    %3212 = vmatpush1.msra.mxu0 0.0
    %3213 = vmatprep.subr.mxu0 0.0
    %3214 = vmatpush1.msra.mxu0 0.0
    %3215 = vmatprep.subr.mxu0 0.0
    %3216 = vmatpush1.msra.mxu0 0.0
    %3217 = vmatprep.subr.mxu0 0.0
    %3218 = vmatpush1.msra.mxu0 0.0
    %3219 = vmatprep.subr.mxu0 0.0
    %3220 = vmatpush1.msra.mxu0 0.0
    %3221 = vmatprep.subr.mxu0 0.0
    %3222 = vmatpush1.msra.mxu0 0.0
    %3223 = vmatprep.subr.mxu0 0.0
    %3224 = vmatpush1.msra.mxu0 0.0
    %3225 = vmatprep.subr.mxu0 0.0
    %3226 = vmatpush1.msra.mxu0 0.0
    %3227 = vmatprep.subr.mxu0 0.0
    %3228 = vmatpush1.msra.mxu0 0.0
    %3229 = vmatprep.subr.mxu0 0.0
    %3230 = vmatpush1.msra.mxu0 0.0
    %3231 = vmatprep.subr.mxu0 0.0
    %3232 = vmatpush1.msra.mxu0 0.0
    %3233 = vmatprep.subr.mxu0 0.0
    %3234 = vmatpush1.msra.mxu0 0.0
    %3235 = vmatprep.subr.mxu0 0.0
    %3236 = vmatpush1.msra.mxu0 0.0
    %3237 = vmatprep.subr.mxu0 0.0
    %3238 = vmatpush1.msra.mxu0 0.0
    %3239 = vmatprep.subr.mxu0 0.0
    %3240 = vmatpush1.msra.mxu0 0.0
    %3241 = vmatprep.subr.mxu0 0.0
    %3242 = vmatpush1.msra.mxu0 0.0
    %3243 = vmatprep.subr.mxu0 0.0
    %3244 = vmatpush1.msra.mxu0 0.0
    %3245 = vmatprep.subr.mxu0 0.0
    %3246 = vmatpush1.msra.mxu0 0.0
    %3247 = vmatprep.subr.mxu0 0.0
    %3248 = vmatpush1.msra.mxu0 0.0
    %3249 = vmatprep.subr.mxu0 0.0
    %3250 = vmatpush1.msra.mxu0 0.0
    %3251 = vmatprep.subr.mxu0 0.0
    %3252 = vmatpush1.msra.mxu0 0.0
    %3253 = vmatprep.subr.mxu0 0.0
    %3254 = vmatpush1.msra.mxu0 0.0
    %3255 = vmatprep.subr.mxu0 0.0
    %3256 = vmatpush1.msra.mxu0 0.0
    %3257 = vmatprep.subr.mxu0 0.0
    %3258 = vmatpush1.msra.mxu0 0.0
    %3259 = vmatprep.mubr.f32.mxu0 0.0
    %3260 = vmatmul.mubr.f32.gmra.mrb[0].mxu0 %v3193
    %v3261 = vpop.f32.mrb[0].mxu0
    %v3262 = vadd.f32 0.0, %v3261
    %v3263 = vpop.f32.mrb[0].mxu0
    %v3264 = vadd.f32 0.0, %v3263
    %3265 = vdwg.mxu0
    %3266 = vmatprep.subr.mxu0 %v3176
    %3267 = vmatpush1.msra.mxu0 %v3175
    %3268 = vmatprep.subr.mxu0 %v3178
    %3269 = vmatpush1.msra.mxu0 %v3177
    %3270 = vmatprep.subr.mxu0 %v3180
    %3271 = vmatpush1.msra.mxu0 %v3179
    %3272 = vmatprep.subr.mxu0 %v3182
    %3273 = vmatpush1.msra.mxu0 %v3181
    %3274 = vmatprep.subr.mxu0 0.0
    %3275 = vmatpush1.msra.mxu0 0.0
    %3276 = vmatprep.subr.mxu0 0.0
    %3277 = vmatpush1.msra.mxu0 0.0
    %3278 = vmatprep.subr.mxu0 0.0
    %3279 = vmatpush1.msra.mxu0 0.0
    %3280 = vmatprep.subr.mxu0 0.0
    %3281 = vmatpush1.msra.mxu0 0.0
    %3282 = vmatprep.subr.mxu0 0.0
    %3283 = vmatpush1.msra.mxu0 0.0
    %3284 = vmatprep.subr.mxu0 0.0
    %3285 = vmatpush1.msra.mxu0 0.0
    %3286 = vmatprep.subr.mxu0 0.0
    %3287 = vmatpush1.msra.mxu0 0.0
    %3288 = vmatprep.subr.mxu0 0.0
    %3289 = vmatpush1.msra.mxu0 0.0
    %3290 = vmatprep.subr.mxu0 0.0
    %3291 = vmatpush1.msra.mxu0 0.0
    %3292 = vmatprep.subr.mxu0 0.0
    %3293 = vmatpush1.msra.mxu0 0.0
    %3294 = vmatprep.subr.mxu0 0.0
    %3295 = vmatpush1.msra.mxu0 0.0
    %3296 = vmatprep.subr.mxu0 0.0
    %3297 = vmatpush1.msra.mxu0 0.0
    %3298 = vmatprep.subr.mxu0 0.0
    %3299 = vmatpush1.msra.mxu0 0.0
    %3300 = vmatprep.subr.mxu0 0.0
    %3301 = vmatpush1.msra.mxu0 0.0
    %3302 = vmatprep.subr.mxu0 0.0
    %3303 = vmatpush1.msra.mxu0 0.0
    %3304 = vmatprep.subr.mxu0 0.0
    %3305 = vmatpush1.msra.mxu0 0.0
    %3306 = vmatprep.subr.mxu0 0.0
    %3307 = vmatpush1.msra.mxu0 0.0
    %3308 = vmatprep.subr.mxu0 0.0
    %3309 = vmatpush1.msra.mxu0 0.0
    %3310 = vmatprep.subr.mxu0 0.0
    %3311 = vmatpush1.msra.mxu0 0.0
    %3312 = vmatprep.subr.mxu0 0.0
    %3313 = vmatpush1.msra.mxu0 0.0
    %3314 = vmatprep.subr.mxu0 0.0
    %3315 = vmatpush1.msra.mxu0 0.0
    %3316 = vmatprep.subr.mxu0 0.0
    %3317 = vmatpush1.msra.mxu0 0.0
    %3318 = vmatprep.subr.mxu0 0.0
    %3319 = vmatpush1.msra.mxu0 0.0
    %3320 = vmatprep.subr.mxu0 0.0
    %3321 = vmatpush1.msra.mxu0 0.0
    %3322 = vmatprep.subr.mxu0 0.0
    %3323 = vmatpush1.msra.mxu0 0.0
    %3324 = vmatprep.subr.mxu0 0.0
    %3325 = vmatpush1.msra.mxu0 0.0
    %3326 = vmatprep.subr.mxu0 0.0
    %3327 = vmatpush1.msra.mxu0 0.0
    %3328 = vmatprep.subr.mxu0 0.0
    %3329 = vmatpush1.msra.mxu0 0.0
    %3330 = vmatprep.mubr.f32.mxu0 0.0
    %3331 = vmatmul.mubr.f32.gmra.mrb[0].mxu0 %v1798
    %v3332 = vpop.f32.mrb[0].mxu0
    %v3333 = vadd.f32 %v3262, %v3332
    %v3334 = vpop.f32.mrb[0].mxu0
    %v3335 = vadd.f32 %v3264, %v3334
    %3336 = vdwg.mxu0
    %v3337 = vsel %vm2137, 1.0, 0.0
    %3338 = vadd.xlane.f32.xlu0 %v3337
    %v3339 = vpop.xlane.xlu0 %3338
    %v3340 = vrcp.pop %v3339
    %v3341 = vmul.f32 1.0, %v3340
    %v3343 = vsel %vm2137, %v3341, 0
    %3345 = vmatprep.subr.mxu0 %v1706
    %3346 = vmatpush1.msra.mxu0 %v1705
    %3347 = vmatprep.subr.mxu0 0.0
    %3348 = vmatpush1.msra.mxu0 0.0
    %3349 = vmatprep.subr.mxu0 0.0
    %3350 = vmatpush1.msra.mxu0 0.0
    %3351 = vmatprep.subr.mxu0 0.0
    %3352 = vmatpush1.msra.mxu0 0.0
    %3353 = vmatprep.subr.mxu0 0.0
    %3354 = vmatpush1.msra.mxu0 0.0
    %3355 = vmatprep.subr.mxu0 0.0
    %3356 = vmatpush1.msra.mxu0 0.0
    %3357 = vmatprep.subr.mxu0 0.0
    %3358 = vmatpush1.msra.mxu0 0.0
    %3359 = vmatprep.subr.mxu0 0.0
    %3360 = vmatpush1.msra.mxu0 0.0
    %3361 = vmatprep.subr.mxu0 0.0
    %3362 = vmatpush1.msra.mxu0 0.0
    %3363 = vmatprep.subr.mxu0 0.0
    %3364 = vmatpush1.msra.mxu0 0.0
    %3365 = vmatprep.subr.mxu0 0.0
    %3366 = vmatpush1.msra.mxu0 0.0
    %3367 = vmatprep.subr.mxu0 0.0
    %3368 = vmatpush1.msra.mxu0 0.0
    %3369 = vmatprep.subr.mxu0 0.0
    %3370 = vmatpush1.msra.mxu0 0.0
    %3371 = vmatprep.subr.mxu0 0.0
    %3372 = vmatpush1.msra.mxu0 0.0
    %3373 = vmatprep.subr.mxu0 0.0
    %3374 = vmatpush1.msra.mxu0 0.0
    %3375 = vmatprep.subr.mxu0 0.0
    %3376 = vmatpush1.msra.mxu0 0.0
    %3377 = vmatprep.subr.mxu0 0.0
    %3378 = vmatpush1.msra.mxu0 0.0
    %3379 = vmatprep.subr.mxu0 0.0
    %3380 = vmatpush1.msra.mxu0 0.0
    %3381 = vmatprep.subr.mxu0 0.0
    %3382 = vmatpush1.msra.mxu0 0.0
    %3383 = vmatprep.subr.mxu0 0.0
    %3384 = vmatpush1.msra.mxu0 0.0
    %3385 = vmatprep.subr.mxu0 0.0
    %3386 = vmatpush1.msra.mxu0 0.0
    %3387 = vmatprep.subr.mxu0 0.0
    %3388 = vmatpush1.msra.mxu0 0.0
    %3389 = vmatprep.subr.mxu0 0.0
    %3390 = vmatpush1.msra.mxu0 0.0
    %3391 = vmatprep.subr.mxu0 0.0
    %3392 = vmatpush1.msra.mxu0 0.0
    %3393 = vmatprep.subr.mxu0 0.0
    %3394 = vmatpush1.msra.mxu0 0.0
    %3395 = vmatprep.subr.mxu0 0.0
    %3396 = vmatpush1.msra.mxu0 0.0
    %3397 = vmatprep.subr.mxu0 0.0
    %3398 = vmatpush1.msra.mxu0 0.0
    %3399 = vmatprep.subr.mxu0 0.0
    %3400 = vmatpush1.msra.mxu0 0.0
    %3401 = vmatprep.subr.mxu0 0.0
    %3402 = vmatpush1.msra.mxu0 0.0
    %3403 = vmatprep.subr.mxu0 0.0
    %3404 = vmatpush1.msra.mxu0 0.0
    %3405 = vmatprep.subr.mxu0 0.0
    %3406 = vmatpush1.msra.mxu0 0.0
    %3407 = vmatprep.subr.mxu0 0.0
    %3408 = vmatpush1.msra.mxu0 0.0
    %3409 = vmatprep.mubr.f32.mxu0 0.0
    %3410 = vmatmul.mubr.f32.gmra.mrb[0].mxu0 %v3343
    %v3411 = vpop.f32.mrb[0].mxu0
    %v3412 = vadd.f32 0.0, %v3411
    %v3413 = vpop.f32.mrb[0].mxu0
    %v3414 = vadd.f32 0.0, %v3413
    %3415 = vdwg.mxu0
    %v3416 = vmul.f32 %v3412, %v3333
    %v3417 = vmul.f32 %v3414, %v3335
    %v3418 = vrot.slane %v3416, 4
    %v3419 = vadd.f32 %v3416, %v3418
    %v3420 = vrot.slane %v3419, 2
    %v3421 = vadd.f32 %v3419, %v3420
    %v3422 = vrot.slane %v3421, 1
    %v3423 = vadd.f32 %v3421, %v3422
    %v3424 = vrot.slane %v3417, 4
    %v3425 = vadd.f32 %v3417, %v3424
    %v3426 = vrot.slane %v3425, 2
    %v3427 = vadd.f32 %v3425, %v3426
    %v3428 = vrot.slane %v3427, 1
    %v3429 = vadd.f32 %v3427, %v3428
    %v3430 = vmul.f32 %v3423, %v3423
    %v3431 = vmul.f32 %v3429, %v3429
    %3432 = vmatprep.subr.mxu0 0.0
    %3433 = vmatpush1.msra.mxu0 %v1661
    %3434 = vmatprep.subr.mxu0 0.0
    %3435 = vmatpush1.msra.mxu0 %v1662
    %3436 = vmatprep.subr.mxu0 0.0
    %3437 = vmatpush1.msra.mxu0 %v1663
    %3438 = vmatprep.subr.mxu0 0.0
    %3439 = vmatpush1.msra.mxu0 %v1664
    %3440 = vmatprep.subr.mxu0 0.0
    %3441 = vmatpush1.msra.mxu0 %v1665
    %3442 = vmatprep.subr.mxu0 0.0
    %3443 = vmatpush1.msra.mxu0 %v1666
    %3444 = vmatprep.subr.mxu0 0.0
    %3445 = vmatpush1.msra.mxu0 %v1667
    %3446 = vmatprep.subr.mxu0 0.0
    %3447 = vmatpush1.msra.mxu0 %v1668
    %3448 = vmatprep.subr.mxu0 0.0
    %3449 = vmatpush1.msra.mxu0 %v1669
    %3450 = vmatprep.subr.mxu0 0.0
    %3451 = vmatpush1.msra.mxu0 %v1670
    %3452 = vmatprep.subr.mxu0 0.0
    %3453 = vmatpush1.msra.mxu0 %v1671
    %3454 = vmatprep.subr.mxu0 0.0
    %3455 = vmatpush1.msra.mxu0 %v1672
    %3456 = vmatprep.subr.mxu0 0.0
    %3457 = vmatpush1.msra.mxu0 %v1673
    %3458 = vmatprep.subr.mxu0 0.0
    %3459 = vmatpush1.msra.mxu0 %v1674
    %3460 = vmatprep.subr.mxu0 0.0
    %3461 = vmatpush1.msra.mxu0 %v1675
    %3462 = vmatprep.subr.mxu0 0.0
    %3463 = vmatpush1.msra.mxu0 %v1676
    %3464 = vmatprep.subr.mxu0 0.0
    %3465 = vmatpush1.msra.mxu0 %v1677
    %3466 = vmatprep.subr.mxu0 0.0
    %3467 = vmatpush1.msra.mxu0 %v1678
    %3468 = vmatprep.subr.mxu0 0.0
    %3469 = vmatpush1.msra.mxu0 %v1679
    %3470 = vmatprep.subr.mxu0 0.0
    %3471 = vmatpush1.msra.mxu0 %v1680
    %3472 = vmatprep.subr.mxu0 0.0
    %3473 = vmatpush1.msra.mxu0 %v1681
    %3474 = vmatprep.subr.mxu0 0.0
    %3475 = vmatpush1.msra.mxu0 %v1682
    %3476 = vmatprep.subr.mxu0 0.0
    %3477 = vmatpush1.msra.mxu0 %v1683
    %3478 = vmatprep.subr.mxu0 0.0
    %3479 = vmatpush1.msra.mxu0 %v1684
    %3480 = vmatprep.subr.mxu0 0.0
    %3481 = vmatpush1.msra.mxu0 %v1685
    %3482 = vmatprep.subr.mxu0 0.0
    %3483 = vmatpush1.msra.mxu0 %v1686
    %3484 = vmatprep.subr.mxu0 0.0
    %3485 = vmatpush1.msra.mxu0 %v1687
    %3486 = vmatprep.subr.mxu0 0.0
    %3487 = vmatpush1.msra.mxu0 %v1688
    %3488 = vmatprep.subr.mxu0 0.0
    %3489 = vmatpush1.msra.mxu0 %v1689
    %3490 = vmatprep.subr.mxu0 0.0
    %3491 = vmatpush1.msra.mxu0 %v1690
    %3492 = vmatprep.subr.mxu0 0.0
    %3493 = vmatpush1.msra.mxu0 %v1691
    %3494 = vmatprep.subr.mxu0 0.0
    %3495 = vmatpush1.msra.mxu0 %v1692
    %3496 = vmatprep.mubr.f32.mxu0 %v3431
    %3497 = vmatmul.mubr.f32.gmra.mrb[0].mxu0 %v3430
    %v3498 = vpop.f32.mrb[0].mxu0
    %v3499 = vadd.f32 0.0, %v3498
    %v3500 = vpop.f32.mrb[0].mxu0
    %3501 = vdwg.mxu0
    %v3502 = vadd.f32 %v3499, 1.0
    %v3503 = vrcp.pop %v3502
    %v3504 = vmul.f32 %v3499, %v3503
    %v3505 = vadd.f32 %v3499, 1e-12
    %v3506 = vrsqrt.pop %v3505
    %v3507 = vmul.f32 %v3504, %v3506
    %v3509 = vsel %vm2137, %v3507, 0
    %3511 = vmatprep.subr.mxu0 %v1706
    %3512 = vmatpush1.msra.mxu0 %v1705
    %3513 = vmatprep.subr.mxu0 0.0
    %3514 = vmatpush1.msra.mxu0 0.0
    %3515 = vmatprep.subr.mxu0 0.0
    %3516 = vmatpush1.msra.mxu0 0.0
    %3517 = vmatprep.subr.mxu0 0.0
    %3518 = vmatpush1.msra.mxu0 0.0
    %3519 = vmatprep.subr.mxu0 0.0
    %3520 = vmatpush1.msra.mxu0 0.0
    %3521 = vmatprep.subr.mxu0 0.0
    %3522 = vmatpush1.msra.mxu0 0.0
    %3523 = vmatprep.subr.mxu0 0.0
    %3524 = vmatpush1.msra.mxu0 0.0
    %3525 = vmatprep.subr.mxu0 0.0
    %3526 = vmatpush1.msra.mxu0 0.0
    %3527 = vmatprep.subr.mxu0 0.0
    %3528 = vmatpush1.msra.mxu0 0.0
    %3529 = vmatprep.subr.mxu0 0.0
    %3530 = vmatpush1.msra.mxu0 0.0
    %3531 = vmatprep.subr.mxu0 0.0
    %3532 = vmatpush1.msra.mxu0 0.0
    %3533 = vmatprep.subr.mxu0 0.0
    %3534 = vmatpush1.msra.mxu0 0.0
    %3535 = vmatprep.subr.mxu0 0.0
    %3536 = vmatpush1.msra.mxu0 0.0
    %3537 = vmatprep.subr.mxu0 0.0
    %3538 = vmatpush1.msra.mxu0 0.0
    %3539 = vmatprep.subr.mxu0 0.0
    %3540 = vmatpush1.msra.mxu0 0.0
    %3541 = vmatprep.subr.mxu0 0.0
    %3542 = vmatpush1.msra.mxu0 0.0
    %3543 = vmatprep.subr.mxu0 0.0
    %3544 = vmatpush1.msra.mxu0 0.0
    %3545 = vmatprep.subr.mxu0 0.0
    %3546 = vmatpush1.msra.mxu0 0.0
    %3547 = vmatprep.subr.mxu0 0.0
    %3548 = vmatpush1.msra.mxu0 0.0
    %3549 = vmatprep.subr.mxu0 0.0
    %3550 = vmatpush1.msra.mxu0 0.0
    %3551 = vmatprep.subr.mxu0 0.0
    %3552 = vmatpush1.msra.mxu0 0.0
    %3553 = vmatprep.subr.mxu0 0.0
    %3554 = vmatpush1.msra.mxu0 0.0
    %3555 = vmatprep.subr.mxu0 0.0
    %3556 = vmatpush1.msra.mxu0 0.0
    %3557 = vmatprep.subr.mxu0 0.0
    %3558 = vmatpush1.msra.mxu0 0.0
    %3559 = vmatprep.subr.mxu0 0.0
    %3560 = vmatpush1.msra.mxu0 0.0
    %3561 = vmatprep.subr.mxu0 0.0
    %3562 = vmatpush1.msra.mxu0 0.0
    %3563 = vmatprep.subr.mxu0 0.0
    %3564 = vmatpush1.msra.mxu0 0.0
    %3565 = vmatprep.subr.mxu0 0.0
    %3566 = vmatpush1.msra.mxu0 0.0
    %3567 = vmatprep.subr.mxu0 0.0
    %3568 = vmatpush1.msra.mxu0 0.0
    %3569 = vmatprep.subr.mxu0 0.0
    %3570 = vmatpush1.msra.mxu0 0.0
    %3571 = vmatprep.subr.mxu0 0.0
    %3572 = vmatpush1.msra.mxu0 0.0
    %3573 = vmatprep.subr.mxu0 0.0
    %3574 = vmatpush1.msra.mxu0 0.0
    %3575 = vmatprep.mubr.f32.mxu0 0.0
    %3576 = vmatmul.mubr.f32.gmra.mrb[0].mxu0 %v3509
    %v3577 = vpop.f32.mrb[0].mxu0
    %v3578 = vadd.f32 0.0, %v3577
    %v3579 = vpop.f32.mrb[0].mxu0
    %v3580 = vadd.f32 0.0, %v3579
    %3581 = vdwg.mxu0
    %v3582 = vmul.f32 %v3423, %v3578
    %v3583 = vmul.f32 %v3429, %v3580
    %v3584 = vlaneseq
    %v3585 = vshrl.u32 %v3584, 7
    %v3586 = vsub.s32 0, %v3585
    %v3587 = vrot.slane %v3582, %v3586
    %v3588 = vlaneseq
    %v3589 = vshrl.u32 %v3588, 7
    %v3590 = vsub.s32 0, %v3589
    %v3591 = vrot.slane %v3583, %v3590
    %v3592 = vmul.f32 %v3333, %v3587
    %v3593 = vmul.f32 %v3335, %v3591
    %3594 = vmatprep.subr.mxu0 0.0
    %3595 = vmatpush1.msra.mxu0 %v1661
    %3596 = vmatprep.subr.mxu0 0.0
    %3597 = vmatpush1.msra.mxu0 %v1662
    %3598 = vmatprep.subr.mxu0 0.0
    %3599 = vmatpush1.msra.mxu0 %v1663
    %3600 = vmatprep.subr.mxu0 0.0
    %3601 = vmatpush1.msra.mxu0 %v1664
    %3602 = vmatprep.subr.mxu0 0.0
    %3603 = vmatpush1.msra.mxu0 %v1665
    %3604 = vmatprep.subr.mxu0 0.0
    %3605 = vmatpush1.msra.mxu0 %v1666
    %3606 = vmatprep.subr.mxu0 0.0
    %3607 = vmatpush1.msra.mxu0 %v1667
    %3608 = vmatprep.subr.mxu0 0.0
    %3609 = vmatpush1.msra.mxu0 %v1668
    %3610 = vmatprep.subr.mxu0 0.0
    %3611 = vmatpush1.msra.mxu0 %v1669
    %3612 = vmatprep.subr.mxu0 0.0
    %3613 = vmatpush1.msra.mxu0 %v1670
    %3614 = vmatprep.subr.mxu0 0.0
    %3615 = vmatpush1.msra.mxu0 %v1671
    %3616 = vmatprep.subr.mxu0 0.0
    %3617 = vmatpush1.msra.mxu0 %v1672
    %3618 = vmatprep.subr.mxu0 0.0
    %3619 = vmatpush1.msra.mxu0 %v1673
    %3620 = vmatprep.subr.mxu0 0.0
    %3621 = vmatpush1.msra.mxu0 %v1674
    %3622 = vmatprep.subr.mxu0 0.0
    %3623 = vmatpush1.msra.mxu0 %v1675
    %3624 = vmatprep.subr.mxu0 0.0
    %3625 = vmatpush1.msra.mxu0 %v1676
    %3626 = vmatprep.subr.mxu0 0.0
    %3627 = vmatpush1.msra.mxu0 %v1677
    %3628 = vmatprep.subr.mxu0 0.0
    %3629 = vmatpush1.msra.mxu0 %v1678
    %3630 = vmatprep.subr.mxu0 0.0
    %3631 = vmatpush1.msra.mxu0 %v1679
    %3632 = vmatprep.subr.mxu0 0.0
    %3633 = vmatpush1.msra.mxu0 %v1680
    %3634 = vmatprep.subr.mxu0 0.0
    %3635 = vmatpush1.msra.mxu0 %v1681
    %3636 = vmatprep.subr.mxu0 0.0
    %3637 = vmatpush1.msra.mxu0 %v1682
    %3638 = vmatprep.subr.mxu0 0.0
    %3639 = vmatpush1.msra.mxu0 %v1683
    %3640 = vmatprep.subr.mxu0 0.0
    %3641 = vmatpush1.msra.mxu0 %v1684
    %3642 = vmatprep.subr.mxu0 0.0
    %3643 = vmatpush1.msra.mxu0 %v1685
    %3644 = vmatprep.subr.mxu0 0.0
    %3645 = vmatpush1.msra.mxu0 %v1686
    %3646 = vmatprep.subr.mxu0 0.0
    %3647 = vmatpush1.msra.mxu0 %v1687
    %3648 = vmatprep.subr.mxu0 0.0
    %3649 = vmatpush1.msra.mxu0 %v1688
    %3650 = vmatprep.subr.mxu0 0.0
    %3651 = vmatpush1.msra.mxu0 %v1689
    %3652 = vmatprep.subr.mxu0 0.0
    %3653 = vmatpush1.msra.mxu0 %v1690
    %3654 = vmatprep.subr.mxu0 0.0
    %3655 = vmatpush1.msra.mxu0 %v1691
    %3656 = vmatprep.subr.mxu0 0.0
    %3657 = vmatpush1.msra.mxu0 %v1692
    %3658 = vmatprep.mubr.f32.mxu0 %v3593
    %3659 = vmatmul.mubr.f32.gmra.mrb[0].mxu0 %v3592
    %v3660 = vpop.f32.mrb[0].mxu0
    %v3661 = vadd.f32 0.0, %v3660
    %v3662 = vpop.f32.mrb[0].mxu0
    %3663 = vdwg.mxu0
    %v3664 = vsel %vm2137, %v3661, -inf
    %3665 = vmax.xlane.f32.xlu0 %v3664
    %v3666 = vpop.xlane.xlu0 %3665
    %v3667 = vsub.f32 %v3661, %v3666
    %v3668 = vmul.f32 %v3667, 1.442695
    %v3669 = vpow.pop %v3668
    %v3670 = vsel %vm2137, %v3669, 0.0
    %3671 = vadd.xlane.f32.xlu0 %v3670
    %v3672 = vpop.xlane.xlu0 %3671
    %v3673 = vrcp.pop %v3672
    %v3674 = vmul.f32 %v3669, %v3673
    %v3676 = vsel %vm2137, %v3674, 0
    %3678 = vmatprep.subr.mxu0 %v1706
    %3679 = vmatpush1.msra.mxu0 %v1705
    %3680 = vmatprep.subr.mxu0 0.0
    %3681 = vmatpush1.msra.mxu0 0.0
    %3682 = vmatprep.subr.mxu0 0.0
    %3683 = vmatpush1.msra.mxu0 0.0
    %3684 = vmatprep.subr.mxu0 0.0
    %3685 = vmatpush1.msra.mxu0 0.0
    %3686 = vmatprep.subr.mxu0 0.0
    %3687 = vmatpush1.msra.mxu0 0.0
    %3688 = vmatprep.subr.mxu0 0.0
    %3689 = vmatpush1.msra.mxu0 0.0
    %3690 = vmatprep.subr.mxu0 0.0
    %3691 = vmatpush1.msra.mxu0 0.0
    %3692 = vmatprep.subr.mxu0 0.0
    %3693 = vmatpush1.msra.mxu0 0.0
    %3694 = vmatprep.subr.mxu0 0.0
    %3695 = vmatpush1.msra.mxu0 0.0
    %3696 = vmatprep.subr.mxu0 0.0
    %3697 = vmatpush1.msra.mxu0 0.0
    %3698 = vmatprep.subr.mxu0 0.0
    %3699 = vmatpush1.msra.mxu0 0.0
    %3700 = vmatprep.subr.mxu0 0.0
    %3701 = vmatpush1.msra.mxu0 0.0
    %3702 = vmatprep.subr.mxu0 0.0
    %3703 = vmatpush1.msra.mxu0 0.0
    %3704 = vmatprep.subr.mxu0 0.0
    %3705 = vmatpush1.msra.mxu0 0.0
    %3706 = vmatprep.subr.mxu0 0.0
    %3707 = vmatpush1.msra.mxu0 0.0
    %3708 = vmatprep.subr.mxu0 0.0
    %3709 = vmatpush1.msra.mxu0 0.0
    %3710 = vmatprep.subr.mxu0 0.0
    %3711 = vmatpush1.msra.mxu0 0.0
    %3712 = vmatprep.subr.mxu0 0.0
    %3713 = vmatpush1.msra.mxu0 0.0
    %3714 = vmatprep.subr.mxu0 0.0
    %3715 = vmatpush1.msra.mxu0 0.0
    %3716 = vmatprep.subr.mxu0 0.0
    %3717 = vmatpush1.msra.mxu0 0.0
    %3718 = vmatprep.subr.mxu0 0.0
    %3719 = vmatpush1.msra.mxu0 0.0
    %3720 = vmatprep.subr.mxu0 0.0
    %3721 = vmatpush1.msra.mxu0 0.0
    %3722 = vmatprep.subr.mxu0 0.0
    %3723 = vmatpush1.msra.mxu0 0.0
    %3724 = vmatprep.subr.mxu0 0.0
    %3725 = vmatpush1.msra.mxu0 0.0
    %3726 = vmatprep.subr.mxu0 0.0
    %3727 = vmatpush1.msra.mxu0 0.0
    %3728 = vmatprep.subr.mxu0 0.0
    %3729 = vmatpush1.msra.mxu0 0.0
    %3730 = vmatprep.subr.mxu0 0.0
    %3731 = vmatpush1.msra.mxu0 0.0
    %3732 = vmatprep.subr.mxu0 0.0
    %3733 = vmatpush1.msra.mxu0 0.0
    %3734 = vmatprep.subr.mxu0 0.0
    %3735 = vmatpush1.msra.mxu0 0.0
    %3736 = vmatprep.subr.mxu0 0.0
    %3737 = vmatpush1.msra.mxu0 0.0
    %3738 = vmatprep.subr.mxu0 0.0
    %3739 = vmatpush1.msra.mxu0 0.0
    %3740 = vmatprep.subr.mxu0 0.0
    %3741 = vmatpush1.msra.mxu0 0.0
    %3742 = vmatprep.mubr.f32.mxu0 0.0
    %3743 = vmatmul.mubr.f32.gmra.mrb[0].mxu0 %v3676
    %v3744 = vpop.f32.mrb[0].mxu0
    %v3745 = vadd.f32 0.0, %v3744
    %v3746 = vpop.f32.mrb[0].mxu0
    %v3747 = vadd.f32 0.0, %v3746
    %3748 = vdwg.mxu0
    %v3749 = vmul.f32 %v3745, %v3333
    %v3750 = vmul.f32 %v3747, %v3335
    %v3751 = vrot.slane %v3749, 4
    %v3752 = vadd.f32 %v3749, %v3751
    %v3753 = vrot.slane %v3752, 2
    %v3754 = vadd.f32 %v3752, %v3753
    %v3755 = vrot.slane %v3754, 1
    %v3756 = vadd.f32 %v3754, %v3755
    %v3757 = vrot.slane %v3750, 4
    %v3758 = vadd.f32 %v3750, %v3757
    %v3759 = vrot.slane %v3758, 2
    %v3760 = vadd.f32 %v3758, %v3759
    %v3761 = vrot.slane %v3760, 1
    %v3762 = vadd.f32 %v3760, %v3761
    %v3763 = vmul.f32 %v3756, %v3756
    %v3764 = vmul.f32 %v3762, %v3762
    %3765 = vmatprep.subr.mxu0 0.0
    %3766 = vmatpush1.msra.mxu0 %v1661
    %3767 = vmatprep.subr.mxu0 0.0
    %3768 = vmatpush1.msra.mxu0 %v1662
    %3769 = vmatprep.subr.mxu0 0.0
    %3770 = vmatpush1.msra.mxu0 %v1663
    %3771 = vmatprep.subr.mxu0 0.0
    %3772 = vmatpush1.msra.mxu0 %v1664
    %3773 = vmatprep.subr.mxu0 0.0
    %3774 = vmatpush1.msra.mxu0 %v1665
    %3775 = vmatprep.subr.mxu0 0.0
    %3776 = vmatpush1.msra.mxu0 %v1666
    %3777 = vmatprep.subr.mxu0 0.0
    %3778 = vmatpush1.msra.mxu0 %v1667
    %3779 = vmatprep.subr.mxu0 0.0
    %3780 = vmatpush1.msra.mxu0 %v1668
    %3781 = vmatprep.subr.mxu0 0.0
    %3782 = vmatpush1.msra.mxu0 %v1669
    %3783 = vmatprep.subr.mxu0 0.0
    %3784 = vmatpush1.msra.mxu0 %v1670
    %3785 = vmatprep.subr.mxu0 0.0
    %3786 = vmatpush1.msra.mxu0 %v1671
    %3787 = vmatprep.subr.mxu0 0.0
    %3788 = vmatpush1.msra.mxu0 %v1672
    %3789 = vmatprep.subr.mxu0 0.0
    %3790 = vmatpush1.msra.mxu0 %v1673
    %3791 = vmatprep.subr.mxu0 0.0
    %3792 = vmatpush1.msra.mxu0 %v1674
    %3793 = vmatprep.subr.mxu0 0.0
    %3794 = vmatpush1.msra.mxu0 %v1675
    %3795 = vmatprep.subr.mxu0 0.0
    %3796 = vmatpush1.msra.mxu0 %v1676
    %3797 = vmatprep.subr.mxu0 0.0
    %3798 = vmatpush1.msra.mxu0 %v1677
    %3799 = vmatprep.subr.mxu0 0.0
    %3800 = vmatpush1.msra.mxu0 %v1678
    %3801 = vmatprep.subr.mxu0 0.0
    %3802 = vmatpush1.msra.mxu0 %v1679
    %3803 = vmatprep.subr.mxu0 0.0
    %3804 = vmatpush1.msra.mxu0 %v1680
    %3805 = vmatprep.subr.mxu0 0.0
    %3806 = vmatpush1.msra.mxu0 %v1681
    %3807 = vmatprep.subr.mxu0 0.0
    %3808 = vmatpush1.msra.mxu0 %v1682
    %3809 = vmatprep.subr.mxu0 0.0
    %3810 = vmatpush1.msra.mxu0 %v1683
    %3811 = vmatprep.subr.mxu0 0.0
    %3812 = vmatpush1.msra.mxu0 %v1684
    %3813 = vmatprep.subr.mxu0 0.0
    %3814 = vmatpush1.msra.mxu0 %v1685
    %3815 = vmatprep.subr.mxu0 0.0
    %3816 = vmatpush1.msra.mxu0 %v1686
    %3817 = vmatprep.subr.mxu0 0.0
    %3818 = vmatpush1.msra.mxu0 %v1687
    %3819 = vmatprep.subr.mxu0 0.0
    %3820 = vmatpush1.msra.mxu0 %v1688
    %3821 = vmatprep.subr.mxu0 0.0
    %3822 = vmatpush1.msra.mxu0 %v1689
    %3823 = vmatprep.subr.mxu0 0.0
    %3824 = vmatpush1.msra.mxu0 %v1690
    %3825 = vmatprep.subr.mxu0 0.0
    %3826 = vmatpush1.msra.mxu0 %v1691
    %3827 = vmatprep.subr.mxu0 0.0
    %3828 = vmatpush1.msra.mxu0 %v1692
    %3829 = vmatprep.mubr.f32.mxu0 %v3764
    %3830 = vmatmul.mubr.f32.gmra.mrb[0].mxu0 %v3763
    %v3831 = vpop.f32.mrb[0].mxu0
    %v3832 = vadd.f32 0.0, %v3831
    %v3833 = vpop.f32.mrb[0].mxu0
    %3834 = vdwg.mxu0
    %v3835 = vadd.f32 %v3832, 1.0
    %v3836 = vrcp.pop %v3835
    %v3837 = vmul.f32 %v3832, %v3836
    %v3838 = vadd.f32 %v3832, 1e-12
    %v3839 = vrsqrt.pop %v3838
    %v3840 = vmul.f32 %v3837, %v3839
    %v3842 = vsel %vm2137, %v3840, 0
    %3844 = vmatprep.subr.mxu0 %v1706
    %3845 = vmatpush1.msra.mxu0 %v1705
    %3846 = vmatprep.subr.mxu0 0.0
    %3847 = vmatpush1.msra.mxu0 0.0
    %3848 = vmatprep.subr.mxu0 0.0
    %3849 = vmatpush1.msra.mxu0 0.0
    %3850 = vmatprep.subr.mxu0 0.0
    %3851 = vmatpush1.msra.mxu0 0.0
    %3852 = vmatprep.subr.mxu0 0.0
    %3853 = vmatpush1.msra.mxu0 0.0
    %3854 = vmatprep.subr.mxu0 0.0
    %3855 = vmatpush1.msra.mxu0 0.0
    %3856 = vmatprep.subr.mxu0 0.0
    %3857 = vmatpush1.msra.mxu0 0.0
    %3858 = vmatprep.subr.mxu0 0.0
    %3859 = vmatpush1.msra.mxu0 0.0
    %3860 = vmatprep.subr.mxu0 0.0
    %3861 = vmatpush1.msra.mxu0 0.0
    %3862 = vmatprep.subr.mxu0 0.0
    %3863 = vmatpush1.msra.mxu0 0.0
    %3864 = vmatprep.subr.mxu0 0.0
    %3865 = vmatpush1.msra.mxu0 0.0
    %3866 = vmatprep.subr.mxu0 0.0
    %3867 = vmatpush1.msra.mxu0 0.0
    %3868 = vmatprep.subr.mxu0 0.0
    %3869 = vmatpush1.msra.mxu0 0.0
    %3870 = vmatprep.subr.mxu0 0.0
    %3871 = vmatpush1.msra.mxu0 0.0
    %3872 = vmatprep.subr.mxu0 0.0
    %3873 = vmatpush1.msra.mxu0 0.0
    %3874 = vmatprep.subr.mxu0 0.0
    %3875 = vmatpush1.msra.mxu0 0.0
    %3876 = vmatprep.subr.mxu0 0.0
    %3877 = vmatpush1.msra.mxu0 0.0
    %3878 = vmatprep.subr.mxu0 0.0
    %3879 = vmatpush1.msra.mxu0 0.0
    %3880 = vmatprep.subr.mxu0 0.0
    %3881 = vmatpush1.msra.mxu0 0.0
    %3882 = vmatprep.subr.mxu0 0.0
    %3883 = vmatpush1.msra.mxu0 0.0
    %3884 = vmatprep.subr.mxu0 0.0
    %3885 = vmatpush1.msra.mxu0 0.0
    %3886 = vmatprep.subr.mxu0 0.0
    %3887 = vmatpush1.msra.mxu0 0.0
    %3888 = vmatprep.subr.mxu0 0.0
    %3889 = vmatpush1.msra.mxu0 0.0
    %3890 = vmatprep.subr.mxu0 0.0
    %3891 = vmatpush1.msra.mxu0 0.0
    %3892 = vmatprep.subr.mxu0 0.0
    %3893 = vmatpush1.msra.mxu0 0.0
    %3894 = vmatprep.subr.mxu0 0.0
    %3895 = vmatpush1.msra.mxu0 0.0
    %3896 = vmatprep.subr.mxu0 0.0
    %3897 = vmatpush1.msra.mxu0 0.0
    %3898 = vmatprep.subr.mxu0 0.0
    %3899 = vmatpush1.msra.mxu0 0.0
    %3900 = vmatprep.subr.mxu0 0.0
    %3901 = vmatpush1.msra.mxu0 0.0
    %3902 = vmatprep.subr.mxu0 0.0
    %3903 = vmatpush1.msra.mxu0 0.0
    %3904 = vmatprep.subr.mxu0 0.0
    %3905 = vmatpush1.msra.mxu0 0.0
    %3906 = vmatprep.subr.mxu0 0.0
    %3907 = vmatpush1.msra.mxu0 0.0
    %3908 = vmatprep.mubr.f32.mxu0 0.0
    %3909 = vmatmul.mubr.f32.gmra.mrb[0].mxu0 %v3842
    %v3910 = vpop.f32.mrb[0].mxu0
    %v3911 = vadd.f32 0.0, %v3910
    %v3912 = vpop.f32.mrb[0].mxu0
    %v3913 = vadd.f32 0.0, %v3912
    %3914 = vdwg.mxu0
    %v3915 = vmul.f32 %v3756, %v3911
    %v3916 = vmul.f32 %v3762, %v3913
    %v3917 = vlaneseq
    %v3918 = vshrl.u32 %v3917, 7
    %v3919 = vsub.s32 0, %v3918
    %v3920 = vrot.slane %v3915, %v3919
    %v3921 = vlaneseq
    %v3922 = vshrl.u32 %v3921, 7
    %v3923 = vsub.s32 0, %v3922
    %v3924 = vrot.slane %v3916, %v3923
    %v3925 = vmul.f32 %v3333, %v3920
    %v3926 = vmul.f32 %v3335, %v3924
    %3927 = vmatprep.subr.mxu0 0.0
    %3928 = vmatpush1.msra.mxu0 %v1661
    %3929 = vmatprep.subr.mxu0 0.0
    %3930 = vmatpush1.msra.mxu0 %v1662
    %3931 = vmatprep.subr.mxu0 0.0
    %3932 = vmatpush1.msra.mxu0 %v1663
    %3933 = vmatprep.subr.mxu0 0.0
    %3934 = vmatpush1.msra.mxu0 %v1664
    %3935 = vmatprep.subr.mxu0 0.0
    %3936 = vmatpush1.msra.mxu0 %v1665
    %3937 = vmatprep.subr.mxu0 0.0
    %3938 = vmatpush1.msra.mxu0 %v1666
    %3939 = vmatprep.subr.mxu0 0.0
    %3940 = vmatpush1.msra.mxu0 %v1667
    %3941 = vmatprep.subr.mxu0 0.0
    %3942 = vmatpush1.msra.mxu0 %v1668
    %3943 = vmatprep.subr.mxu0 0.0
    %3944 = vmatpush1.msra.mxu0 %v1669
    %3945 = vmatprep.subr.mxu0 0.0
    %3946 = vmatpush1.msra.mxu0 %v1670
    %3947 = vmatprep.subr.mxu0 0.0
    %3948 = vmatpush1.msra.mxu0 %v1671
    %3949 = vmatprep.subr.mxu0 0.0
    %3950 = vmatpush1.msra.mxu0 %v1672
    %3951 = vmatprep.subr.mxu0 0.0
    %3952 = vmatpush1.msra.mxu0 %v1673
    %3953 = vmatprep.subr.mxu0 0.0
    %3954 = vmatpush1.msra.mxu0 %v1674
    %3955 = vmatprep.subr.mxu0 0.0
    %3956 = vmatpush1.msra.mxu0 %v1675
    %3957 = vmatprep.subr.mxu0 0.0
    %3958 = vmatpush1.msra.mxu0 %v1676
    %3959 = vmatprep.subr.mxu0 0.0
    %3960 = vmatpush1.msra.mxu0 %v1677
    %3961 = vmatprep.subr.mxu0 0.0
    %3962 = vmatpush1.msra.mxu0 %v1678
    %3963 = vmatprep.subr.mxu0 0.0
    %3964 = vmatpush1.msra.mxu0 %v1679
    %3965 = vmatprep.subr.mxu0 0.0
    %3966 = vmatpush1.msra.mxu0 %v1680
    %3967 = vmatprep.subr.mxu0 0.0
    %3968 = vmatpush1.msra.mxu0 %v1681
    %3969 = vmatprep.subr.mxu0 0.0
    %3970 = vmatpush1.msra.mxu0 %v1682
    %3971 = vmatprep.subr.mxu0 0.0
    %3972 = vmatpush1.msra.mxu0 %v1683
    %3973 = vmatprep.subr.mxu0 0.0
    %3974 = vmatpush1.msra.mxu0 %v1684
    %3975 = vmatprep.subr.mxu0 0.0
    %3976 = vmatpush1.msra.mxu0 %v1685
    %3977 = vmatprep.subr.mxu0 0.0
    %3978 = vmatpush1.msra.mxu0 %v1686
    %3979 = vmatprep.subr.mxu0 0.0
    %3980 = vmatpush1.msra.mxu0 %v1687
    %3981 = vmatprep.subr.mxu0 0.0
    %3982 = vmatpush1.msra.mxu0 %v1688
    %3983 = vmatprep.subr.mxu0 0.0
    %3984 = vmatpush1.msra.mxu0 %v1689
    %3985 = vmatprep.subr.mxu0 0.0
    %3986 = vmatpush1.msra.mxu0 %v1690
    %3987 = vmatprep.subr.mxu0 0.0
    %3988 = vmatpush1.msra.mxu0 %v1691
    %3989 = vmatprep.subr.mxu0 0.0
    %3990 = vmatpush1.msra.mxu0 %v1692
    %3991 = vmatprep.mubr.f32.mxu0 %v3926
    %3992 = vmatmul.mubr.f32.gmra.mrb[0].mxu0 %v3925
    %v3993 = vpop.f32.mrb[0].mxu0
    %v3994 = vadd.f32 0.0, %v3993
    %v3995 = vpop.f32.mrb[0].mxu0
    %3996 = vdwg.mxu0
    %v3997 = vadd.f32 %v3661, %v3994
    %v3998 = vsel %vm2137, %v3997, -inf
    %3999 = vmax.xlane.f32.xlu0 %v3998
    %v4000 = vpop.xlane.xlu0 %3999
    %v4001 = vsub.f32 %v3997, %v4000
    %v4002 = vmul.f32 %v4001, 1.442695
    %v4003 = vpow.pop %v4002
    %v4004 = vsel %vm2137, %v4003, 0.0
    %4005 = vadd.xlane.f32.xlu0 %v4004
    %v4006 = vpop.xlane.xlu0 %4005
    %v4007 = vrcp.pop %v4006
    %v4008 = vmul.f32 %v4003, %v4007
    %v4010 = vsel %vm2137, %v4008, 0
    %4012 = vmatprep.subr.mxu0 %v1706
    %4013 = vmatpush1.msra.mxu0 %v1705
    %4014 = vmatprep.subr.mxu0 0.0
    %4015 = vmatpush1.msra.mxu0 0.0
    %4016 = vmatprep.subr.mxu0 0.0
    %4017 = vmatpush1.msra.mxu0 0.0
    %4018 = vmatprep.subr.mxu0 0.0
    %4019 = vmatpush1.msra.mxu0 0.0
    %4020 = vmatprep.subr.mxu0 0.0
    %4021 = vmatpush1.msra.mxu0 0.0
    %4022 = vmatprep.subr.mxu0 0.0
    %4023 = vmatpush1.msra.mxu0 0.0
    %4024 = vmatprep.subr.mxu0 0.0
    %4025 = vmatpush1.msra.mxu0 0.0
    %4026 = vmatprep.subr.mxu0 0.0
    %4027 = vmatpush1.msra.mxu0 0.0
    %4028 = vmatprep.subr.mxu0 0.0
    %4029 = vmatpush1.msra.mxu0 0.0
    %4030 = vmatprep.subr.mxu0 0.0
    %4031 = vmatpush1.msra.mxu0 0.0
    %4032 = vmatprep.subr.mxu0 0.0
    %4033 = vmatpush1.msra.mxu0 0.0
    %4034 = vmatprep.subr.mxu0 0.0
    %4035 = vmatpush1.msra.mxu0 0.0
    %4036 = vmatprep.subr.mxu0 0.0
    %4037 = vmatpush1.msra.mxu0 0.0
    %4038 = vmatprep.subr.mxu0 0.0
    %4039 = vmatpush1.msra.mxu0 0.0
    %4040 = vmatprep.subr.mxu0 0.0
    %4041 = vmatpush1.msra.mxu0 0.0
    %4042 = vmatprep.subr.mxu0 0.0
    %4043 = vmatpush1.msra.mxu0 0.0
    %4044 = vmatprep.subr.mxu0 0.0
    %4045 = vmatpush1.msra.mxu0 0.0
    %4046 = vmatprep.subr.mxu0 0.0
    %4047 = vmatpush1.msra.mxu0 0.0
    %4048 = vmatprep.subr.mxu0 0.0
    %4049 = vmatpush1.msra.mxu0 0.0
    %4050 = vmatprep.subr.mxu0 0.0
    %4051 = vmatpush1.msra.mxu0 0.0
    %4052 = vmatprep.subr.mxu0 0.0
    %4053 = vmatpush1.msra.mxu0 0.0
    %4054 = vmatprep.subr.mxu0 0.0
    %4055 = vmatpush1.msra.mxu0 0.0
    %4056 = vmatprep.subr.mxu0 0.0
    %4057 = vmatpush1.msra.mxu0 0.0
    %4058 = vmatprep.subr.mxu0 0.0
    %4059 = vmatpush1.msra.mxu0 0.0
    %4060 = vmatprep.subr.mxu0 0.0
    %4061 = vmatpush1.msra.mxu0 0.0
    %4062 = vmatprep.subr.mxu0 0.0
    %4063 = vmatpush1.msra.mxu0 0.0
    %4064 = vmatprep.subr.mxu0 0.0
    %4065 = vmatpush1.msra.mxu0 0.0
    %4066 = vmatprep.subr.mxu0 0.0
    %4067 = vmatpush1.msra.mxu0 0.0
    %4068 = vmatprep.subr.mxu0 0.0
    %4069 = vmatpush1.msra.mxu0 0.0
    %4070 = vmatprep.subr.mxu0 0.0
    %4071 = vmatpush1.msra.mxu0 0.0
    %4072 = vmatprep.subr.mxu0 0.0
    %4073 = vmatpush1.msra.mxu0 0.0
    %4074 = vmatprep.subr.mxu0 0.0
    %4075 = vmatpush1.msra.mxu0 0.0
    %4076 = vmatprep.mubr.f32.mxu0 0.0
    %4077 = vmatmul.mubr.f32.gmra.mrb[0].mxu0 %v4010
    %v4078 = vpop.f32.mrb[0].mxu0
    %v4079 = vadd.f32 0.0, %v4078
    %v4080 = vpop.f32.mrb[0].mxu0
    %v4081 = vadd.f32 0.0, %v4080
    %4082 = vdwg.mxu0
    %v4083 = vmul.f32 %v4079, %v3333
    %v4084 = vmul.f32 %v4081, %v3335
    %v4085 = vrot.slane %v4083, 4
    %v4086 = vadd.f32 %v4083, %v4085
    %v4087 = vrot.slane %v4086, 2
    %v4088 = vadd.f32 %v4086, %v4087
    %v4089 = vrot.slane %v4088, 1
    %v4090 = vadd.f32 %v4088, %v4089
    %v4091 = vrot.slane %v4084, 4
    %v4092 = vadd.f32 %v4084, %v4091
    %v4093 = vrot.slane %v4092, 2
    %v4094 = vadd.f32 %v4092, %v4093
    %v4095 = vrot.slane %v4094, 1
    %v4096 = vadd.f32 %v4094, %v4095
    %v4097 = vmul.f32 %v4090, %v4090
    %v4098 = vmul.f32 %v4096, %v4096
    %4099 = vmatprep.subr.mxu0 0.0
    %4100 = vmatpush1.msra.mxu0 %v1661
    %4101 = vmatprep.subr.mxu0 0.0
    %4102 = vmatpush1.msra.mxu0 %v1662
    %4103 = vmatprep.subr.mxu0 0.0
    %4104 = vmatpush1.msra.mxu0 %v1663
    %4105 = vmatprep.subr.mxu0 0.0
    %4106 = vmatpush1.msra.mxu0 %v1664
    %4107 = vmatprep.subr.mxu0 0.0
    %4108 = vmatpush1.msra.mxu0 %v1665
    %4109 = vmatprep.subr.mxu0 0.0
    %4110 = vmatpush1.msra.mxu0 %v1666
    %4111 = vmatprep.subr.mxu0 0.0
    %4112 = vmatpush1.msra.mxu0 %v1667
    %4113 = vmatprep.subr.mxu0 0.0
    %4114 = vmatpush1.msra.mxu0 %v1668
    %4115 = vmatprep.subr.mxu0 0.0
    %4116 = vmatpush1.msra.mxu0 %v1669
    %4117 = vmatprep.subr.mxu0 0.0
    %4118 = vmatpush1.msra.mxu0 %v1670
    %4119 = vmatprep.subr.mxu0 0.0
    %4120 = vmatpush1.msra.mxu0 %v1671
    %4121 = vmatprep.subr.mxu0 0.0
    %4122 = vmatpush1.msra.mxu0 %v1672
    %4123 = vmatprep.subr.mxu0 0.0
    %4124 = vmatpush1.msra.mxu0 %v1673
    %4125 = vmatprep.subr.mxu0 0.0
    %4126 = vmatpush1.msra.mxu0 %v1674
    %4127 = vmatprep.subr.mxu0 0.0
    %4128 = vmatpush1.msra.mxu0 %v1675
    %4129 = vmatprep.subr.mxu0 0.0
    %4130 = vmatpush1.msra.mxu0 %v1676
    %4131 = vmatprep.subr.mxu0 0.0
    %4132 = vmatpush1.msra.mxu0 %v1677
    %4133 = vmatprep.subr.mxu0 0.0
    %4134 = vmatpush1.msra.mxu0 %v1678
    %4135 = vmatprep.subr.mxu0 0.0
    %4136 = vmatpush1.msra.mxu0 %v1679
    %4137 = vmatprep.subr.mxu0 0.0
    %4138 = vmatpush1.msra.mxu0 %v1680
    %4139 = vmatprep.subr.mxu0 0.0
    %4140 = vmatpush1.msra.mxu0 %v1681
    %4141 = vmatprep.subr.mxu0 0.0
    %4142 = vmatpush1.msra.mxu0 %v1682
    %4143 = vmatprep.subr.mxu0 0.0
    %4144 = vmatpush1.msra.mxu0 %v1683
    %4145 = vmatprep.subr.mxu0 0.0
    %4146 = vmatpush1.msra.mxu0 %v1684
    %4147 = vmatprep.subr.mxu0 0.0
    %4148 = vmatpush1.msra.mxu0 %v1685
    %4149 = vmatprep.subr.mxu0 0.0
    %4150 = vmatpush1.msra.mxu0 %v1686
    %4151 = vmatprep.subr.mxu0 0.0
    %4152 = vmatpush1.msra.mxu0 %v1687
    %4153 = vmatprep.subr.mxu0 0.0
    %4154 = vmatpush1.msra.mxu0 %v1688
    %4155 = vmatprep.subr.mxu0 0.0
    %4156 = vmatpush1.msra.mxu0 %v1689
    %4157 = vmatprep.subr.mxu0 0.0
    %4158 = vmatpush1.msra.mxu0 %v1690
    %4159 = vmatprep.subr.mxu0 0.0
    %4160 = vmatpush1.msra.mxu0 %v1691
    %4161 = vmatprep.subr.mxu0 0.0
    %4162 = vmatpush1.msra.mxu0 %v1692
    %4163 = vmatprep.mubr.f32.mxu0 %v4098
    %4164 = vmatmul.mubr.f32.gmra.mrb[0].mxu0 %v4097
    %v4165 = vpop.f32.mrb[0].mxu0
    %v4166 = vadd.f32 0.0, %v4165
    %v4167 = vpop.f32.mrb[0].mxu0
    %4168 = vdwg.mxu0
    %v4169 = vadd.f32 %v4166, 1.0
    %v4170 = vrcp.pop %v4169
    %v4171 = vmul.f32 %v4166, %v4170
    %v4172 = vadd.f32 %v4166, 1e-12
    %v4173 = vrsqrt.pop %v4172
    %v4174 = vmul.f32 %v4171, %v4173
    %v4176 = vsel %vm2137, %v4174, 0
    %4178 = vmatprep.subr.mxu0 %v1706
    %4179 = vmatpush1.msra.mxu0 %v1705
    %4180 = vmatprep.subr.mxu0 0.0
    %4181 = vmatpush1.msra.mxu0 0.0
    %4182 = vmatprep.subr.mxu0 0.0
    %4183 = vmatpush1.msra.mxu0 0.0
    %4184 = vmatprep.subr.mxu0 0.0
    %4185 = vmatpush1.msra.mxu0 0.0
    %4186 = vmatprep.subr.mxu0 0.0
    %4187 = vmatpush1.msra.mxu0 0.0
    %4188 = vmatprep.subr.mxu0 0.0
    %4189 = vmatpush1.msra.mxu0 0.0
    %4190 = vmatprep.subr.mxu0 0.0
    %4191 = vmatpush1.msra.mxu0 0.0
    %4192 = vmatprep.subr.mxu0 0.0
    %4193 = vmatpush1.msra.mxu0 0.0
    %4194 = vmatprep.subr.mxu0 0.0
    %4195 = vmatpush1.msra.mxu0 0.0
    %4196 = vmatprep.subr.mxu0 0.0
    %4197 = vmatpush1.msra.mxu0 0.0
    %4198 = vmatprep.subr.mxu0 0.0
    %4199 = vmatpush1.msra.mxu0 0.0
    %4200 = vmatprep.subr.mxu0 0.0
    %4201 = vmatpush1.msra.mxu0 0.0
    %4202 = vmatprep.subr.mxu0 0.0
    %4203 = vmatpush1.msra.mxu0 0.0
    %4204 = vmatprep.subr.mxu0 0.0
    %4205 = vmatpush1.msra.mxu0 0.0
    %4206 = vmatprep.subr.mxu0 0.0
    %4207 = vmatpush1.msra.mxu0 0.0
    %4208 = vmatprep.subr.mxu0 0.0
    %4209 = vmatpush1.msra.mxu0 0.0
    %4210 = vmatprep.subr.mxu0 0.0
    %4211 = vmatpush1.msra.mxu0 0.0
    %4212 = vmatprep.subr.mxu0 0.0
    %4213 = vmatpush1.msra.mxu0 0.0
    %4214 = vmatprep.subr.mxu0 0.0
    %4215 = vmatpush1.msra.mxu0 0.0
    %4216 = vmatprep.subr.mxu0 0.0
    %4217 = vmatpush1.msra.mxu0 0.0
    %4218 = vmatprep.subr.mxu0 0.0
    %4219 = vmatpush1.msra.mxu0 0.0
    %4220 = vmatprep.subr.mxu0 0.0
    %4221 = vmatpush1.msra.mxu0 0.0
    %4222 = vmatprep.subr.mxu0 0.0
    %4223 = vmatpush1.msra.mxu0 0.0
    %4224 = vmatprep.subr.mxu0 0.0
    %4225 = vmatpush1.msra.mxu0 0.0
    %4226 = vmatprep.subr.mxu0 0.0
    %4227 = vmatpush1.msra.mxu0 0.0
    %4228 = vmatprep.subr.mxu0 0.0
    %4229 = vmatpush1.msra.mxu0 0.0
    %4230 = vmatprep.subr.mxu0 0.0
    %4231 = vmatpush1.msra.mxu0 0.0
    %4232 = vmatprep.subr.mxu0 0.0
    %4233 = vmatpush1.msra.mxu0 0.0
    %4234 = vmatprep.subr.mxu0 0.0
    %4235 = vmatpush1.msra.mxu0 0.0
    %4236 = vmatprep.subr.mxu0 0.0
    %4237 = vmatpush1.msra.mxu0 0.0
    %4238 = vmatprep.subr.mxu0 0.0
    %4239 = vmatpush1.msra.mxu0 0.0
    %4240 = vmatprep.subr.mxu0 0.0
    %4241 = vmatpush1.msra.mxu0 0.0
    %4242 = vmatprep.mubr.f32.mxu0 0.0
    %4243 = vmatmul.mubr.f32.gmra.mrb[0].mxu0 %v4176
    %v4244 = vpop.f32.mrb[0].mxu0
    %v4245 = vadd.f32 0.0, %v4244
    %v4246 = vpop.f32.mrb[0].mxu0
    %v4247 = vadd.f32 0.0, %v4246
    %4248 = vdwg.mxu0
    %v4249 = vmul.f32 %v4090, %v4245
    %v4250 = vmul.f32 %v4096, %v4247
    %v4251 = vmax.f32 %v4249, 0.0
    %v4252 = vmax.f32 %v4250, 0.0
    %v4253 = vld [vmem:[%s9] sm:$0xff]
    %v4254 = vld [vmem:[%s9 + $0x8] sm:$0xff]
    %v4255 = vld [vmem:[%s9 + $0x10] sm:$0xff]
    %v4256 = vld [vmem:[%s9 + $0x18] sm:$0xff]
    %v4257 = vld [vmem:[%s9 + $0x20] sm:$0xff]
    %v4258 = vld [vmem:[%s9 + $0x28] sm:$0xff]
    %v4259 = vld [vmem:[%s9 + $0x30] sm:$0xff]
    %v4260 = vld [vmem:[%s9 + $0x38] sm:$0xff]
    %v4261 = vld [vmem:[%s9 + $0x40] sm:$0xff]
    %v4262 = vld [vmem:[%s9 + $0x48] sm:$0xff]
    %v4263 = vld [vmem:[%s9 + $0x50] sm:$0xff]
    %v4264 = vld [vmem:[%s9 + $0x58] sm:$0xff]
    %v4265 = vld [vmem:[%s9 + $0x60] sm:$0xff]
    %v4266 = vld [vmem:[%s9 + $0x68] sm:$0xff]
    %v4267 = vld [vmem:[%s9 + $0x70] sm:$0xff]
    %v4268 = vld [vmem:[%s9 + $0x78] sm:$0xff]
    %v4269 = vld [vmem:[%s9 + $0x80] sm:$0xff]
    %v4270 = vld [vmem:[%s9 + $0x88] sm:$0xff]
    %v4271 = vld [vmem:[%s9 + $0x90] sm:$0xff]
    %v4272 = vld [vmem:[%s9 + $0x98] sm:$0xff]
    %v4273 = vld [vmem:[%s9 + $0xa0] sm:$0xff]
    %v4274 = vld [vmem:[%s9 + $0xa8] sm:$0xff]
    %v4275 = vld [vmem:[%s9 + $0xb0] sm:$0xff]
    %v4276 = vld [vmem:[%s9 + $0xb8] sm:$0xff]
    %v4277 = vld [vmem:[%s9 + $0xc0] sm:$0xff]
    %v4278 = vld [vmem:[%s9 + $0xc8] sm:$0xff]
    %v4279 = vld [vmem:[%s9 + $0xd0] sm:$0xff]
    %v4280 = vld [vmem:[%s9 + $0xd8] sm:$0xff]
    %v4281 = vld [vmem:[%s9 + $0xe0] sm:$0xff]
    %v4282 = vld [vmem:[%s9 + $0xe8] sm:$0xff]
    %v4283 = vld [vmem:[%s9 + $0xf0] sm:$0xff]
    %v4284 = vld [vmem:[%s9 + $0xf8] sm:$0xff]
    %v4285 = vld [vmem:[%s10] sm:$0x1]
    %4286 = vmatprep.subr.mxu0 0.0
    %4287 = vmatpush1.msra.mxu0 %v4253
    %4288 = vmatprep.subr.mxu0 0.0
    %4289 = vmatpush1.msra.mxu0 %v4254
    %4290 = vmatprep.subr.mxu0 0.0
    %4291 = vmatpush1.msra.mxu0 %v4255
    %4292 = vmatprep.subr.mxu0 0.0
    %4293 = vmatpush1.msra.mxu0 %v4256
    %4294 = vmatprep.subr.mxu0 0.0
    %4295 = vmatpush1.msra.mxu0 %v4257
    %4296 = vmatprep.subr.mxu0 0.0
    %4297 = vmatpush1.msra.mxu0 %v4258
    %4298 = vmatprep.subr.mxu0 0.0
    %4299 = vmatpush1.msra.mxu0 %v4259
    %4300 = vmatprep.subr.mxu0 0.0
    %4301 = vmatpush1.msra.mxu0 %v4260
    %4302 = vmatprep.subr.mxu0 0.0
    %4303 = vmatpush1.msra.mxu0 %v4261
    %4304 = vmatprep.subr.mxu0 0.0
    %4305 = vmatpush1.msra.mxu0 %v4262
    %4306 = vmatprep.subr.mxu0 0.0
    %4307 = vmatpush1.msra.mxu0 %v4263
    %4308 = vmatprep.subr.mxu0 0.0
    %4309 = vmatpush1.msra.mxu0 %v4264
    %4310 = vmatprep.subr.mxu0 0.0
    %4311 = vmatpush1.msra.mxu0 %v4265
    %4312 = vmatprep.subr.mxu0 0.0
    %4313 = vmatpush1.msra.mxu0 %v4266
    %4314 = vmatprep.subr.mxu0 0.0
    %4315 = vmatpush1.msra.mxu0 %v4267
    %4316 = vmatprep.subr.mxu0 0.0
    %4317 = vmatpush1.msra.mxu0 %v4268
    %4318 = vmatprep.subr.mxu0 0.0
    %4319 = vmatpush1.msra.mxu0 %v4269
    %4320 = vmatprep.subr.mxu0 0.0
    %4321 = vmatpush1.msra.mxu0 %v4270
    %4322 = vmatprep.subr.mxu0 0.0
    %4323 = vmatpush1.msra.mxu0 %v4271
    %4324 = vmatprep.subr.mxu0 0.0
    %4325 = vmatpush1.msra.mxu0 %v4272
    %4326 = vmatprep.subr.mxu0 0.0
    %4327 = vmatpush1.msra.mxu0 %v4273
    %4328 = vmatprep.subr.mxu0 0.0
    %4329 = vmatpush1.msra.mxu0 %v4274
    %4330 = vmatprep.subr.mxu0 0.0
    %4331 = vmatpush1.msra.mxu0 %v4275
    %4332 = vmatprep.subr.mxu0 0.0
    %4333 = vmatpush1.msra.mxu0 %v4276
    %4334 = vmatprep.subr.mxu0 0.0
    %4335 = vmatpush1.msra.mxu0 %v4277
    %4336 = vmatprep.subr.mxu0 0.0
    %4337 = vmatpush1.msra.mxu0 %v4278
    %4338 = vmatprep.subr.mxu0 0.0
    %4339 = vmatpush1.msra.mxu0 %v4279
    %4340 = vmatprep.subr.mxu0 0.0
    %4341 = vmatpush1.msra.mxu0 %v4280
    %4342 = vmatprep.subr.mxu0 0.0
    %4343 = vmatpush1.msra.mxu0 %v4281
    %4344 = vmatprep.subr.mxu0 0.0
    %4345 = vmatpush1.msra.mxu0 %v4282
    %4346 = vmatprep.subr.mxu0 0.0
    %4347 = vmatpush1.msra.mxu0 %v4283
    %4348 = vmatprep.subr.mxu0 0.0
    %4349 = vmatpush1.msra.mxu0 %v4284
    %4350 = vmatprep.mubr.f32.mxu0 %v4252
    %4351 = vmatmul.mubr.f32.gmra.mrb[0].mxu0 %v4251
    %v4352 = vpop.f32.mrb[0].mxu0
    %v4353 = vadd.f32 %v4285, %v4352
    %v4354 = vpop.f32.mrb[0].mxu0
    %4355 = vdwg.mxu0
    %v4356 = vtanh.pop %v4353
    %vm4357 = vcmask 516096
    %4358 = vst.msk [vmem:[%s11] sm:$0x1] %vm4357, %v4356
    // Predicated region
    $region54: #{cap_gat_attention_gru.1} parent=1 // pred_check
      _
    $region55: #{cap_gat_attention_gru.1} parent=1 // pred_check_branch
      %4360 = sbr.rel (0) target = $region57
    $region56: #{cap_gat_attention_gru.1} parent=1 // pred_region
      _
    $region57: #{cap_gat_attention_gru.1} parent=1 // pred_fallthru
      _
    // Predicated region
    $region58: #{cap_gat_attention_gru.1} parent=1 // pred_check
      _
    $region59: #{cap_gat_attention_gru.1} parent=1 // pred_check_branch
      %4362 = sbr.rel (0) target = $region61
    $region60: #{cap_gat_attention_gru.1} parent=1 // pred_region
      _
    $region61: #{cap_gat_attention_gru.1} parent=1 // pred_fallthru
      _
    %4363 = vsyncpa [#allocation3], 1
    %4364 = vsyncpa [#allocation5], 1

</llo_original>
